<compile_context>
chip_gen: v7x
topology: tpu7x:2x2x1
jax: 0.10.0
libtpu: 0.0.40
codegen_flags: <defaults>
</compile_context>

<pallas_src>
import functools

import jax
import jax.numpy as jnp
from jax.experimental import pallas as pl
from jax.experimental.pallas import tpu as pltpu


def _round_up(v, m):
    return (v + m - 1) // m * m


def _recurrent_gcn_kernel(x0_ref, gamma_ref, beta_ref, linw_ref, linb_ref,
                          wn_ref, a_ref, outw_ref, outb_ref, out_ref,
                          x_scr, y_scr, *, num_layers, num_rels, rpad):
    """One time step: for each layer, BatchNorm1d -> TwoWayGCNConv -> ReLU.

    x_scr : [N, Hp]       persistent node features, carried across grid steps (f32)
    y_scr : [2*Rp*N, Hp]  per-relation transformed features, fwd block then bwd (bf16)
    """
    t = pl.program_id(0)
    n = x_scr.shape[0]
    r2 = 2 * rpad

    # Load the initial node embedding into the carried VMEM state once; zero the
    # relation scratch so padded relation slots (if any) stay exactly zero forever.
    @pl.when(t == 0)
    def _():
        x_scr[...] = x0_ref[...]
        y_scr[...] = jnp.zeros_like(y_scr)

    x = x_scr[...]                                                   # [N, Hp] f32
    inv_n = 1.0 / n

    for l in range(num_layers):            # static unroll: weights stay resident
        # --- BatchNorm1d (training-mode batch stats, biased variance, eps=1e-5) ---
        mean = jnp.sum(x, axis=0, keepdims=True) * inv_n             # [1, Hp]
        xc = x - mean
        var = jnp.sum(xc * xc, axis=0, keepdims=True) * inv_n        # [1, Hp]
        xn = xc * jax.lax.rsqrt(var + 1e-5) * gamma_ref[l] + beta_ref[l]

        # --- Linear branch (kept f32: one small matmul, preserves accuracy) ---
        y = jnp.dot(xn, linw_ref[l], preferred_element_type=jnp.float32) + linb_ref[l]

        # --- Merged fwd+bwd message passing (bf16 MXU operands, f32 accumulate) ---
        # fwd relations occupy slots [0, num_rels), bwd [rpad, rpad + num_rels).
        xn_bf = xn.astype(jnp.bfloat16)
        for r in tuple(range(num_rels)) + tuple(range(rpad, rpad + num_rels)):
            y_scr[pl.ds(r * n, n), :] = jnp.dot(
                xn_bf, wn_ref[l * r2 + r],
                preferred_element_type=jnp.float32).astype(jnp.bfloat16)
        y = y + jnp.dot(a_ref[0], y_scr[...], preferred_element_type=jnp.float32)

        x = jnp.maximum(y, 0.0)                                      # ReLU
        # TODO(synk): nn.Dropout(p=0.5) is identity here (eval semantics); training
        # dropout would use pltpu.prng_seed / pltpu.prng_random_bits.

    x_scr[...] = x

    # Fused out_layer on the final time step (constant out index_map -> one writeback).
    @pl.when(t == pl.num_programs(0) - 1)
    def _():
        out_ref[...] = jnp.dot(x, outw_ref[...],
                               preferred_element_type=jnp.float32) + outb_ref[...]


def _pad2(a, rows, cols):
    a = jnp.asarray(a, jnp.float32)
    return jnp.zeros((rows, cols), jnp.float32).at[: a.shape[0], : a.shape[1]].set(a)


def _pad3(a, d0, d1, d2):
    a = jnp.asarray(a, jnp.float32)
    return jnp.zeros((d0, d1, d2), jnp.float32).at[
        : a.shape[0], : a.shape[1], : a.shape[2]].set(a)


def recurrent_gcn_forward(params, node_ids, edge_index, edge_type, num_rels):
    """params: dict; node_ids [N] int; edge_index [T, 2, E] int; edge_type [T, E] int."""
    x0 = params["in_emb"][node_ids].astype(jnp.float32)              # [N, H] (glue gather)
    n, h = x0.shape
    o = params["out_w_t"].shape[1]
    hp = _round_up(h, 128)                                           # lane-dense hidden
    op = _round_up(o, 128)                                           # lane-dense output
    T = int(edge_index.shape[0])
    L = len(params["layers"])

    # Relation slots per direction; pick the smallest rpad >= num_rels that keeps the
    # merged aggregation K-dim (2*rpad*N) 128-lane aligned.
    rpad = num_rels
    while (2 * rpad * n) % 128 != 0:
        rpad += 1
    r2 = 2 * rpad

    # --- Degree-scaled aggregation matrices per time step (loop invariants) ---
    # fwd slot r (< num_rels): A[n, r, m]      = sum_{e: dst=n, rel=r, src=m} 1/(deg_src(e))
    # bwd slot rpad+r:         A[n, rpad+r, m] = sum_{e: src=n, rel=r, dst=m} 1/(deg_dst(e))
    # deg_src(e) = #edges with same src + 1 ; deg_dst(e) = #edges with same dst + 1.
    a_all = []
    for t in range(T):
        src, dst, rel = edge_index[t, 0], edge_index[t, 1], edge_type[t]
        cnt_src = jnp.zeros((n,), jnp.float32).at[src].add(1.0)
        cnt_dst = jnp.zeros((n,), jnp.float32).at[dst].add(1.0)
        inv_deg_f = 1.0 / (cnt_src[src] + 1.0)
        inv_deg_b = 1.0 / (cnt_dst[dst] + 1.0)
        a = jnp.zeros((n, r2, n), jnp.float32)
        a = a.at[dst, rel, src].add(inv_deg_f)
        a = a.at[src, rel + rpad, dst].add(inv_deg_b)
        a_all.append(a.reshape(n, r2 * n))
    a_all = jnp.stack(a_all).astype(jnp.bfloat16)                    # [T, N, 2R*N] bf16

    # --- Per-layer params: pad to lane-dense shapes, pre-normalize relation weights ---
    def norm_pad(w_emb):                                             # [R, H*H]
        norm = jnp.sqrt(jnp.sum(w_emb * w_emb, axis=1, keepdims=True))
        wn = (w_emb / (norm + 0.01)).reshape(num_rels, h, h)
        return _pad3(wn, rpad, hp, hp)                               # [Rp, Hp, Hp]

    gammas, betas, linws, linbs, wns = [], [], [], [], []
    for lp in params["layers"]:
        gammas.append(_pad2(lp["bn_gamma"].reshape(1, h), 1, hp))
        betas.append(_pad2(lp["bn_beta"].reshape(1, h), 1, hp))
        linws.append(_pad2(lp["lin_w_t"], hp, hp))
        linbs.append(_pad2(lp["lin_b"].reshape(1, h), 1, hp))
        wns.append(jnp.concatenate([norm_pad(lp["w_fwd_emb"]),
                                    norm_pad(lp["w_bwd_emb"])], axis=0))  # [2Rp, Hp, Hp]
    gamma = jnp.stack(gammas)                                        # [L, 1, Hp]  f32
    beta = jnp.stack(betas)                                          # [L, 1, Hp]  f32
    linw = jnp.stack(linws)                                          # [L, Hp, Hp] f32
    linb = jnp.stack(linbs)                                          # [L, 1, Hp]  f32
    wn = jnp.concatenate(wns, axis=0).astype(jnp.bfloat16)           # [L*2Rp, Hp, Hp] bf16

    outw = _pad2(params["out_w_t"], hp, op)                          # [Hp, Op] f32
    outb = _pad2(params["out_b"].reshape(1, o), 1, op)               # [1, Op]  f32
    x0p = _pad2(x0, n, hp)                                           # [N, Hp]  f32

    kernel = functools.partial(_recurrent_gcn_kernel,
                               num_layers=L, num_rels=num_rels, rpad=rpad)

    out = pl.pallas_call(
        kernel,
        out_shape=jax.ShapeDtypeStruct((n, op), jnp.float32),
        grid=(T,),
        in_specs=[
            # Constant index_maps -> fetched from HBM once, stay VMEM-resident.
            pl.BlockSpec((n, hp), lambda t: (0, 0)),                 # x0
            pl.BlockSpec((L, 1, hp), lambda t: (0, 0, 0)),           # bn gamma
            pl.BlockSpec((L, 1, hp), lambda t: (0, 0, 0)),           # bn beta
            pl.BlockSpec((L, hp, hp), lambda t: (0, 0, 0)),          # lin weight (pre-T)
            pl.BlockSpec((L, 1, hp), lambda t: (0, 0, 0)),           # lin bias
            pl.BlockSpec((L * r2, hp, hp), lambda t: (0, 0, 0)),     # fwd+bwd rel weights
            # Only A streams per time step (double-buffered by the pipeline).
            pl.BlockSpec((1, n, r2 * n), lambda t: (t, 0, 0)),       # A_all (bf16)
            pl.BlockSpec((hp, op), lambda t: (0, 0)),                # out_layer weight
            pl.BlockSpec((1, op), lambda t: (0, 0)),                 # out_layer bias
        ],
        out_specs=pl.BlockSpec((n, op), lambda t: (0, 0)),
        scratch_shapes=[
            pltpu.VMEM((n, hp), jnp.float32),                        # carried x
            pltpu.VMEM((r2 * n, hp), jnp.bfloat16),                  # per-relation Y
        ],
        compiler_params=pltpu.CompilerParams(
            dimension_semantics=("arbitrary",),                      # recurrence over t
            vmem_limit_bytes=32 * 1024 * 1024),
    )(x0p, gamma, beta, linw, linb, wn, a_all, outw, outb)

    return out[:, :o]


def _reference_forward(params, node_ids, edge_index, edge_type, num_rels):
    """Pure-JAX per-edge f32 reference of the PyTorch forward (correctness check)."""
    x = params["in_emb"][node_ids].astype(jnp.float32)
    n, h = x.shape
    for t in range(edge_index.shape[0]):
        src, dst, rel = edge_index[t, 0], edge_index[t, 1], edge_type[t]
        cnt_src = jnp.zeros((n,), jnp.float32).at[src].add(1.0)
        cnt_dst = jnp.zeros((n,), jnp.float32).at[dst].add(1.0)
        deg_f = cnt_src[src] + 1.0
        deg_b = cnt_dst[dst] + 1.0
        for lp in params["layers"]:
            mean = jnp.mean(x, axis=0, keepdims=True)
            var = jnp.mean((x - mean) ** 2, axis=0, keepdims=True)
            xn = (x - mean) * jax.lax.rsqrt(var + 1e-5) * lp["bn_gamma"] + lp["bn_beta"]
            lin = xn @ lp["lin_w_t"] + lp["lin_b"]

            def conv(w_emb, gather_idx, scatter_idx, deg):
                norm = jnp.sqrt(jnp.sum(w_emb * w_emb, axis=1, keepdims=True))
                wn = (w_emb / (norm + 0.01)).reshape(num_rels, h, h)
                msg = jnp.einsum("eh,eho->eo", xn[gather_idx], wn[rel]) / deg[:, None]
                return jnp.zeros((n, h), jnp.float32).at[scatter_idx].add(msg)

            fwd = conv(lp["w_fwd_emb"], src, dst, deg_f)
            bwd = conv(lp["w_bwd_emb"], dst, src, deg_b)
            x = jnp.maximum(lin + fwd + bwd, 0.0)
    return x @ params["out_w_t"] + params["out_b"]


if __name__ == "__main__":
    # Small shapes consistent with the module (hidden_channels = out_channels = 64).
    N, H, O = 64, 64, 64              # num_nodes, hidden_channels, out_channels
    NUM_RELS, E, T, NUM_LAYERS = 5, 96, 2, 2

    key = jax.random.PRNGKey(0)
    ks = jax.random.split(key, 16)

    def nrm(k, shape, scale=0.1):
        return (scale * jax.random.normal(k, shape)).astype(jnp.float32)

    layers = []
    for i in range(NUM_LAYERS):
        k1, k2, k3, k4, k5, k6 = jax.random.split(ks[i], 6)
        layers.append(dict(
            bn_gamma=(1.0 + nrm(k1, (1, H))).astype(jnp.float32),
            bn_beta=nrm(k2, (1, H)),
            lin_w_t=nrm(k3, (H, H)),          # pre-transposed: y = x @ W^T
            lin_b=nrm(k4, (1, H)),
            w_fwd_emb=nrm(k5, (NUM_RELS, H * H), scale=1.0),
            w_bwd_emb=nrm(k6, (NUM_RELS, H * H), scale=1.0),
        ))

    params = dict(
        in_emb=nrm(ks[10], (N, H), scale=1.0),
        layers=layers,
        out_w_t=nrm(ks[11], (H, O)),          # pre-transposed out_layer weight
        out_b=nrm(ks[12], (1, O)),
    )

    node_ids = jnp.arange(N, dtype=jnp.int32)
    edge_index = jax.random.randint(ks[13], (T, 2, E), 0, N, dtype=jnp.int32)
    edge_type = jax.random.randint(ks[14], (T, E), 0, NUM_RELS, dtype=jnp.int32)

    out = recurrent_gcn_forward(params, node_ids, edge_index, edge_type, NUM_RELS)
    out = jax.block_until_ready(out)

    assert out.shape == (N, O), out.shape
    assert bool(jnp.all(jnp.isfinite(out)))

    ref = jax.block_until_ready(
        _reference_forward(params, node_ids, edge_index, edge_type, NUM_RELS))
    # bf16 MXU operands on the message-passing path (per perf review) loosen the match
    # vs the pure-f32 per-edge reference from ~1e-5 to a few 1e-3; 1e-2 keeps margin.
    max_err = float(jnp.max(jnp.abs(out - ref)))
    assert max_err < 1e-2, f"mismatch vs pure-JAX reference: {max_err}"

    print("KERNEL_OK")
</pallas_src>

<mosaic_0001>
module attributes {stable_mosaic.version = 11 : i64} {
  func.func @_recurrent_gcn_kernel(%arg0: i32, %arg1: memref<64x128xf32, #tpu.memory_space<vmem>>, %arg2: memref<2x1x128xf32, #tpu.memory_space<vmem>>, %arg3: memref<2x1x128xf32, #tpu.memory_space<vmem>>, %arg4: memref<2x128x128xf32, #tpu.memory_space<vmem>>, %arg5: memref<2x1x128xf32, #tpu.memory_space<vmem>>, %arg6: memref<20x128x128xbf16, #tpu.memory_space<vmem>>, %arg7: memref<1x64x640xbf16, #tpu.memory_space<vmem>>, %arg8: memref<128x128xf32, #tpu.memory_space<vmem>>, %arg9: memref<1x128xf32, #tpu.memory_space<vmem>>, %arg10: memref<64x128xf32, #tpu.memory_space<vmem>>, %arg11: memref<64x128xf32, #tpu.memory_space<vmem>>, %arg12: memref<640x128xbf16, #tpu.memory_space<vmem>>) attributes {dimension_semantics = [#tpu.dimension_semantics<arbitrary>], iteration_bounds = array<i64: 2>, scalar_prefetch = 0 : i64, scratch_operands = 2 : i64, tpu.core_type = #tpu.core_type<tc>, window_params = [{pipeline_mode = #tpu.pipeline_mode<synchronous>, transform_indices = @transform_0, window_bounds = array<i64: 64, 128>}, {pipeline_mode = #tpu.pipeline_mode<synchronous>, transform_indices = @transform_1, window_bounds = array<i64: 2, 1, 128>}, {pipeline_mode = #tpu.pipeline_mode<synchronous>, transform_indices = @transform_2, window_bounds = array<i64: 2, 1, 128>}, {pipeline_mode = #tpu.pipeline_mode<synchronous>, transform_indices = @transform_3, window_bounds = array<i64: 2, 128, 128>}, {pipeline_mode = #tpu.pipeline_mode<synchronous>, transform_indices = @transform_4, window_bounds = array<i64: 2, 1, 128>}, {pipeline_mode = #tpu.pipeline_mode<synchronous>, transform_indices = @transform_5, window_bounds = array<i64: 20, 128, 128>}, {transform_indices = @transform_6, window_bounds = array<i64: 1, 64, 640>}, {pipeline_mode = #tpu.pipeline_mode<synchronous>, transform_indices = @transform_7, window_bounds = array<i64: 128, 128>}, {pipeline_mode = #tpu.pipeline_mode<synchronous>, transform_indices = @transform_8, window_bounds = array<i64: 1, 128>}, {pipeline_mode = #tpu.pipeline_mode<synchronous>, transform_indices = @transform_9, window_bounds = array<i64: 64, 128>}]} {
    %c0_i32 = arith.constant 0 : i32
    %0 = arith.cmpi eq, %arg0, %c0_i32 : i32
    %1 = arith.extui %0 : i1 to i32
    %c0_i32_0 = arith.constant 0 : i32
    %2 = arith.cmpi ne, %1, %c0_i32_0 : i32
    scf.if %2 {
      %c0_146 = arith.constant 0 : index
      %c0_147 = arith.constant 0 : index
      %186 = vector.load %arg1[%c0_146, %c0_147] : memref<64x128xf32, #tpu.memory_space<vmem>>, vector<64x128xf32>
      %c0_148 = arith.constant 0 : index
      %c0_149 = arith.constant 0 : index
      %187 = vector.load %arg11[%c0_148, %c0_149] : memref<64x128xf32, #tpu.memory_space<vmem>>, vector<64x128xf32>
      tpu.vector_store %arg11[%c0_148, %c0_149], %186 {strides = array<i32>} : memref<64x128xf32, #tpu.memory_space<vmem>>, vector<64x128xf32>,
      %cst_150 = arith.constant 0.000000e+00 : bf16
      %188 = vector.broadcast %cst_150 : bf16 to vector<640x128xbf16>
      %c0_151 = arith.constant 0 : index
      %c0_152 = arith.constant 0 : index
      %189 = vector.load %arg12[%c0_151, %c0_152] : memref<640x128xbf16, #tpu.memory_space<vmem>>, vector<640x128xbf16>
      tpu.vector_store %arg12[%c0_151, %c0_152], %188 {strides = array<i32>} : memref<640x128xbf16, #tpu.memory_space<vmem>>, vector<640x128xbf16>,
    } else {
    }
    %c0 = arith.constant 0 : index
    %c0_1 = arith.constant 0 : index
    %3 = vector.load %arg11[%c0, %c0_1] : memref<64x128xf32, #tpu.memory_space<vmem>>, vector<64x128xf32>
    %cst = arith.constant dense<0.000000e+00> : vector<128xf32>
    %4 = vector.multi_reduction <add>, %3, %cst [0] : vector<64x128xf32> to vector<128xf32>
    %5 = vector.shape_cast %4 : vector<128xf32> to vector<1x128xf32>
    %cst_2 = arith.constant 1.562500e-02 : f32
    %6 = vector.broadcast %cst_2 : f32 to vector<1x128xf32>
    %7 = arith.mulf %5, %6 : vector<1x128xf32>
    %8 = vector.broadcast %7 : vector<1x128xf32> to vector<64x128xf32>
    %9 = arith.subf %3, %8 : vector<64x128xf32>
    %10 = arith.mulf %9, %9 : vector<64x128xf32>
    %cst_3 = arith.constant dense<0.000000e+00> : vector<128xf32>
    %11 = vector.multi_reduction <add>, %10, %cst_3 [0] : vector<64x128xf32> to vector<128xf32>
    %12 = vector.shape_cast %11 : vector<128xf32> to vector<1x128xf32>
    %cst_4 = arith.constant 1.562500e-02 : f32
    %13 = vector.broadcast %cst_4 : f32 to vector<1x128xf32>
    %14 = arith.mulf %12, %13 : vector<1x128xf32>
    %cst_5 = arith.constant 9.99999974E-6 : f32
    %15 = vector.broadcast %cst_5 : f32 to vector<1x128xf32>
    %16 = arith.addf %14, %15 : vector<1x128xf32>
    %17 = math.rsqrt %16 : vector<1x128xf32>
    %18 = vector.broadcast %17 : vector<1x128xf32> to vector<64x128xf32>
    %19 = arith.mulf %9, %18 : vector<64x128xf32>
    %c0_6 = arith.constant 0 : index
    %c0_7 = arith.constant 0 : index
    %c0_8 = arith.constant 0 : index
    %20 = vector.load %arg2[%c0_6, %c0_7, %c0_8] : memref<2x1x128xf32, #tpu.memory_space<vmem>>, vector<1x1x128xf32>
    %21 = vector.shape_cast %20 : vector<1x1x128xf32> to vector<1x128xf32>
    %22 = vector.broadcast %21 : vector<1x128xf32> to vector<64x128xf32>
    %23 = arith.mulf %19, %22 : vector<64x128xf32>
    %c0_9 = arith.constant 0 : index
    %c0_10 = arith.constant 0 : index
    %c0_11 = arith.constant 0 : index
    %24 = vector.load %arg3[%c0_9, %c0_10, %c0_11] : memref<2x1x128xf32, #tpu.memory_space<vmem>>, vector<1x1x128xf32>
    %25 = vector.shape_cast %24 : vector<1x1x128xf32> to vector<1x128xf32>
    %26 = vector.broadcast %25 : vector<1x128xf32> to vector<64x128xf32>
    %27 = arith.addf %23, %26 : vector<64x128xf32>
    %c0_12 = arith.constant 0 : index
    %c0_13 = arith.constant 0 : index
    %c0_14 = arith.constant 0 : index
    %28 = vector.load %arg4[%c0_12, %c0_13, %c0_14] : memref<2x128x128xf32, #tpu.memory_space<vmem>>, vector<1x128x128xf32>
    %29 = vector.shape_cast %28 : vector<1x128x128xf32> to vector<128x128xf32>
    %cst_15 = arith.constant dense<0.000000e+00> : vector<64x128xf32>
    %30 = tpu.matmul %27, %29, %cst_15 {dimension_numbers = #tpu.dot_dimension_numbers<[1], [0], [0], [1], [0, 0, 1, 1], [], []>} : vector<64x128xf32>, vector<128x128xf32>, vector<64x128xf32> -> vector<64x128xf32>
    %c0_16 = arith.constant 0 : index
    %c0_17 = arith.constant 0 : index
    %c0_18 = arith.constant 0 : index
    %31 = vector.load %arg5[%c0_16, %c0_17, %c0_18] : memref<2x1x128xf32, #tpu.memory_space<vmem>>, vector<1x1x128xf32>
    %32 = vector.shape_cast %31 : vector<1x1x128xf32> to vector<1x128xf32>
    %33 = vector.broadcast %32 : vector<1x128xf32> to vector<64x128xf32>
    %34 = arith.addf %30, %33 : vector<64x128xf32>
    %35 = arith.truncf %27 : vector<64x128xf32> to vector<64x128xbf16>
    %c0_19 = arith.constant 0 : index
    %c0_20 = arith.constant 0 : index
    %c0_21 = arith.constant 0 : index
    %36 = vector.load %arg6[%c0_19, %c0_20, %c0_21] : memref<20x128x128xbf16, #tpu.memory_space<vmem>>, vector<1x128x128xbf16>
    %37 = vector.shape_cast %36 : vector<1x128x128xbf16> to vector<128x128xbf16>
    %cst_22 = arith.constant dense<0.000000e+00> : vector<64x128xf32>
    %38 = tpu.matmul %35, %37, %cst_22 {dimension_numbers = #tpu.dot_dimension_numbers<[1], [0], [0], [1], [0, 0, 1, 1], [], []>} : vector<64x128xbf16>, vector<128x128xbf16>, vector<64x128xf32> -> vector<64x128xf32>
    %39 = arith.truncf %38 : vector<64x128xf32> to vector<64x128xbf16>
    %c0_23 = arith.constant 0 : index
    %c0_24 = arith.constant 0 : index
    %40 = vector.load %arg12[%c0_23, %c0_24] : memref<640x128xbf16, #tpu.memory_space<vmem>>, vector<64x128xbf16>
    tpu.vector_store %arg12[%c0_23, %c0_24], %39 {strides = array<i32>} : memref<640x128xbf16, #tpu.memory_space<vmem>>, vector<64x128xbf16>,
    %c1 = arith.constant 1 : index
    %c0_25 = arith.constant 0 : index
    %c0_26 = arith.constant 0 : index
    %41 = vector.load %arg6[%c1, %c0_25, %c0_26] : memref<20x128x128xbf16, #tpu.memory_space<vmem>>, vector<1x128x128xbf16>
    %42 = vector.shape_cast %41 : vector<1x128x128xbf16> to vector<128x128xbf16>
    %cst_27 = arith.constant dense<0.000000e+00> : vector<64x128xf32>
    %43 = tpu.matmul %35, %42, %cst_27 {dimension_numbers = #tpu.dot_dimension_numbers<[1], [0], [0], [1], [0, 0, 1, 1], [], []>} : vector<64x128xbf16>, vector<128x128xbf16>, vector<64x128xf32> -> vector<64x128xf32>
    %44 = arith.truncf %43 : vector<64x128xf32> to vector<64x128xbf16>
    %c64 = arith.constant 64 : index
    %c0_28 = arith.constant 0 : index
    %45 = vector.load %arg12[%c64, %c0_28] : memref<640x128xbf16, #tpu.memory_space<vmem>>, vector<64x128xbf16>
    tpu.vector_store %arg12[%c64, %c0_28], %44 {strides = array<i32>} : memref<640x128xbf16, #tpu.memory_space<vmem>>, vector<64x128xbf16>,
    %c2 = arith.constant 2 : index
    %c0_29 = arith.constant 0 : index
    %c0_30 = arith.constant 0 : index
    %46 = vector.load %arg6[%c2, %c0_29, %c0_30] : memref<20x128x128xbf16, #tpu.memory_space<vmem>>, vector<1x128x128xbf16>
    %47 = vector.shape_cast %46 : vector<1x128x128xbf16> to vector<128x128xbf16>
    %cst_31 = arith.constant dense<0.000000e+00> : vector<64x128xf32>
    %48 = tpu.matmul %35, %47, %cst_31 {dimension_numbers = #tpu.dot_dimension_numbers<[1], [0], [0], [1], [0, 0, 1, 1], [], []>} : vector<64x128xbf16>, vector<128x128xbf16>, vector<64x128xf32> -> vector<64x128xf32>
    %49 = arith.truncf %48 : vector<64x128xf32> to vector<64x128xbf16>
    %c128 = arith.constant 128 : index
    %c0_32 = arith.constant 0 : index
    %50 = vector.load %arg12[%c128, %c0_32] : memref<640x128xbf16, #tpu.memory_space<vmem>>, vector<64x128xbf16>
    tpu.vector_store %arg12[%c128, %c0_32], %49 {strides = array<i32>} : memref<640x128xbf16, #tpu.memory_space<vmem>>, vector<64x128xbf16>,
    %c3 = arith.constant 3 : index
    %c0_33 = arith.constant 0 : index
    %c0_34 = arith.constant 0 : index
    %51 = vector.load %arg6[%c3, %c0_33, %c0_34] : memref<20x128x128xbf16, #tpu.memory_space<vmem>>, vector<1x128x128xbf16>
    %52 = vector.shape_cast %51 : vector<1x128x128xbf16> to vector<128x128xbf16>
    %cst_35 = arith.constant dense<0.000000e+00> : vector<64x128xf32>
    %53 = tpu.matmul %35, %52, %cst_35 {dimension_numbers = #tpu.dot_dimension_numbers<[1], [0], [0], [1], [0, 0, 1, 1], [], []>} : vector<64x128xbf16>, vector<128x128xbf16>, vector<64x128xf32> -> vector<64x128xf32>
    %54 = arith.truncf %53 : vector<64x128xf32> to vector<64x128xbf16>
    %c192 = arith.constant 192 : index
    %c0_36 = arith.constant 0 : index
    %55 = vector.load %arg12[%c192, %c0_36] : memref<640x128xbf16, #tpu.memory_space<vmem>>, vector<64x128xbf16>
    tpu.vector_store %arg12[%c192, %c0_36], %54 {strides = array<i32>} : memref<640x128xbf16, #tpu.memory_space<vmem>>, vector<64x128xbf16>,
    %c4 = arith.constant 4 : index
    %c0_37 = arith.constant 0 : index
    %c0_38 = arith.constant 0 : index
    %56 = vector.load %arg6[%c4, %c0_37, %c0_38] : memref<20x128x128xbf16, #tpu.memory_space<vmem>>, vector<1x128x128xbf16>
    %57 = vector.shape_cast %56 : vector<1x128x128xbf16> to vector<128x128xbf16>
    %cst_39 = arith.constant dense<0.000000e+00> : vector<64x128xf32>
    %58 = tpu.matmul %35, %57, %cst_39 {dimension_numbers = #tpu.dot_dimension_numbers<[1], [0], [0], [1], [0, 0, 1, 1], [], []>} : vector<64x128xbf16>, vector<128x128xbf16>, vector<64x128xf32> -> vector<64x128xf32>
    %59 = arith.truncf %58 : vector<64x128xf32> to vector<64x128xbf16>
    %c256 = arith.constant 256 : index
    %c0_40 = arith.constant 0 : index
    %60 = vector.load %arg12[%c256, %c0_40] : memref<640x128xbf16, #tpu.memory_space<vmem>>, vector<64x128xbf16>
    tpu.vector_store %arg12[%c256, %c0_40], %59 {strides = array<i32>} : memref<640x128xbf16, #tpu.memory_space<vmem>>, vector<64x128xbf16>,
    %c5 = arith.constant 5 : index
    %c0_41 = arith.constant 0 : index
    %c0_42 = arith.constant 0 : index
    %61 = vector.load %arg6[%c5, %c0_41, %c0_42] : memref<20x128x128xbf16, #tpu.memory_space<vmem>>, vector<1x128x128xbf16>
    %62 = vector.shape_cast %61 : vector<1x128x128xbf16> to vector<128x128xbf16>
    %cst_43 = arith.constant dense<0.000000e+00> : vector<64x128xf32>
    %63 = tpu.matmul %35, %62, %cst_43 {dimension_numbers = #tpu.dot_dimension_numbers<[1], [0], [0], [1], [0, 0, 1, 1], [], []>} : vector<64x128xbf16>, vector<128x128xbf16>, vector<64x128xf32> -> vector<64x128xf32>
    %64 = arith.truncf %63 : vector<64x128xf32> to vector<64x128xbf16>
    %c320 = arith.constant 320 : index
    %c0_44 = arith.constant 0 : index
    %65 = vector.load %arg12[%c320, %c0_44] : memref<640x128xbf16, #tpu.memory_space<vmem>>, vector<64x128xbf16>
    tpu.vector_store %arg12[%c320, %c0_44], %64 {strides = array<i32>} : memref<640x128xbf16, #tpu.memory_space<vmem>>, vector<64x128xbf16>,
    %c6 = arith.constant 6 : index
    %c0_45 = arith.constant 0 : index
    %c0_46 = arith.constant 0 : index
    %66 = vector.load %arg6[%c6, %c0_45, %c0_46] : memref<20x128x128xbf16, #tpu.memory_space<vmem>>, vector<1x128x128xbf16>
    %67 = vector.shape_cast %66 : vector<1x128x128xbf16> to vector<128x128xbf16>
    %cst_47 = arith.constant dense<0.000000e+00> : vector<64x128xf32>
    %68 = tpu.matmul %35, %67, %cst_47 {dimension_numbers = #tpu.dot_dimension_numbers<[1], [0], [0], [1], [0, 0, 1, 1], [], []>} : vector<64x128xbf16>, vector<128x128xbf16>, vector<64x128xf32> -> vector<64x128xf32>
    %69 = arith.truncf %68 : vector<64x128xf32> to vector<64x128xbf16>
    %c384 = arith.constant 384 : index
    %c0_48 = arith.constant 0 : index
    %70 = vector.load %arg12[%c384, %c0_48] : memref<640x128xbf16, #tpu.memory_space<vmem>>, vector<64x128xbf16>
    tpu.vector_store %arg12[%c384, %c0_48], %69 {strides = array<i32>} : memref<640x128xbf16, #tpu.memory_space<vmem>>, vector<64x128xbf16>,
    %c7 = arith.constant 7 : index
    %c0_49 = arith.constant 0 : index
    %c0_50 = arith.constant 0 : index
    %71 = vector.load %arg6[%c7, %c0_49, %c0_50] : memref<20x128x128xbf16, #tpu.memory_space<vmem>>, vector<1x128x128xbf16>
    %72 = vector.shape_cast %71 : vector<1x128x128xbf16> to vector<128x128xbf16>
    %cst_51 = arith.constant dense<0.000000e+00> : vector<64x128xf32>
    %73 = tpu.matmul %35, %72, %cst_51 {dimension_numbers = #tpu.dot_dimension_numbers<[1], [0], [0], [1], [0, 0, 1, 1], [], []>} : vector<64x128xbf16>, vector<128x128xbf16>, vector<64x128xf32> -> vector<64x128xf32>
    %74 = arith.truncf %73 : vector<64x128xf32> to vector<64x128xbf16>
    %c448 = arith.constant 448 : index
    %c0_52 = arith.constant 0 : index
    %75 = vector.load %arg12[%c448, %c0_52] : memref<640x128xbf16, #tpu.memory_space<vmem>>, vector<64x128xbf16>
    tpu.vector_store %arg12[%c448, %c0_52], %74 {strides = array<i32>} : memref<640x128xbf16, #tpu.memory_space<vmem>>, vector<64x128xbf16>,
    %c8 = arith.constant 8 : index
    %c0_53 = arith.constant 0 : index
    %c0_54 = arith.constant 0 : index
    %76 = vector.load %arg6[%c8, %c0_53, %c0_54] : memref<20x128x128xbf16, #tpu.memory_space<vmem>>, vector<1x128x128xbf16>
    %77 = vector.shape_cast %76 : vector<1x128x128xbf16> to vector<128x128xbf16>
    %cst_55 = arith.constant dense<0.000000e+00> : vector<64x128xf32>
    %78 = tpu.matmul %35, %77, %cst_55 {dimension_numbers = #tpu.dot_dimension_numbers<[1], [0], [0], [1], [0, 0, 1, 1], [], []>} : vector<64x128xbf16>, vector<128x128xbf16>, vector<64x128xf32> -> vector<64x128xf32>
    %79 = arith.truncf %78 : vector<64x128xf32> to vector<64x128xbf16>
    %c512 = arith.constant 512 : index
    %c0_56 = arith.constant 0 : index
    %80 = vector.load %arg12[%c512, %c0_56] : memref<640x128xbf16, #tpu.memory_space<vmem>>, vector<64x128xbf16>
    tpu.vector_store %arg12[%c512, %c0_56], %79 {strides = array<i32>} : memref<640x128xbf16, #tpu.memory_space<vmem>>, vector<64x128xbf16>,
    %c9 = arith.constant 9 : index
    %c0_57 = arith.constant 0 : index
    %c0_58 = arith.constant 0 : index
    %81 = vector.load %arg6[%c9, %c0_57, %c0_58] : memref<20x128x128xbf16, #tpu.memory_space<vmem>>, vector<1x128x128xbf16>
    %82 = vector.shape_cast %81 : vector<1x128x128xbf16> to vector<128x128xbf16>
    %cst_59 = arith.constant dense<0.000000e+00> : vector<64x128xf32>
    %83 = tpu.matmul %35, %82, %cst_59 {dimension_numbers = #tpu.dot_dimension_numbers<[1], [0], [0], [1], [0, 0, 1, 1], [], []>} : vector<64x128xbf16>, vector<128x128xbf16>, vector<64x128xf32> -> vector<64x128xf32>
    %84 = arith.truncf %83 : vector<64x128xf32> to vector<64x128xbf16>
    %c576 = arith.constant 576 : index
    %c0_60 = arith.constant 0 : index
    %85 = vector.load %arg12[%c576, %c0_60] : memref<640x128xbf16, #tpu.memory_space<vmem>>, vector<64x128xbf16>
    tpu.vector_store %arg12[%c576, %c0_60], %84 {strides = array<i32>} : memref<640x128xbf16, #tpu.memory_space<vmem>>, vector<64x128xbf16>,
    %c0_61 = arith.constant 0 : index
    %c0_62 = arith.constant 0 : index
    %c0_63 = arith.constant 0 : index
    %86 = vector.load %arg7[%c0_61, %c0_62, %c0_63] : memref<1x64x640xbf16, #tpu.memory_space<vmem>>, vector<1x64x640xbf16>
    %87 = vector.shape_cast %86 : vector<1x64x640xbf16> to vector<64x640xbf16>
    %c0_64 = arith.constant 0 : index
    %c0_65 = arith.constant 0 : index
    %88 = vector.load %arg12[%c0_64, %c0_65] : memref<640x128xbf16, #tpu.memory_space<vmem>>, vector<640x128xbf16>
    %cst_66 = arith.constant dense<0.000000e+00> : vector<64x128xf32>
    %89 = tpu.matmul %87, %88, %cst_66 {dimension_numbers = #tpu.dot_dimension_numbers<[1], [0], [0], [1], [0, 0, 1, 1], [], []>} : vector<64x640xbf16>, vector<640x128xbf16>, vector<64x128xf32> -> vector<64x128xf32>
    %90 = arith.addf %34, %89 : vector<64x128xf32>
    %cst_67 = arith.constant 0.000000e+00 : f32
    %91 = vector.broadcast %cst_67 : f32 to vector<64x128xf32>
    %92 = arith.maximumf %90, %91 : vector<64x128xf32>
    %cst_68 = arith.constant dense<0.000000e+00> : vector<128xf32>
    %93 = vector.multi_reduction <add>, %92, %cst_68 [0] : vector<64x128xf32> to vector<128xf32>
    %94 = vector.shape_cast %93 : vector<128xf32> to vector<1x128xf32>
    %cst_69 = arith.constant 1.562500e-02 : f32
    %95 = vector.broadcast %cst_69 : f32 to vector<1x128xf32>
    %96 = arith.mulf %94, %95 : vector<1x128xf32>
    %97 = vector.broadcast %96 : vector<1x128xf32> to vector<64x128xf32>
    %98 = arith.subf %92, %97 : vector<64x128xf32>
    %99 = arith.mulf %98, %98 : vector<64x128xf32>
    %cst_70 = arith.constant dense<0.000000e+00> : vector<128xf32>
    %100 = vector.multi_reduction <add>, %99, %cst_70 [0] : vector<64x128xf32> to vector<128xf32>
    %101 = vector.shape_cast %100 : vector<128xf32> to vector<1x128xf32>
    %cst_71 = arith.constant 1.562500e-02 : f32
    %102 = vector.broadcast %cst_71 : f32 to vector<1x128xf32>
    %103 = arith.mulf %101, %102 : vector<1x128xf32>
    %cst_72 = arith.constant 9.99999974E-6 : f32
    %104 = vector.broadcast %cst_72 : f32 to vector<1x128xf32>
    %105 = arith.addf %103, %104 : vector<1x128xf32>
    %106 = math.rsqrt %105 : vector<1x128xf32>
    %107 = vector.broadcast %106 : vector<1x128xf32> to vector<64x128xf32>
    %108 = arith.mulf %98, %107 : vector<64x128xf32>
    %c1_73 = arith.constant 1 : index
    %c0_74 = arith.constant 0 : index
    %c0_75 = arith.constant 0 : index
    %109 = vector.load %arg2[%c1_73, %c0_74, %c0_75] : memref<2x1x128xf32, #tpu.memory_space<vmem>>, vector<1x1x128xf32>
    %110 = vector.shape_cast %109 : vector<1x1x128xf32> to vector<1x128xf32>
    %111 = vector.broadcast %110 : vector<1x128xf32> to vector<64x128xf32>
    %112 = arith.mulf %108, %111 : vector<64x128xf32>
    %c1_76 = arith.constant 1 : index
    %c0_77 = arith.constant 0 : index
    %c0_78 = arith.constant 0 : index
    %113 = vector.load %arg3[%c1_76, %c0_77, %c0_78] : memref<2x1x128xf32, #tpu.memory_space<vmem>>, vector<1x1x128xf32>
    %114 = vector.shape_cast %113 : vector<1x1x128xf32> to vector<1x128xf32>
    %115 = vector.broadcast %114 : vector<1x128xf32> to vector<64x128xf32>
    %116 = arith.addf %112, %115 : vector<64x128xf32>
    %c1_79 = arith.constant 1 : index
    %c0_80 = arith.constant 0 : index
    %c0_81 = arith.constant 0 : index
    %117 = vector.load %arg4[%c1_79, %c0_80, %c0_81] : memref<2x128x128xf32, #tpu.memory_space<vmem>>, vector<1x128x128xf32>
    %118 = vector.shape_cast %117 : vector<1x128x128xf32> to vector<128x128xf32>
    %cst_82 = arith.constant dense<0.000000e+00> : vector<64x128xf32>
    %119 = tpu.matmul %116, %118, %cst_82 {dimension_numbers = #tpu.dot_dimension_numbers<[1], [0], [0], [1], [0, 0, 1, 1], [], []>} : vector<64x128xf32>, vector<128x128xf32>, vector<64x128xf32> -> vector<64x128xf32>
    %c1_83 = arith.constant 1 : index
    %c0_84 = arith.constant 0 : index
    %c0_85 = arith.constant 0 : index
    %120 = vector.load %arg5[%c1_83, %c0_84, %c0_85] : memref<2x1x128xf32, #tpu.memory_space<vmem>>, vector<1x1x128xf32>
    %121 = vector.shape_cast %120 : vector<1x1x128xf32> to vector<1x128xf32>
    %122 = vector.broadcast %121 : vector<1x128xf32> to vector<64x128xf32>
    %123 = arith.addf %119, %122 : vector<64x128xf32>
    %124 = arith.truncf %116 : vector<64x128xf32> to vector<64x128xbf16>
    %c10 = arith.constant 10 : index
    %c0_86 = arith.constant 0 : index
    %c0_87 = arith.constant 0 : index
    %125 = vector.load %arg6[%c10, %c0_86, %c0_87] : memref<20x128x128xbf16, #tpu.memory_space<vmem>>, vector<1x128x128xbf16>
    %126 = vector.shape_cast %125 : vector<1x128x128xbf16> to vector<128x128xbf16>
    %cst_88 = arith.constant dense<0.000000e+00> : vector<64x128xf32>
    %127 = tpu.matmul %124, %126, %cst_88 {dimension_numbers = #tpu.dot_dimension_numbers<[1], [0], [0], [1], [0, 0, 1, 1], [], []>} : vector<64x128xbf16>, vector<128x128xbf16>, vector<64x128xf32> -> vector<64x128xf32>
    %128 = arith.truncf %127 : vector<64x128xf32> to vector<64x128xbf16>
    %c0_89 = arith.constant 0 : index
    %c0_90 = arith.constant 0 : index
    %129 = vector.load %arg12[%c0_89, %c0_90] : memref<640x128xbf16, #tpu.memory_space<vmem>>, vector<64x128xbf16>
    tpu.vector_store %arg12[%c0_89, %c0_90], %128 {strides = array<i32>} : memref<640x128xbf16, #tpu.memory_space<vmem>>, vector<64x128xbf16>,
    %c11 = arith.constant 11 : index
    %c0_91 = arith.constant 0 : index
    %c0_92 = arith.constant 0 : index
    %130 = vector.load %arg6[%c11, %c0_91, %c0_92] : memref<20x128x128xbf16, #tpu.memory_space<vmem>>, vector<1x128x128xbf16>
    %131 = vector.shape_cast %130 : vector<1x128x128xbf16> to vector<128x128xbf16>
    %cst_93 = arith.constant dense<0.000000e+00> : vector<64x128xf32>
    %132 = tpu.matmul %124, %131, %cst_93 {dimension_numbers = #tpu.dot_dimension_numbers<[1], [0], [0], [1], [0, 0, 1, 1], [], []>} : vector<64x128xbf16>, vector<128x128xbf16>, vector<64x128xf32> -> vector<64x128xf32>
    %133 = arith.truncf %132 : vector<64x128xf32> to vector<64x128xbf16>
    %c64_94 = arith.constant 64 : index
    %c0_95 = arith.constant 0 : index
    %134 = vector.load %arg12[%c64_94, %c0_95] : memref<640x128xbf16, #tpu.memory_space<vmem>>, vector<64x128xbf16>
    tpu.vector_store %arg12[%c64_94, %c0_95], %133 {strides = array<i32>} : memref<640x128xbf16, #tpu.memory_space<vmem>>, vector<64x128xbf16>,
    %c12 = arith.constant 12 : index
    %c0_96 = arith.constant 0 : index
    %c0_97 = arith.constant 0 : index
    %135 = vector.load %arg6[%c12, %c0_96, %c0_97] : memref<20x128x128xbf16, #tpu.memory_space<vmem>>, vector<1x128x128xbf16>
    %136 = vector.shape_cast %135 : vector<1x128x128xbf16> to vector<128x128xbf16>
    %cst_98 = arith.constant dense<0.000000e+00> : vector<64x128xf32>
    %137 = tpu.matmul %124, %136, %cst_98 {dimension_numbers = #tpu.dot_dimension_numbers<[1], [0], [0], [1], [0, 0, 1, 1], [], []>} : vector<64x128xbf16>, vector<128x128xbf16>, vector<64x128xf32> -> vector<64x128xf32>
    %138 = arith.truncf %137 : vector<64x128xf32> to vector<64x128xbf16>
    %c128_99 = arith.constant 128 : index
    %c0_100 = arith.constant 0 : index
    %139 = vector.load %arg12[%c128_99, %c0_100] : memref<640x128xbf16, #tpu.memory_space<vmem>>, vector<64x128xbf16>
    tpu.vector_store %arg12[%c128_99, %c0_100], %138 {strides = array<i32>} : memref<640x128xbf16, #tpu.memory_space<vmem>>, vector<64x128xbf16>,
    %c13 = arith.constant 13 : index
    %c0_101 = arith.constant 0 : index
    %c0_102 = arith.constant 0 : index
    %140 = vector.load %arg6[%c13, %c0_101, %c0_102] : memref<20x128x128xbf16, #tpu.memory_space<vmem>>, vector<1x128x128xbf16>
    %141 = vector.shape_cast %140 : vector<1x128x128xbf16> to vector<128x128xbf16>
    %cst_103 = arith.constant dense<0.000000e+00> : vector<64x128xf32>
    %142 = tpu.matmul %124, %141, %cst_103 {dimension_numbers = #tpu.dot_dimension_numbers<[1], [0], [0], [1], [0, 0, 1, 1], [], []>} : vector<64x128xbf16>, vector<128x128xbf16>, vector<64x128xf32> -> vector<64x128xf32>
    %143 = arith.truncf %142 : vector<64x128xf32> to vector<64x128xbf16>
    %c192_104 = arith.constant 192 : index
    %c0_105 = arith.constant 0 : index
    %144 = vector.load %arg12[%c192_104, %c0_105] : memref<640x128xbf16, #tpu.memory_space<vmem>>, vector<64x128xbf16>
    tpu.vector_store %arg12[%c192_104, %c0_105], %143 {strides = array<i32>} : memref<640x128xbf16, #tpu.memory_space<vmem>>, vector<64x128xbf16>,
    %c14 = arith.constant 14 : index
    %c0_106 = arith.constant 0 : index
    %c0_107 = arith.constant 0 : index
    %145 = vector.load %arg6[%c14, %c0_106, %c0_107] : memref<20x128x128xbf16, #tpu.memory_space<vmem>>, vector<1x128x128xbf16>
    %146 = vector.shape_cast %145 : vector<1x128x128xbf16> to vector<128x128xbf16>
    %cst_108 = arith.constant dense<0.000000e+00> : vector<64x128xf32>
    %147 = tpu.matmul %124, %146, %cst_108 {dimension_numbers = #tpu.dot_dimension_numbers<[1], [0], [0], [1], [0, 0, 1, 1], [], []>} : vector<64x128xbf16>, vector<128x128xbf16>, vector<64x128xf32> -> vector<64x128xf32>
    %148 = arith.truncf %147 : vector<64x128xf32> to vector<64x128xbf16>
    %c256_109 = arith.constant 256 : index
    %c0_110 = arith.constant 0 : index
    %149 = vector.load %arg12[%c256_109, %c0_110] : memref<640x128xbf16, #tpu.memory_space<vmem>>, vector<64x128xbf16>
    tpu.vector_store %arg12[%c256_109, %c0_110], %148 {strides = array<i32>} : memref<640x128xbf16, #tpu.memory_space<vmem>>, vector<64x128xbf16>,
    %c15 = arith.constant 15 : index
    %c0_111 = arith.constant 0 : index
    %c0_112 = arith.constant 0 : index
    %150 = vector.load %arg6[%c15, %c0_111, %c0_112] : memref<20x128x128xbf16, #tpu.memory_space<vmem>>, vector<1x128x128xbf16>
    %151 = vector.shape_cast %150 : vector<1x128x128xbf16> to vector<128x128xbf16>
    %cst_113 = arith.constant dense<0.000000e+00> : vector<64x128xf32>
    %152 = tpu.matmul %124, %151, %cst_113 {dimension_numbers = #tpu.dot_dimension_numbers<[1], [0], [0], [1], [0, 0, 1, 1], [], []>} : vector<64x128xbf16>, vector<128x128xbf16>, vector<64x128xf32> -> vector<64x128xf32>
    %153 = arith.truncf %152 : vector<64x128xf32> to vector<64x128xbf16>
    %c320_114 = arith.constant 320 : index
    %c0_115 = arith.constant 0 : index
    %154 = vector.load %arg12[%c320_114, %c0_115] : memref<640x128xbf16, #tpu.memory_space<vmem>>, vector<64x128xbf16>
    tpu.vector_store %arg12[%c320_114, %c0_115], %153 {strides = array<i32>} : memref<640x128xbf16, #tpu.memory_space<vmem>>, vector<64x128xbf16>,
    %c16 = arith.constant 16 : index
    %c0_116 = arith.constant 0 : index
    %c0_117 = arith.constant 0 : index
    %155 = vector.load %arg6[%c16, %c0_116, %c0_117] : memref<20x128x128xbf16, #tpu.memory_space<vmem>>, vector<1x128x128xbf16>
    %156 = vector.shape_cast %155 : vector<1x128x128xbf16> to vector<128x128xbf16>
    %cst_118 = arith.constant dense<0.000000e+00> : vector<64x128xf32>
    %157 = tpu.matmul %124, %156, %cst_118 {dimension_numbers = #tpu.dot_dimension_numbers<[1], [0], [0], [1], [0, 0, 1, 1], [], []>} : vector<64x128xbf16>, vector<128x128xbf16>, vector<64x128xf32> -> vector<64x128xf32>
    %158 = arith.truncf %157 : vector<64x128xf32> to vector<64x128xbf16>
    %c384_119 = arith.constant 384 : index
    %c0_120 = arith.constant 0 : index
    %159 = vector.load %arg12[%c384_119, %c0_120] : memref<640x128xbf16, #tpu.memory_space<vmem>>, vector<64x128xbf16>
    tpu.vector_store %arg12[%c384_119, %c0_120], %158 {strides = array<i32>} : memref<640x128xbf16, #tpu.memory_space<vmem>>, vector<64x128xbf16>,
    %c17 = arith.constant 17 : index
    %c0_121 = arith.constant 0 : index
    %c0_122 = arith.constant 0 : index
    %160 = vector.load %arg6[%c17, %c0_121, %c0_122] : memref<20x128x128xbf16, #tpu.memory_space<vmem>>, vector<1x128x128xbf16>
    %161 = vector.shape_cast %160 : vector<1x128x128xbf16> to vector<128x128xbf16>
    %cst_123 = arith.constant dense<0.000000e+00> : vector<64x128xf32>
    %162 = tpu.matmul %124, %161, %cst_123 {dimension_numbers = #tpu.dot_dimension_numbers<[1], [0], [0], [1], [0, 0, 1, 1], [], []>} : vector<64x128xbf16>, vector<128x128xbf16>, vector<64x128xf32> -> vector<64x128xf32>
    %163 = arith.truncf %162 : vector<64x128xf32> to vector<64x128xbf16>
    %c448_124 = arith.constant 448 : index
    %c0_125 = arith.constant 0 : index
    %164 = vector.load %arg12[%c448_124, %c0_125] : memref<640x128xbf16, #tpu.memory_space<vmem>>, vector<64x128xbf16>
    tpu.vector_store %arg12[%c448_124, %c0_125], %163 {strides = array<i32>} : memref<640x128xbf16, #tpu.memory_space<vmem>>, vector<64x128xbf16>,
    %c18 = arith.constant 18 : index
    %c0_126 = arith.constant 0 : index
    %c0_127 = arith.constant 0 : index
    %165 = vector.load %arg6[%c18, %c0_126, %c0_127] : memref<20x128x128xbf16, #tpu.memory_space<vmem>>, vector<1x128x128xbf16>
    %166 = vector.shape_cast %165 : vector<1x128x128xbf16> to vector<128x128xbf16>
    %cst_128 = arith.constant dense<0.000000e+00> : vector<64x128xf32>
    %167 = tpu.matmul %124, %166, %cst_128 {dimension_numbers = #tpu.dot_dimension_numbers<[1], [0], [0], [1], [0, 0, 1, 1], [], []>} : vector<64x128xbf16>, vector<128x128xbf16>, vector<64x128xf32> -> vector<64x128xf32>
    %168 = arith.truncf %167 : vector<64x128xf32> to vector<64x128xbf16>
    %c512_129 = arith.constant 512 : index
    %c0_130 = arith.constant 0 : index
    %169 = vector.load %arg12[%c512_129, %c0_130] : memref<640x128xbf16, #tpu.memory_space<vmem>>, vector<64x128xbf16>
    tpu.vector_store %arg12[%c512_129, %c0_130], %168 {strides = array<i32>} : memref<640x128xbf16, #tpu.memory_space<vmem>>, vector<64x128xbf16>,
    %c19 = arith.constant 19 : index
    %c0_131 = arith.constant 0 : index
    %c0_132 = arith.constant 0 : index
    %170 = vector.load %arg6[%c19, %c0_131, %c0_132] : memref<20x128x128xbf16, #tpu.memory_space<vmem>>, vector<1x128x128xbf16>
    %171 = vector.shape_cast %170 : vector<1x128x128xbf16> to vector<128x128xbf16>
    %cst_133 = arith.constant dense<0.000000e+00> : vector<64x128xf32>
    %172 = tpu.matmul %124, %171, %cst_133 {dimension_numbers = #tpu.dot_dimension_numbers<[1], [0], [0], [1], [0, 0, 1, 1], [], []>} : vector<64x128xbf16>, vector<128x128xbf16>, vector<64x128xf32> -> vector<64x128xf32>
    %173 = arith.truncf %172 : vector<64x128xf32> to vector<64x128xbf16>
    %c576_134 = arith.constant 576 : index
    %c0_135 = arith.constant 0 : index
    %174 = vector.load %arg12[%c576_134, %c0_135] : memref<640x128xbf16, #tpu.memory_space<vmem>>, vector<64x128xbf16>
    tpu.vector_store %arg12[%c576_134, %c0_135], %173 {strides = array<i32>} : memref<640x128xbf16, #tpu.memory_space<vmem>>, vector<64x128xbf16>,
    %c0_136 = arith.constant 0 : index
    %c0_137 = arith.constant 0 : index
    %c0_138 = arith.constant 0 : index
    %175 = vector.load %arg7[%c0_136, %c0_137, %c0_138] : memref<1x64x640xbf16, #tpu.memory_space<vmem>>, vector<1x64x640xbf16>
    %176 = vector.shape_cast %175 : vector<1x64x640xbf16> to vector<64x640xbf16>
    %c0_139 = arith.constant 0 : index
    %c0_140 = arith.constant 0 : index
    %177 = vector.load %arg12[%c0_139, %c0_140] : memref<640x128xbf16, #tpu.memory_space<vmem>>, vector<640x128xbf16>
    %cst_141 = arith.constant dense<0.000000e+00> : vector<64x128xf32>
    %178 = tpu.matmul %176, %177, %cst_141 {dimension_numbers = #tpu.dot_dimension_numbers<[1], [0], [0], [1], [0, 0, 1, 1], [], []>} : vector<64x640xbf16>, vector<640x128xbf16>, vector<64x128xf32> -> vector<64x128xf32>
    %179 = arith.addf %123, %178 : vector<64x128xf32>
    %cst_142 = arith.constant 0.000000e+00 : f32
    %180 = vector.broadcast %cst_142 : f32 to vector<64x128xf32>
    %181 = arith.maximumf %179, %180 : vector<64x128xf32>
    %c0_143 = arith.constant 0 : index
    %c0_144 = arith.constant 0 : index
    %182 = vector.load %arg11[%c0_143, %c0_144] : memref<64x128xf32, #tpu.memory_space<vmem>>, vector<64x128xf32>
    tpu.vector_store %arg11[%c0_143, %c0_144], %181 {strides = array<i32>} : memref<64x128xf32, #tpu.memory_space<vmem>>, vector<64x128xf32>,
    %c1_i32 = arith.constant 1 : i32
    %183 = arith.cmpi eq, %arg0, %c1_i32 : i32
    %184 = arith.extui %183 : i1 to i32
    %c0_i32_145 = arith.constant 0 : i32
    %185 = arith.cmpi ne, %184, %c0_i32_145 : i32
    scf.if %185 {
      %c0_146 = arith.constant 0 : index
      %c0_147 = arith.constant 0 : index
      %186 = vector.load %arg8[%c0_146, %c0_147] : memref<128x128xf32, #tpu.memory_space<vmem>>, vector<128x128xf32>
      %cst_148 = arith.constant dense<0.000000e+00> : vector<64x128xf32>
      %187 = tpu.matmul %181, %186, %cst_148 {dimension_numbers = #tpu.dot_dimension_numbers<[1], [0], [0], [1], [0, 0, 1, 1], [], []>} : vector<64x128xf32>, vector<128x128xf32>, vector<64x128xf32> -> vector<64x128xf32>
      %c0_149 = arith.constant 0 : index
      %c0_150 = arith.constant 0 : index
      %188 = vector.load %arg9[%c0_149, %c0_150] : memref<1x128xf32, #tpu.memory_space<vmem>>, vector<1x128xf32>
      %189 = vector.broadcast %188 : vector<1x128xf32> to vector<64x128xf32>
      %190 = arith.addf %187, %189 : vector<64x128xf32>
      %c0_151 = arith.constant 0 : index
      %c0_152 = arith.constant 0 : index
      %191 = vector.load %arg10[%c0_151, %c0_152] : memref<64x128xf32, #tpu.memory_space<vmem>>, vector<64x128xf32>
      tpu.vector_store %arg10[%c0_151, %c0_152], %190 {strides = array<i32>} : memref<64x128xf32, #tpu.memory_space<vmem>>, vector<64x128xf32>,
    } else {
    }
    return
  }
  func.func @transform_0(%arg0: i32) -> (i32, i32) {
    %c0_i32 = arith.constant 0 : i32
    %c0_i32_0 = arith.constant 0 : i32
    %c0_i32_1 = arith.constant 0 : i32
    return %c0_i32, %c0_i32_0 : i32, i32
  }
  func.func @transform_1(%arg0: i32) -> (i32, i32, i32) {
    %c0_i32 = arith.constant 0 : i32
    %c0_i32_0 = arith.constant 0 : i32
    %c0_i32_1 = arith.constant 0 : i32
    %c0_i32_2 = arith.constant 0 : i32
    return %c0_i32, %c0_i32_0, %c0_i32_1 : i32, i32, i32
  }
  func.func @transform_2(%arg0: i32) -> (i32, i32, i32) {
    %c0_i32 = arith.constant 0 : i32
    %c0_i32_0 = arith.constant 0 : i32
    %c0_i32_1 = arith.constant 0 : i32
    %c0_i32_2 = arith.constant 0 : i32
    return %c0_i32, %c0_i32_0, %c0_i32_1 : i32, i32, i32
  }
  func.func @transform_3(%arg0: i32) -> (i32, i32, i32) {
    %c0_i32 = arith.constant 0 : i32
    %c0_i32_0 = arith.constant 0 : i32
    %c0_i32_1 = arith.constant 0 : i32
    %c0_i32_2 = arith.constant 0 : i32
    return %c0_i32, %c0_i32_0, %c0_i32_1 : i32, i32, i32
  }
  func.func @transform_4(%arg0: i32) -> (i32, i32, i32) {
    %c0_i32 = arith.constant 0 : i32
    %c0_i32_0 = arith.constant 0 : i32
    %c0_i32_1 = arith.constant 0 : i32
    %c0_i32_2 = arith.constant 0 : i32
    return %c0_i32, %c0_i32_0, %c0_i32_1 : i32, i32, i32
  }
  func.func @transform_5(%arg0: i32) -> (i32, i32, i32) {
    %c0_i32 = arith.constant 0 : i32
    %c0_i32_0 = arith.constant 0 : i32
    %c0_i32_1 = arith.constant 0 : i32
    %c0_i32_2 = arith.constant 0 : i32
    return %c0_i32, %c0_i32_0, %c0_i32_1 : i32, i32, i32
  }
  func.func @transform_6(%arg0: i32) -> (i32, i32, i32) {
    %c0_i32 = arith.constant 0 : i32
    %c0_i32_0 = arith.constant 0 : i32
    %c0_i32_1 = arith.constant 0 : i32
    return %arg0, %c0_i32, %c0_i32_0 : i32, i32, i32
  }
  func.func @transform_7(%arg0: i32) -> (i32, i32) {
    %c0_i32 = arith.constant 0 : i32
    %c0_i32_0 = arith.constant 0 : i32
    %c0_i32_1 = arith.constant 0 : i32
    return %c0_i32, %c0_i32_0 : i32, i32
  }
  func.func @transform_8(%arg0: i32) -> (i32, i32) {
    %c0_i32 = arith.constant 0 : i32
    %c0_i32_0 = arith.constant 0 : i32
    %c0_i32_1 = arith.constant 0 : i32
    return %c0_i32, %c0_i32_0 : i32, i32
  }
  func.func @transform_9(%arg0: i32) -> (i32, i32) {
    %c0_i32 = arith.constant 0 : i32
    %c0_i32_0 = arith.constant 0 : i32
    %c0_i32_1 = arith.constant 0 : i32
    return %c0_i32, %c0_i32_0 : i32, i32
  }
}

</mosaic_0001>

<llo_original>
// kernel: tpu_custom_call.1
$region0: #{tpu_custom_call.1}
  #allocation0 [shape = 'u32[]', space=smem, size = 0x4, offset = 0x4, fixed_abs, tag = 'smem constant byte address 0x4 - core index']
  #allocation1 [shape = 'u32[144,128]{1,0:T(1,128)}', space=vmem, size = 0x12000, scoped, tag = 'internal scratch']
  #allocation2 [shape = 'f32[64,128]{1,0:T(8,128)}', space=vmem, size = 0x8000, scoped, tag = 'scratch operand']
  #allocation3 [shape = 'bf16[640,128]{1,0:T(16,128)(2,1)}', space=vmem, size = 0x28000, scoped, tag = 'scratch operand']
  %s0 = inlined_call_operand.hbm [shape: f32[64,128], index: 0, kind: input, shape index: {}]
  %s1 = inlined_call_operand.vmem [shape: f32[2,1,128], index: 1, kind: input, shape index: {}]
  %s2 = inlined_call_operand.vmem [shape: f32[2,1,128], index: 2, kind: input, shape index: {}]
  %s3 = inlined_call_operand.hbm [shape: f32[2,128,128], index: 3, kind: input, shape index: {}]
  %s4 = inlined_call_operand.vmem [shape: f32[2,1,128], index: 4, kind: input, shape index: {}]
  %s5 = inlined_call_operand.hbm [shape: bf16[20,128,128], index: 5, kind: input, shape index: {}]
  %s6 = inlined_call_operand.hbm [shape: bf16[2,64,640], index: 6, kind: input, shape index: {}]
  %s7 = inlined_call_operand.hbm [shape: f32[128,128], index: 7, kind: input, shape index: {}]
  %s8 = inlined_call_operand.vmem [shape: f32[1,128], index: 8, kind: input, shape index: {}]
  %s9 = inlined_call_operand.hbm [shape: f32[64,128], index: 9, kind: output, shape index: {}]
  %s10 = sld [smem:[#allocation0]]
  $region97: #{tpu_custom_call.1} parent=0
    _
  %s12 = ssub.s32 1, %s10
  %s13 = scalar_select 0, %s12, %s10
  $region1: #{tpu_custom_call.1} parent=0
    #allocation4 [shape = 'u8[32768]{0}', space=vmem, size = 0x8000, scoped, tag = 'input window, operand 0, single buffered']
    #allocation5 [shape = 's32[2]{0}', space=sflag, size = 0x8, scoped, tag = 'scoped memory for tpu_custom_call.1']
    #allocation6 [shape = 's32[2]{0}', space=sflag, size = 0x8, scoped, tag = 'scoped memory for tpu_custom_call.1']
    #allocation7 [shape = 'u8[131072]{0}', space=vmem, size = 0x20000, scoped, tag = 'input window, operand 3, single buffered']
    #allocation8 [shape = 's32[1]{0}', space=sflag, size = 0x4, scoped, tag = 'scoped memory for tpu_custom_call.1']
    #allocation9 [shape = 'u8[655360]{0}', space=vmem, size = 0xa0000, scoped, tag = 'input window, operand 5, single buffered']
    #allocation10 [shape = 'u8[163840]{0}', space=vmem, size = 0x28000, scoped, tag = 'input window, operand 6']
    #allocation11 [shape = 's32[2]{0}', space=sflag, size = 0x8, scoped, tag = 'scoped memory for tpu_custom_call.1']
    #allocation12 [shape = 'u8[65536]{0}', space=vmem, size = 0x10000, scoped, tag = 'input window, operand 7, single buffered']
    #allocation13 [shape = 'u8[32768]{0}', space=vmem, size = 0x8000, scoped, tag = 'output window, operand 0, single buffered']
    %14 = vsyncpa [#allocation5], 0
    %15 = vsyncpa [#allocation8], 0
    %16 = vsyncpa [#allocation11], 0
    %s17 = scalar_lea.sflag [#allocation11], 1
    %18 = vsyncpa %s17, 0
    %19 = vsyncpa [#allocation6], 0
    loop: start=0, step=1, limit=4
    $region2: #{tpu_custom_call.1} parent=1 // loop_pre_header
      _
    $region3: #{tpu_custom_call.1} parent=1 // loop_header
      %s21 = sphi 0, %s25
      %p22 = scmp.ge.s32.totalorder %s21, 4
      %s29 = sphi 0, %s29
      %s31 = sphi 0, %s29
      %s32 = sphi 0, %s31
      %s46 = sphi 0, %s32
      %s50 = sphi 0, %s50
      %s52 = sphi 0, %s50
      %s53 = sphi 0, %s52
      %s67 = sphi 0, %s53
      %s71 = sphi 0, %s71
      %s73 = sphi 0, %s71
      %s74 = sphi 0, %s73
      %s88 = sphi 0, %s74
      %s92 = sphi 0, %s92
      %s94 = sphi 0, %s92
      %s95 = sphi 0, %s94
      %s109 = sphi 0, %s95
      %s113 = sphi 0, %s113
      %s115 = sphi 0, %s113
      %s116 = sphi 0, %s115
      %s130 = sphi 0, %s116
      %s134 = sphi 0, %s134
      %s136 = sphi 0, %s134
      %s137 = sphi 0, %s136
      %s151 = sphi 0, %s137
      %s157 = sphi 0, %s159
      %s160 = sphi 0, %s157
      %s161 = sphi 0, %s160
      %s177 = sphi 0, %s161
      %s181 = sphi 0, %s181
      %s183 = sphi 0, %s181
      %s184 = sphi 0, %s183
      %s198 = sphi 0, %s184
      %s202 = sphi 0, %s202
      %s204 = sphi 0, %s202
      %s205 = sphi 0, %s204
      %s219 = sphi 0, %s205
      %s223 = sphi 0, %s223
      %s225 = sphi 0, %s223
      %s226 = sphi 0, %s225
      %s240 = sphi 0, %s226
    $region4: #{tpu_custom_call.1} parent=1 // loop_header_branch
      %24 = sbr.rel (%p22) target = $region8
    $region5: #{tpu_custom_call.1} parent=1 // loop_body
      %s26 = ssub.s32 %s21, 1
      %s27 = ssub.s32 %s21, 2
      %s28 = sadd.s32 %s21, 1
      %s30 = sadd.s32 %s29, 1
      %p33 = scmp.eq.s32.totalorder %s21, 1
      %p34 = scmp.ne.s32.totalorder %s29, %s31
      %p35 = scmp.eq.s32.totalorder %s21, 0
      %p36 = por %p34, %p35
      %p37 = scmp.ne.s32.totalorder %s29, %s31
      %p38 = scmp.eq.s32.totalorder %s26, 1
      %p39 = por %p37, %p38
      %p40 = scmp.ne.s32.totalorder %s31, %s32
      %p41 = scmp.eq.s32.totalorder %s26, 0
      %p42 = por %p40, %p41
      %p43 = scmp.ne.s32.totalorder %s31, %s32
      %p44 = scmp.eq.s32.totalorder %s27, 1
      %p45 = por %p43, %p44
      %p47 = scmp.ne.s32.totalorder %s32, %s46
      %p48 = scmp.eq.s32.totalorder %s27, 0
      %p49 = por %p47, %p48
      %s51 = sadd.s32 %s50, 1
      %p54 = scmp.eq.s32.totalorder %s21, 1
      %p55 = scmp.ne.s32.totalorder %s50, %s52
      %p56 = scmp.eq.s32.totalorder %s21, 0
      %p57 = por %p55, %p56
      %p58 = scmp.ne.s32.totalorder %s50, %s52
      %p59 = scmp.eq.s32.totalorder %s26, 1
      %p60 = por %p58, %p59
      %p61 = scmp.ne.s32.totalorder %s52, %s53
      %p62 = scmp.eq.s32.totalorder %s26, 0
      %p63 = por %p61, %p62
      %p64 = scmp.ne.s32.totalorder %s52, %s53
      %p65 = scmp.eq.s32.totalorder %s27, 1
      %p66 = por %p64, %p65
      %p68 = scmp.ne.s32.totalorder %s53, %s67
      %p69 = scmp.eq.s32.totalorder %s27, 0
      %p70 = por %p68, %p69
      %s72 = sadd.s32 %s71, 1
      %p75 = scmp.eq.s32.totalorder %s21, 1
      %p76 = scmp.ne.s32.totalorder %s71, %s73
      %p77 = scmp.eq.s32.totalorder %s21, 0
      %p78 = por %p76, %p77
      %p79 = scmp.ne.s32.totalorder %s71, %s73
      %p80 = scmp.eq.s32.totalorder %s26, 1
      %p81 = por %p79, %p80
      %p82 = scmp.ne.s32.totalorder %s73, %s74
      %p83 = scmp.eq.s32.totalorder %s26, 0
      %p84 = por %p82, %p83
      %p85 = scmp.ne.s32.totalorder %s73, %s74
      %p86 = scmp.eq.s32.totalorder %s27, 1
      %p87 = por %p85, %p86
      %p89 = scmp.ne.s32.totalorder %s74, %s88
      %p90 = scmp.eq.s32.totalorder %s27, 0
      %p91 = por %p89, %p90
      %s93 = sadd.s32 %s92, 1
      %p96 = scmp.eq.s32.totalorder %s21, 1
      %p97 = scmp.ne.s32.totalorder %s92, %s94
      %p98 = scmp.eq.s32.totalorder %s21, 0
      %p99 = por %p97, %p98
      %p100 = scmp.ne.s32.totalorder %s92, %s94
      %p101 = scmp.eq.s32.totalorder %s26, 1
      %p102 = por %p100, %p101
      %p103 = scmp.ne.s32.totalorder %s94, %s95
      %p104 = scmp.eq.s32.totalorder %s26, 0
      %p105 = por %p103, %p104
      %p106 = scmp.ne.s32.totalorder %s94, %s95
      %p107 = scmp.eq.s32.totalorder %s27, 1
      %p108 = por %p106, %p107
      %p110 = scmp.ne.s32.totalorder %s95, %s109
      %p111 = scmp.eq.s32.totalorder %s27, 0
      %p112 = por %p110, %p111
      %s114 = sadd.s32 %s113, 1
      %p117 = scmp.eq.s32.totalorder %s21, 1
      %p118 = scmp.ne.s32.totalorder %s113, %s115
      %p119 = scmp.eq.s32.totalorder %s21, 0
      %p120 = por %p118, %p119
      %p121 = scmp.ne.s32.totalorder %s113, %s115
      %p122 = scmp.eq.s32.totalorder %s26, 1
      %p123 = por %p121, %p122
      %p124 = scmp.ne.s32.totalorder %s115, %s116
      %p125 = scmp.eq.s32.totalorder %s26, 0
      %p126 = por %p124, %p125
      %p127 = scmp.ne.s32.totalorder %s115, %s116
      %p128 = scmp.eq.s32.totalorder %s27, 1
      %p129 = por %p127, %p128
      %p131 = scmp.ne.s32.totalorder %s116, %s130
      %p132 = scmp.eq.s32.totalorder %s27, 0
      %p133 = por %p131, %p132
      %s135 = sadd.s32 %s134, 1
      %p138 = scmp.eq.s32.totalorder %s21, 1
      %p139 = scmp.ne.s32.totalorder %s134, %s136
      %p140 = scmp.eq.s32.totalorder %s21, 0
      %p141 = por %p139, %p140
      %p142 = scmp.ne.s32.totalorder %s134, %s136
      %p143 = scmp.eq.s32.totalorder %s26, 1
      %p144 = por %p142, %p143
      %p145 = scmp.ne.s32.totalorder %s136, %s137
      %p146 = scmp.eq.s32.totalorder %s26, 0
      %p147 = por %p145, %p146
      %p148 = scmp.ne.s32.totalorder %s136, %s137
      %p149 = scmp.eq.s32.totalorder %s27, 1
      %p150 = por %p148, %p149
      %p152 = scmp.ne.s32.totalorder %s137, %s151
      %p153 = scmp.eq.s32.totalorder %s27, 0
      %p154 = por %p152, %p153
      %s155 = ssub.s32 %s21, %s28
      %p156 = scmp.eq.s32.totalorder %s155, 0
      %s158 = sadd.s32 %s157, 1
      %s159 = scalar_select %p156, %s157, %s158
      %p162 = pneg %p156
      %p163 = scmp.eq.s32.totalorder %s21, 1
      %p164 = por %p162, %p163
      %p165 = scmp.ne.s32.totalorder %s157, %s160
      %p166 = scmp.eq.s32.totalorder %s21, 0
      %p167 = por %p165, %p166
      %p168 = scmp.ne.s32.totalorder %s157, %s160
      %p169 = scmp.eq.s32.totalorder %s26, 1
      %p170 = por %p168, %p169
      %p171 = scmp.ne.s32.totalorder %s160, %s161
      %p172 = scmp.eq.s32.totalorder %s26, 0
      %p173 = por %p171, %p172
      %p174 = scmp.ne.s32.totalorder %s160, %s161
      %p175 = scmp.eq.s32.totalorder %s27, 1
      %p176 = por %p174, %p175
      %p178 = scmp.ne.s32.totalorder %s161, %s177
      %p179 = scmp.eq.s32.totalorder %s27, 0
      %p180 = por %p178, %p179
      %s182 = sadd.s32 %s181, 1
      %p185 = scmp.eq.s32.totalorder %s21, 1
      %p186 = scmp.ne.s32.totalorder %s181, %s183
      %p187 = scmp.eq.s32.totalorder %s21, 0
      %p188 = por %p186, %p187
      %p189 = scmp.ne.s32.totalorder %s181, %s183
      %p190 = scmp.eq.s32.totalorder %s26, 1
      %p191 = por %p189, %p190
      %p192 = scmp.ne.s32.totalorder %s183, %s184
      %p193 = scmp.eq.s32.totalorder %s26, 0
      %p194 = por %p192, %p193
      %p195 = scmp.ne.s32.totalorder %s183, %s184
      %p196 = scmp.eq.s32.totalorder %s27, 1
      %p197 = por %p195, %p196
      %p199 = scmp.ne.s32.totalorder %s184, %s198
      %p200 = scmp.eq.s32.totalorder %s27, 0
      %p201 = por %p199, %p200
      %s203 = sadd.s32 %s202, 1
      %p206 = scmp.eq.s32.totalorder %s21, 1
      %p207 = scmp.ne.s32.totalorder %s202, %s204
      %p208 = scmp.eq.s32.totalorder %s21, 0
      %p209 = por %p207, %p208
      %p210 = scmp.ne.s32.totalorder %s202, %s204
      %p211 = scmp.eq.s32.totalorder %s26, 1
      %p212 = por %p210, %p211
      %p213 = scmp.ne.s32.totalorder %s204, %s205
      %p214 = scmp.eq.s32.totalorder %s26, 0
      %p215 = por %p213, %p214
      %p216 = scmp.ne.s32.totalorder %s204, %s205
      %p217 = scmp.eq.s32.totalorder %s27, 1
      %p218 = por %p216, %p217
      %p220 = scmp.ne.s32.totalorder %s205, %s219
      %p221 = scmp.eq.s32.totalorder %s27, 0
      %p222 = por %p220, %p221
      %s224 = sadd.s32 %s223, 1
      %p227 = scmp.eq.s32.totalorder %s21, 1
      %p228 = scmp.ne.s32.totalorder %s223, %s225
      %p229 = scmp.eq.s32.totalorder %s21, 0
      %p230 = por %p228, %p229
      %p231 = scmp.ne.s32.totalorder %s223, %s225
      %p232 = scmp.eq.s32.totalorder %s26, 1
      %p233 = por %p231, %p232
      %p234 = scmp.ne.s32.totalorder %s225, %s226
      %p235 = scmp.eq.s32.totalorder %s26, 0
      %p236 = por %p234, %p235
      %p237 = scmp.ne.s32.totalorder %s225, %s226
      %p238 = scmp.eq.s32.totalorder %s27, 1
      %p239 = por %p237, %p238
      %p241 = scmp.ne.s32.totalorder %s226, %s240
      %p242 = scmp.eq.s32.totalorder %s27, 0
      %p243 = por %p241, %p242
      %p244 = scmp.le.s32.totalorder 1, %s21
      %p245 = scmp.lt.s32.totalorder %s21, 3
      %p246 = pnand %p244, %p245
      %p247 = pneg %p246
      // Predicated region
      $region9: #{tpu_custom_call.1} parent=5 // pred_check
        _
      $region10: #{tpu_custom_call.1} parent=5 // pred_check_branch
        %249 = sbr.rel (%p246) target = $region12
      $region11: #{tpu_custom_call.1} parent=5 // pred_region
        %s250 = ssub.s32 %s21, 1
        // Predicated region
        $region13: #{tpu_custom_call.1} parent=11 // pred_check
          %p251 = pneg %p42
        $region14: #{tpu_custom_call.1} parent=11 // pred_check_branch
          %253 = sbr.rel (%p251) target = $region16
        $region15: #{tpu_custom_call.1} parent=11 // pred_region
          %s255 = ssub.s32 1024, 1024
          %256 = vsyncadd [#allocation5], %s255
          %s257 = sshll.u32 [#allocation4], 4
          %s258 = int_to_ptr.vmem [resolvable:$true] %s257
          %263 = dma.hbm_to_vmem [thread:$0]  %s0, 1024, %s258, [#allocation5], 128, 128, 8
        $region16: #{tpu_custom_call.1} parent=11 // pred_fallthru
          _
        // Predicated region
        $region17: #{tpu_custom_call.1} parent=11 // pred_check
          %p264 = pneg %p63
        $region18: #{tpu_custom_call.1} parent=11 // pred_check_branch
          %266 = sbr.rel (%p264) target = $region20
        $region19: #{tpu_custom_call.1} parent=11 // pred_region
          _
        $region20: #{tpu_custom_call.1} parent=11 // pred_fallthru
          _
        // Predicated region
        $region21: #{tpu_custom_call.1} parent=11 // pred_check
          %p267 = pneg %p84
        $region22: #{tpu_custom_call.1} parent=11 // pred_check_branch
          %269 = sbr.rel (%p267) target = $region24
        $region23: #{tpu_custom_call.1} parent=11 // pred_region
          _
        $region24: #{tpu_custom_call.1} parent=11 // pred_fallthru
          _
        // Predicated region
        $region25: #{tpu_custom_call.1} parent=11 // pred_check
          %p270 = pneg %p105
        $region26: #{tpu_custom_call.1} parent=11 // pred_check_branch
          %272 = sbr.rel (%p270) target = $region28
        $region27: #{tpu_custom_call.1} parent=11 // pred_region
          %s274 = ssub.s32 4096, 4096
          %275 = vsyncadd [#allocation8], %s274
          %s276 = sshll.u32 [#allocation7], 4
          %s277 = int_to_ptr.vmem [resolvable:$true] %s276
          %282 = dma.hbm_to_vmem [thread:$0]  %s3, 4096, %s277, [#allocation8], 128, 128, 8
        $region28: #{tpu_custom_call.1} parent=11 // pred_fallthru
          _
        // Predicated region
        $region29: #{tpu_custom_call.1} parent=11 // pred_check
          %p283 = pneg %p126
        $region30: #{tpu_custom_call.1} parent=11 // pred_check_branch
          %285 = sbr.rel (%p283) target = $region32
        $region31: #{tpu_custom_call.1} parent=11 // pred_region
          _
        $region32: #{tpu_custom_call.1} parent=11 // pred_fallthru
          _
        // Predicated region
        $region33: #{tpu_custom_call.1} parent=11 // pred_check
          %p286 = pneg %p147
        $region34: #{tpu_custom_call.1} parent=11 // pred_check_branch
          %288 = sbr.rel (%p286) target = $region36
        $region35: #{tpu_custom_call.1} parent=11 // pred_region
          %s290 = ssub.s32 20480, 20480
          %291 = vsyncadd [#allocation8], %s290
          %s292 = sshll.u32 [#allocation9], 4
          %s293 = int_to_ptr.vmem [resolvable:$true] %s292
          %298 = dma.hbm_to_vmem [thread:$0]  %s5, 20480, %s293, [#allocation8], 64, 64, 4
        $region36: #{tpu_custom_call.1} parent=11 // pred_fallthru
          _
        // Predicated region
        $region37: #{tpu_custom_call.1} parent=11 // pred_check
          %p299 = pneg %p194
        $region38: #{tpu_custom_call.1} parent=11 // pred_check_branch
          %301 = sbr.rel (%p299) target = $region40
        $region39: #{tpu_custom_call.1} parent=11 // pred_region
          %s303 = ssub.s32 2048, 2048
          %304 = vsyncadd [#allocation11], %s303
          %s305 = sshll.u32 [#allocation12], 4
          %s306 = int_to_ptr.vmem [resolvable:$true] %s305
          %311 = dma.hbm_to_vmem [thread:$0]  %s7, 2048, %s306, [#allocation11], 128, 128, 8
        $region40: #{tpu_custom_call.1} parent=11 // pred_fallthru
          _
        // Predicated region
        $region41: #{tpu_custom_call.1} parent=11 // pred_check
          %p312 = pneg %p215
        $region42: #{tpu_custom_call.1} parent=11 // pred_check_branch
          %314 = sbr.rel (%p312) target = $region44
        $region43: #{tpu_custom_call.1} parent=11 // pred_region
          _
        $region44: #{tpu_custom_call.1} parent=11 // pred_fallthru
          _
      $region12: #{tpu_custom_call.1} parent=5 // pred_fallthru
        _
      %p315 = scmp.lt.s32.totalorder %s21, 2
      // Predicated region
      $region45: #{tpu_custom_call.1} parent=5 // pred_check
        %p316 = pneg %p315
      $region46: #{tpu_custom_call.1} parent=5 // pred_check_branch
        %318 = sbr.rel (%p316) target = $region48
      $region47: #{tpu_custom_call.1} parent=5 // pred_region
        // Predicated region
        $region49: #{tpu_custom_call.1} parent=47 // pred_check
          %p319 = pneg %p167
        $region50: #{tpu_custom_call.1} parent=47 // pred_check_branch
          %321 = sbr.rel (%p319) target = $region52
        $region51: #{tpu_custom_call.1} parent=47 // pred_region
          %s322 = sand.u32 %s21, 1
          %s323 = scalar_lea.sflag [#allocation11], %s322
          %s324 = sand.u32 %s157, 1
          %s325 = smul.addr %s324, 160
          %s326 = scalar_lea.vmem [#allocation10], %s325
          %s328 = ssub.s32 2560, 2560
          %329 = vsyncadd %s323, %s328
          %s330 = smul.addr %s21, 40
          %s331 = smul.addr %s330, 64
          %s332 = scalar_lea.hbm %s6, %s331
          %s333 = sshll.u32 %s326, 4
          %s334 = int_to_ptr.vmem [resolvable:$true] %s333
          %339 = dma.hbm_to_vmem [thread:$0]  %s332, 2560, %s334, %s323, 320, 320, 20
        $region52: #{tpu_custom_call.1} parent=47 // pred_fallthru
          _
      $region48: #{tpu_custom_call.1} parent=5 // pred_fallthru
        _
      %p340 = scmp.le.s32.totalorder 1, %s21
      %p341 = scmp.lt.s32.totalorder %s21, 3
      %p342 = pnand %p340, %p341
      %p343 = pneg %p342
      // Predicated region
      $region53: #{tpu_custom_call.1} parent=5 // pred_check
        _
      $region54: #{tpu_custom_call.1} parent=5 // pred_check_branch
        %345 = sbr.rel (%p342) target = $region56
      $region55: #{tpu_custom_call.1} parent=5 // pred_region
        %s346 = ssub.s32 %s21, 1
        // Predicated region
        $region57: #{tpu_custom_call.1} parent=55 // pred_check
          %p347 = pneg %p42
        $region58: #{tpu_custom_call.1} parent=55 // pred_check_branch
          %349 = sbr.rel (%p347) target = $region60
        $region59: #{tpu_custom_call.1} parent=55 // pred_region
          %350 = dma.done [#allocation5], 1024
        $region60: #{tpu_custom_call.1} parent=55 // pred_fallthru
          _
        // Predicated region
        $region61: #{tpu_custom_call.1} parent=55 // pred_check
          %p351 = pneg %p105
        $region62: #{tpu_custom_call.1} parent=55 // pred_check_branch
          %353 = sbr.rel (%p351) target = $region64
        $region63: #{tpu_custom_call.1} parent=55 // pred_region
          %354 = dma.done [#allocation8], 4096
        $region64: #{tpu_custom_call.1} parent=55 // pred_fallthru
          _
        // Predicated region
        $region65: #{tpu_custom_call.1} parent=55 // pred_check
          %p355 = pneg %p147
        $region66: #{tpu_custom_call.1} parent=55 // pred_check_branch
          %357 = sbr.rel (%p355) target = $region68
        $region67: #{tpu_custom_call.1} parent=55 // pred_region
          %358 = dma.done [#allocation8], 20480
        $region68: #{tpu_custom_call.1} parent=55 // pred_fallthru
          _
        %s359 = sand.u32 %s26, 1
        %s360 = scalar_lea.sflag [#allocation11], %s359
        %s361 = sand.u32 %s160, 1
        %s362 = smul.addr %s361, 160
        %s363 = scalar_lea.vmem [#allocation10], %s362
        // Predicated region
        $region69: #{tpu_custom_call.1} parent=55 // pred_check
          %p364 = pneg %p173
        $region70: #{tpu_custom_call.1} parent=55 // pred_check_branch
          %366 = sbr.rel (%p364) target = $region72
        $region71: #{tpu_custom_call.1} parent=55 // pred_region
          %367 = dma.done %s360, 2560
        $region72: #{tpu_custom_call.1} parent=55 // pred_fallthru
          _
        // Predicated region
        $region73: #{tpu_custom_call.1} parent=55 // pred_check
          %p368 = pneg %p194
        $region74: #{tpu_custom_call.1} parent=55 // pred_check_branch
          %370 = sbr.rel (%p368) target = $region76
        $region75: #{tpu_custom_call.1} parent=55 // pred_region
          %371 = dma.done [#allocation11], 2048
        $region76: #{tpu_custom_call.1} parent=55 // pred_fallthru
          _
        %p372 = pneg %p42
        %p373 = pneg %p39
        %p374 = pneg %p63
        %p375 = pneg %p60
        %p376 = pneg %p84
        %p377 = pneg %p81
        %p378 = pneg %p105
        %p379 = pneg %p102
        %p380 = pneg %p126
        %p381 = pneg %p123
        %p382 = pneg %p147
        %p383 = pneg %p144
        %s384 = sand.u32 %s26, 1
        %s385 = scalar_lea.sflag [#allocation11], %s384
        %s386 = sand.u32 %s160, 1
        %s387 = smul.addr %s386, 160
        %s388 = scalar_lea.vmem [#allocation10], %s387
        %p389 = pneg %p173
        %p390 = pneg %p170
        %p391 = pneg %p194
        %p392 = pneg %p191
        %p393 = pneg %p215
        %p394 = pneg %p212
        %p395 = pneg %p236
        %p396 = pneg %p233
        %p398 = scmp.eq.s32.totalorder %s26, 0
        // Predicated region
        $region77: #{tpu_custom_call.1} parent=55 // pred_check
          %p399 = pneg %p398
        $region78: #{tpu_custom_call.1} parent=55 // pred_check_branch
          %401 = sbr.rel (%p399) target = $region80
        $region79: #{tpu_custom_call.1} parent=55 // pred_region
          %v402 = vld [vmem:[#allocation4] sm:$0xff]
          %v403 = vld [vmem:[#allocation4 + $0x8] sm:$0xff]
          %v404 = vld [vmem:[#allocation4 + $0x10] sm:$0xff]
          %v405 = vld [vmem:[#allocation4 + $0x18] sm:$0xff]
          %v406 = vld [vmem:[#allocation4 + $0x20] sm:$0xff]
          %v407 = vld [vmem:[#allocation4 + $0x28] sm:$0xff]
          %v408 = vld [vmem:[#allocation4 + $0x30] sm:$0xff]
          %v409 = vld [vmem:[#allocation4 + $0x38] sm:$0xff]
          %410 = vst [vmem:[#allocation2] sm:$0xff] %v402
          %411 = vst [vmem:[#allocation2 + $0x8] sm:$0xff] %v403
          %412 = vst [vmem:[#allocation2 + $0x10] sm:$0xff] %v404
          %413 = vst [vmem:[#allocation2 + $0x18] sm:$0xff] %v405
          %414 = vst [vmem:[#allocation2 + $0x20] sm:$0xff] %v406
          %415 = vst [vmem:[#allocation2 + $0x28] sm:$0xff] %v407
          %416 = vst [vmem:[#allocation2 + $0x30] sm:$0xff] %v408
          %417 = vst [vmem:[#allocation2 + $0x38] sm:$0xff] %v409
          %418 = vst [vmem:[#allocation3] sm:$0xff] 0
          %419 = vst [vmem:[#allocation3 + $0x8] sm:$0xff] 0
          %420 = vst [vmem:[#allocation3 + $0x10] sm:$0xff] 0
          %421 = vst [vmem:[#allocation3 + $0x18] sm:$0xff] 0
          %422 = vst [vmem:[#allocation3 + $0x20] sm:$0xff] 0
          %423 = vst [vmem:[#allocation3 + $0x28] sm:$0xff] 0
          %424 = vst [vmem:[#allocation3 + $0x30] sm:$0xff] 0
          %425 = vst [vmem:[#allocation3 + $0x38] sm:$0xff] 0
          %426 = vst [vmem:[#allocation3 + $0x40] sm:$0xff] 0
          %427 = vst [vmem:[#allocation3 + $0x48] sm:$0xff] 0
          %428 = vst [vmem:[#allocation3 + $0x50] sm:$0xff] 0
          %429 = vst [vmem:[#allocation3 + $0x58] sm:$0xff] 0
          %430 = vst [vmem:[#allocation3 + $0x60] sm:$0xff] 0
          %431 = vst [vmem:[#allocation3 + $0x68] sm:$0xff] 0
          %432 = vst [vmem:[#allocation3 + $0x70] sm:$0xff] 0
          %433 = vst [vmem:[#allocation3 + $0x78] sm:$0xff] 0
          %434 = vst [vmem:[#allocation3 + $0x80] sm:$0xff] 0
          %435 = vst [vmem:[#allocation3 + $0x88] sm:$0xff] 0
          %436 = vst [vmem:[#allocation3 + $0x90] sm:$0xff] 0
          %437 = vst [vmem:[#allocation3 + $0x98] sm:$0xff] 0
          %438 = vst [vmem:[#allocation3 + $0xa0] sm:$0xff] 0
          %439 = vst [vmem:[#allocation3 + $0xa8] sm:$0xff] 0
          %440 = vst [vmem:[#allocation3 + $0xb0] sm:$0xff] 0
          %441 = vst [vmem:[#allocation3 + $0xb8] sm:$0xff] 0
          %442 = vst [vmem:[#allocation3 + $0xc0] sm:$0xff] 0
          %443 = vst [vmem:[#allocation3 + $0xc8] sm:$0xff] 0
          %444 = vst [vmem:[#allocation3 + $0xd0] sm:$0xff] 0
          %445 = vst [vmem:[#allocation3 + $0xd8] sm:$0xff] 0
          %446 = vst [vmem:[#allocation3 + $0xe0] sm:$0xff] 0
          %447 = vst [vmem:[#allocation3 + $0xe8] sm:$0xff] 0
          %448 = vst [vmem:[#allocation3 + $0xf0] sm:$0xff] 0
          %449 = vst [vmem:[#allocation3 + $0xf8] sm:$0xff] 0
          %450 = vst [vmem:[#allocation3 + $0x100] sm:$0xff] 0
          %451 = vst [vmem:[#allocation3 + $0x108] sm:$0xff] 0
          %452 = vst [vmem:[#allocation3 + $0x110] sm:$0xff] 0
          %453 = vst [vmem:[#allocation3 + $0x118] sm:$0xff] 0
          %454 = vst [vmem:[#allocation3 + $0x120] sm:$0xff] 0
          %455 = vst [vmem:[#allocation3 + $0x128] sm:$0xff] 0
          %456 = vst [vmem:[#allocation3 + $0x130] sm:$0xff] 0
          %457 = vst [vmem:[#allocation3 + $0x138] sm:$0xff] 0
        $region80: #{tpu_custom_call.1} parent=55 // pred_fallthru
          _
        %v458 = vld [vmem:[#allocation2] sm:$0xff]
        %v459 = vld [vmem:[#allocation2 + $0x8] sm:$0xff]
        %v460 = vld [vmem:[#allocation2 + $0x10] sm:$0xff]
        %v461 = vld [vmem:[#allocation2 + $0x18] sm:$0xff]
        %v462 = vld [vmem:[#allocation2 + $0x20] sm:$0xff]
        %v463 = vld [vmem:[#allocation2 + $0x28] sm:$0xff]
        %v464 = vld [vmem:[#allocation2 + $0x30] sm:$0xff]
        %v465 = vld [vmem:[#allocation2 + $0x38] sm:$0xff]
        %v466 = vadd.f32 %v458, %v459
        %v467 = vadd.f32 %v466, %v460
        %v468 = vadd.f32 %v467, %v461
        %v469 = vadd.f32 %v468, %v462
        %v470 = vadd.f32 %v469, %v463
        %v471 = vadd.f32 %v470, %v464
        %v472 = vadd.f32 %v471, %v465
        %v473 = vrot.slane %v472, 4
        %v474 = vadd.f32 %v472, %v473
        %v475 = vrot.slane %v474, 2
        %v476 = vadd.f32 %v474, %v475
        %v477 = vrot.slane %v476, 1
        %v478 = vadd.f32 %v476, %v477
        %v479 = vmul.f32 %v478, 0.015625
        %v480 = vsub.f32 %v458, %v479
        %v481 = vsub.f32 %v459, %v479
        %v482 = vsub.f32 %v460, %v479
        %v483 = vsub.f32 %v461, %v479
        %v484 = vsub.f32 %v462, %v479
        %v485 = vsub.f32 %v463, %v479
        %v486 = vsub.f32 %v464, %v479
        %v487 = vsub.f32 %v465, %v479
        %v488 = vmul.f32 %v480, %v480
        %v489 = vmul.f32 %v481, %v481
        %v490 = vmul.f32 %v482, %v482
        %v491 = vmul.f32 %v483, %v483
        %v492 = vmul.f32 %v484, %v484
        %v493 = vmul.f32 %v485, %v485
        %v494 = vmul.f32 %v486, %v486
        %v495 = vmul.f32 %v487, %v487
        %v496 = vadd.f32 %v488, %v489
        %v497 = vadd.f32 %v496, %v490
        %v498 = vadd.f32 %v497, %v491
        %v499 = vadd.f32 %v498, %v492
        %v500 = vadd.f32 %v499, %v493
        %v501 = vadd.f32 %v500, %v494
        %v502 = vadd.f32 %v501, %v495
        %v503 = vrot.slane %v502, 4
        %v504 = vadd.f32 %v502, %v503
        %v505 = vrot.slane %v504, 2
        %v506 = vadd.f32 %v504, %v505
        %v507 = vrot.slane %v506, 1
        %v508 = vadd.f32 %v506, %v507
        %v509 = vmul.f32 %v508, 0.015625
        %v510 = vadd.f32 %v509, 1e-05
        %v511 = vrsqrt.pop %v510
        %v512 = vmul.f32 %v480, %v511
        %v513 = vmul.f32 %v481, %v511
        %v514 = vmul.f32 %v482, %v511
        %v515 = vmul.f32 %v483, %v511
        %v516 = vmul.f32 %v484, %v511
        %v517 = vmul.f32 %v485, %v511
        %v518 = vmul.f32 %v486, %v511
        %v519 = vmul.f32 %v487, %v511
        %v520 = vld [vmem:[%s1] sm:$0x1]
        %v522 = vlaneseq
        %v523 = vshrl.u32 %v522, 7
        %v524 = vsub.s32 0, %v523
        %v525 = vrot.slane %v520, %v524
        %v527 = vmul.f32 %v512, %v525
        %v528 = vmul.f32 %v513, %v525
        %v529 = vmul.f32 %v514, %v525
        %v530 = vmul.f32 %v515, %v525
        %v531 = vmul.f32 %v516, %v525
        %v532 = vmul.f32 %v517, %v525
        %v533 = vmul.f32 %v518, %v525
        %v534 = vmul.f32 %v519, %v525
        %v535 = vld [vmem:[%s2] sm:$0x1]
        %v537 = vlaneseq
        %v538 = vshrl.u32 %v537, 7
        %v539 = vsub.s32 0, %v538
        %v540 = vrot.slane %v535, %v539
        %v542 = vadd.f32 %v527, %v540
        %v543 = vadd.f32 %v528, %v540
        %v544 = vadd.f32 %v529, %v540
        %v545 = vadd.f32 %v530, %v540
        %v546 = vadd.f32 %v531, %v540
        %v547 = vadd.f32 %v532, %v540
        %v548 = vadd.f32 %v533, %v540
        %v549 = vadd.f32 %v534, %v540
        %v550 = vld [vmem:[#allocation7] sm:$0xff]
        %v551 = vld [vmem:[#allocation7 + $0x8] sm:$0xff]
        %v552 = vld [vmem:[#allocation7 + $0x10] sm:$0xff]
        %v553 = vld [vmem:[#allocation7 + $0x18] sm:$0xff]
        %v554 = vld [vmem:[#allocation7 + $0x20] sm:$0xff]
        %v555 = vld [vmem:[#allocation7 + $0x28] sm:$0xff]
        %v556 = vld [vmem:[#allocation7 + $0x30] sm:$0xff]
        %v557 = vld [vmem:[#allocation7 + $0x38] sm:$0xff]
        %v558 = vld [vmem:[#allocation7 + $0x40] sm:$0xff]
        %v559 = vld [vmem:[#allocation7 + $0x48] sm:$0xff]
        %v560 = vld [vmem:[#allocation7 + $0x50] sm:$0xff]
        %v561 = vld [vmem:[#allocation7 + $0x58] sm:$0xff]
        %v562 = vld [vmem:[#allocation7 + $0x60] sm:$0xff]
        %v563 = vld [vmem:[#allocation7 + $0x68] sm:$0xff]
        %v564 = vld [vmem:[#allocation7 + $0x70] sm:$0xff]
        %v565 = vld [vmem:[#allocation7 + $0x78] sm:$0xff]
        %v566 = vld [vmem:[%s4] sm:$0x1]
        %v568 = vlaneseq
        %v569 = vshrl.u32 %v568, 7
        %v570 = vsub.s32 0, %v569
        %v571 = vrot.slane %v566, %v570
        %573 = vmatprep.subr.mxu0 0.0
        %574 = vmatpush1.msra.mxu0 %v550
        %575 = vmatprep.subr.mxu0 0.0
        %576 = vmatpush1.msra.mxu0 %v551
        %577 = vmatprep.subr.mxu0 0.0
        %578 = vmatpush1.msra.mxu0 %v552
        %579 = vmatprep.subr.mxu0 0.0
        %580 = vmatpush1.msra.mxu0 %v553
        %581 = vmatprep.subr.mxu0 0.0
        %582 = vmatpush1.msra.mxu0 %v554
        %583 = vmatprep.subr.mxu0 0.0
        %584 = vmatpush1.msra.mxu0 %v555
        %585 = vmatprep.subr.mxu0 0.0
        %586 = vmatpush1.msra.mxu0 %v556
        %587 = vmatprep.subr.mxu0 0.0
        %588 = vmatpush1.msra.mxu0 %v557
        %589 = vmatprep.subr.mxu0 0.0
        %590 = vmatpush1.msra.mxu0 %v558
        %591 = vmatprep.subr.mxu0 0.0
        %592 = vmatpush1.msra.mxu0 %v559
        %593 = vmatprep.subr.mxu0 0.0
        %594 = vmatpush1.msra.mxu0 %v560
        %595 = vmatprep.subr.mxu0 0.0
        %596 = vmatpush1.msra.mxu0 %v561
        %597 = vmatprep.subr.mxu0 0.0
        %598 = vmatpush1.msra.mxu0 %v562
        %599 = vmatprep.subr.mxu0 0.0
        %600 = vmatpush1.msra.mxu0 %v563
        %601 = vmatprep.subr.mxu0 0.0
        %602 = vmatpush1.msra.mxu0 %v564
        %603 = vmatprep.subr.mxu0 0.0
        %604 = vmatpush1.msra.mxu0 %v565
        %605 = vmatprep.subr.mxu0 0.0
        %606 = vmatpush1.msra.mxu0 0.0
        %607 = vmatprep.subr.mxu0 0.0
        %608 = vmatpush1.msra.mxu0 0.0
        %609 = vmatprep.subr.mxu0 0.0
        %610 = vmatpush1.msra.mxu0 0.0
        %611 = vmatprep.subr.mxu0 0.0
        %612 = vmatpush1.msra.mxu0 0.0
        %613 = vmatprep.subr.mxu0 0.0
        %614 = vmatpush1.msra.mxu0 0.0
        %615 = vmatprep.subr.mxu0 0.0
        %616 = vmatpush1.msra.mxu0 0.0
        %617 = vmatprep.subr.mxu0 0.0
        %618 = vmatpush1.msra.mxu0 0.0
        %619 = vmatprep.subr.mxu0 0.0
        %620 = vmatpush1.msra.mxu0 0.0
        %621 = vmatprep.subr.mxu0 0.0
        %622 = vmatpush1.msra.mxu0 0.0
        %623 = vmatprep.subr.mxu0 0.0
        %624 = vmatpush1.msra.mxu0 0.0
        %625 = vmatprep.subr.mxu0 0.0
        %626 = vmatpush1.msra.mxu0 0.0
        %627 = vmatprep.subr.mxu0 0.0
        %628 = vmatpush1.msra.mxu0 0.0
        %629 = vmatprep.subr.mxu0 0.0
        %630 = vmatpush1.msra.mxu0 0.0
        %631 = vmatprep.subr.mxu0 0.0
        %632 = vmatpush1.msra.mxu0 0.0
        %633 = vmatprep.subr.mxu0 0.0
        %634 = vmatpush1.msra.mxu0 0.0
        %635 = vmatprep.subr.mxu0 0.0
        %636 = vmatpush1.msra.mxu0 0.0
        %637 = vmatprep.mubr.f32.mxu0 0.0
        %638 = vmatmul.mubr.f32.gmra.mrb[0].mxu0 %v542
        %v639 = vpop.f32.mrb[0].mxu0
        %v640 = vadd.f32 %v571, %v639
        %v641 = vpop.f32.mrb[0].mxu0
        %642 = vmatprep.mubr.f32.mxu0 0.0
        %643 = vmatmul.mubr.f32.gmra.mrb[0].mxu0 %v543
        %v644 = vpop.f32.mrb[0].mxu0
        %v645 = vadd.f32 %v571, %v644
        %v646 = vpop.f32.mrb[0].mxu0
        %647 = vmatprep.mubr.f32.mxu0 0.0
        %648 = vmatmul.mubr.f32.gmra.mrb[0].mxu0 %v544
        %v649 = vpop.f32.mrb[0].mxu0
        %v650 = vadd.f32 %v571, %v649
        %v651 = vpop.f32.mrb[0].mxu0
        %652 = vmatprep.mubr.f32.mxu0 0.0
        %653 = vmatmul.mubr.f32.gmra.mrb[0].mxu0 %v545
        %v654 = vpop.f32.mrb[0].mxu0
        %v655 = vadd.f32 %v571, %v654
        %v656 = vpop.f32.mrb[0].mxu0
        %657 = vmatprep.mubr.f32.mxu0 0.0
        %658 = vmatmul.mubr.f32.gmra.mrb[0].mxu0 %v546
        %v659 = vpop.f32.mrb[0].mxu0
        %v660 = vadd.f32 %v571, %v659
        %v661 = vpop.f32.mrb[0].mxu0
        %662 = vmatprep.mubr.f32.mxu0 0.0
        %663 = vmatmul.mubr.f32.gmra.mrb[0].mxu0 %v547
        %v664 = vpop.f32.mrb[0].mxu0
        %v665 = vadd.f32 %v571, %v664
        %v666 = vpop.f32.mrb[0].mxu0
        %667 = vmatprep.mubr.f32.mxu0 0.0
        %668 = vmatmul.mubr.f32.gmra.mrb[0].mxu0 %v548
        %v669 = vpop.f32.mrb[0].mxu0
        %v670 = vadd.f32 %v571, %v669
        %v671 = vpop.f32.mrb[0].mxu0
        %672 = vmatprep.mubr.f32.mxu0 0.0
        %673 = vmatmul.mubr.f32.gmra.mrb[0].mxu0 %v549
        %v674 = vpop.f32.mrb[0].mxu0
        %v675 = vadd.f32 %v571, %v674
        %v676 = vpop.f32.mrb[0].mxu0
        %677 = vdwg.mxu0
        %v678 = vpack.c.bf16 %v543, %v542
        %v679 = vpack.c.bf16 %v545, %v544
        %v680 = vpack.c.bf16 %v547, %v546
        %v681 = vpack.c.bf16 %v549, %v548
        %v682 = vld [vmem:[#allocation9] sm:$0xf]
        %v683 = vld [vmem:[#allocation9 + $0x4] sm:$0xf]
        %v684 = vld [vmem:[#allocation9 + $0x8] sm:$0xf]
        %v685 = vld [vmem:[#allocation9 + $0xc] sm:$0xf]
        %v686 = vld [vmem:[#allocation9 + $0x10] sm:$0xf]
        %v687 = vld [vmem:[#allocation9 + $0x14] sm:$0xf]
        %v688 = vld [vmem:[#allocation9 + $0x18] sm:$0xf]
        %v689 = vld [vmem:[#allocation9 + $0x1c] sm:$0xf]
        %v690 = vld [vmem:[#allocation9 + $0x20] sm:$0xf]
        %v691 = vld [vmem:[#allocation9 + $0x24] sm:$0xf]
        %v692 = vld [vmem:[#allocation9 + $0x28] sm:$0xf]
        %v693 = vld [vmem:[#allocation9 + $0x2c] sm:$0xf]
        %v694 = vld [vmem:[#allocation9 + $0x30] sm:$0xf]
        %v695 = vld [vmem:[#allocation9 + $0x34] sm:$0xf]
        %v696 = vld [vmem:[#allocation9 + $0x38] sm:$0xf]
        %v697 = vld [vmem:[#allocation9 + $0x3c] sm:$0xf]
        %v714 = vunpack.c.l.b16 %v682
        %v715 = vunpack.c.l.b16 %v683
        %v716 = vunpack.c.l.b16 %v684
        %v717 = vunpack.c.l.b16 %v685
        %v718 = vunpack.c.l.b16 %v686
        %v719 = vunpack.c.l.b16 %v687
        %v720 = vunpack.c.l.b16 %v688
        %v721 = vunpack.c.l.b16 %v689
        %v722 = vunpack.c.l.b16 %v690
        %v723 = vunpack.c.l.b16 %v691
        %v724 = vunpack.c.l.b16 %v692
        %v725 = vunpack.c.l.b16 %v693
        %v726 = vunpack.c.l.b16 %v694
        %v727 = vunpack.c.l.b16 %v695
        %v728 = vunpack.c.l.b16 %v696
        %v729 = vunpack.c.l.b16 %v697
        %v730 = vpack.c.b16 %v715, %v714
        %v731 = vpack.c.b16 %v717, %v716
        %v732 = vpack.c.b16 %v719, %v718
        %v733 = vpack.c.b16 %v721, %v720
        %v734 = vpack.c.b16 %v723, %v722
        %v735 = vpack.c.b16 %v725, %v724
        %v736 = vpack.c.b16 %v727, %v726
        %v737 = vpack.c.b16 %v729, %v728
        %746 = vmatprep.subr.bf16.mxu0 0
        %747 = vmatpush1.bf16.msra.mxu0 %v730
        %748 = vmatprep.subr.bf16.mxu0 0
        %749 = vmatpush1.bf16.msra.mxu0 %v731
        %750 = vmatprep.subr.bf16.mxu0 0
        %751 = vmatpush1.bf16.msra.mxu0 %v732
        %752 = vmatprep.subr.bf16.mxu0 0
        %753 = vmatpush1.bf16.msra.mxu0 %v733
        %754 = vmatprep.subr.bf16.mxu0 0
        %755 = vmatpush1.bf16.msra.mxu0 %v734
        %756 = vmatprep.subr.bf16.mxu0 0
        %757 = vmatpush1.bf16.msra.mxu0 %v735
        %758 = vmatprep.subr.bf16.mxu0 0
        %759 = vmatpush1.bf16.msra.mxu0 %v736
        %760 = vmatprep.subr.bf16.mxu0 0
        %761 = vmatpush1.bf16.msra.mxu0 %v737
        %762 = vmatprep.subr.bf16.mxu0 0
        %763 = vmatpush1.bf16.msra.mxu0 0
        %764 = vmatprep.subr.bf16.mxu0 0
        %765 = vmatpush1.bf16.msra.mxu0 0
        %766 = vmatprep.subr.bf16.mxu0 0
        %767 = vmatpush1.bf16.msra.mxu0 0
        %768 = vmatprep.subr.bf16.mxu0 0
        %769 = vmatpush1.bf16.msra.mxu0 0
        %770 = vmatprep.subr.bf16.mxu0 0
        %771 = vmatpush1.bf16.msra.mxu0 0
        %772 = vmatprep.subr.bf16.mxu0 0
        %773 = vmatpush1.bf16.msra.mxu0 0
        %774 = vmatprep.subr.bf16.mxu0 0
        %775 = vmatpush1.bf16.msra.mxu0 0
        %776 = vmatprep.subr.bf16.mxu0 0
        %777 = vmatpush1.bf16.msra.mxu0 0
        %778 = vmatprep.mubr.bf16.mxu0 0
        %779 = vmatmul.mubr.bf16.gmra.mrb[0].mxu0 %v678
        %v780 = vpop.f32.mrb[0].mxu0
        %v781 = vadd.f32 0.0, %v780
        %v782 = vpop.f32.mrb[0].mxu0
        %v783 = vpop.f32.mrb[0].mxu0
        %v784 = vadd.f32 0.0, %v783
        %v785 = vpop.f32.mrb[0].mxu0
        %786 = vmatprep.mubr.bf16.mxu0 0
        %787 = vmatmul.mubr.bf16.gmra.mrb[0].mxu0 %v679
        %v788 = vpop.f32.mrb[0].mxu0
        %v789 = vadd.f32 0.0, %v788
        %v790 = vpop.f32.mrb[0].mxu0
        %v791 = vpop.f32.mrb[0].mxu0
        %v792 = vadd.f32 0.0, %v791
        %v793 = vpop.f32.mrb[0].mxu0
        %794 = vmatprep.mubr.bf16.mxu0 0
        %795 = vmatmul.mubr.bf16.gmra.mrb[0].mxu0 %v680
        %v796 = vpop.f32.mrb[0].mxu0
        %v797 = vadd.f32 0.0, %v796
        %v798 = vpop.f32.mrb[0].mxu0
        %v799 = vpop.f32.mrb[0].mxu0
        %v800 = vadd.f32 0.0, %v799
        %v801 = vpop.f32.mrb[0].mxu0
        %802 = vmatprep.mubr.bf16.mxu0 0
        %803 = vmatmul.mubr.bf16.gmra.mrb[0].mxu0 %v681
        %v804 = vpop.f32.mrb[0].mxu0
        %v805 = vadd.f32 0.0, %v804
        %v806 = vpop.f32.mrb[0].mxu0
        %v807 = vpop.f32.mrb[0].mxu0
        %v808 = vadd.f32 0.0, %v807
        %v809 = vpop.f32.mrb[0].mxu0
        %810 = vdwg.mxu0
        %v811 = vpack.c.bf16 %v784, %v781
        %v812 = vpack.c.bf16 %v792, %v789
        %v813 = vpack.c.bf16 %v800, %v797
        %v814 = vpack.c.bf16 %v808, %v805
        %815 = vst [vmem:[#allocation3] sm:$0xff] %v811
        %816 = vst [vmem:[#allocation3 + $0x8] sm:$0xff] %v812
        %817 = vst [vmem:[#allocation3 + $0x10] sm:$0xff] %v813
        %818 = vst [vmem:[#allocation3 + $0x18] sm:$0xff] %v814
        %s819 = scalar_lea.vmem [#allocation9], 64
        %v820 = vld [vmem:[%s819] sm:$0xf]
        %v821 = vld [vmem:[%s819 + $0x4] sm:$0xf]
        %v822 = vld [vmem:[%s819 + $0x8] sm:$0xf]
        %v823 = vld [vmem:[%s819 + $0xc] sm:$0xf]
        %v824 = vld [vmem:[%s819 + $0x10] sm:$0xf]
        %v825 = vld [vmem:[%s819 + $0x14] sm:$0xf]
        %v826 = vld [vmem:[%s819 + $0x18] sm:$0xf]
        %v827 = vld [vmem:[%s819 + $0x1c] sm:$0xf]
        %v828 = vld [vmem:[%s819 + $0x20] sm:$0xf]
        %v829 = vld [vmem:[%s819 + $0x24] sm:$0xf]
        %v830 = vld [vmem:[%s819 + $0x28] sm:$0xf]
        %v831 = vld [vmem:[%s819 + $0x2c] sm:$0xf]
        %v832 = vld [vmem:[%s819 + $0x30] sm:$0xf]
        %v833 = vld [vmem:[%s819 + $0x34] sm:$0xf]
        %v834 = vld [vmem:[%s819 + $0x38] sm:$0xf]
        %v835 = vld [vmem:[%s819 + $0x3c] sm:$0xf]
        %v852 = vunpack.c.l.b16 %v820
        %v853 = vunpack.c.l.b16 %v821
        %v854 = vunpack.c.l.b16 %v822
        %v855 = vunpack.c.l.b16 %v823
        %v856 = vunpack.c.l.b16 %v824
        %v857 = vunpack.c.l.b16 %v825
        %v858 = vunpack.c.l.b16 %v826
        %v859 = vunpack.c.l.b16 %v827
        %v860 = vunpack.c.l.b16 %v828
        %v861 = vunpack.c.l.b16 %v829
        %v862 = vunpack.c.l.b16 %v830
        %v863 = vunpack.c.l.b16 %v831
        %v864 = vunpack.c.l.b16 %v832
        %v865 = vunpack.c.l.b16 %v833
        %v866 = vunpack.c.l.b16 %v834
        %v867 = vunpack.c.l.b16 %v835
        %v868 = vpack.c.b16 %v853, %v852
        %v869 = vpack.c.b16 %v855, %v854
        %v870 = vpack.c.b16 %v857, %v856
        %v871 = vpack.c.b16 %v859, %v858
        %v872 = vpack.c.b16 %v861, %v860
        %v873 = vpack.c.b16 %v863, %v862
        %v874 = vpack.c.b16 %v865, %v864
        %v875 = vpack.c.b16 %v867, %v866
        %884 = vmatprep.subr.bf16.mxu0 0
        %885 = vmatpush1.bf16.msra.mxu0 %v868
        %886 = vmatprep.subr.bf16.mxu0 0
        %887 = vmatpush1.bf16.msra.mxu0 %v869
        %888 = vmatprep.subr.bf16.mxu0 0
        %889 = vmatpush1.bf16.msra.mxu0 %v870
        %890 = vmatprep.subr.bf16.mxu0 0
        %891 = vmatpush1.bf16.msra.mxu0 %v871
        %892 = vmatprep.subr.bf16.mxu0 0
        %893 = vmatpush1.bf16.msra.mxu0 %v872
        %894 = vmatprep.subr.bf16.mxu0 0
        %895 = vmatpush1.bf16.msra.mxu0 %v873
        %896 = vmatprep.subr.bf16.mxu0 0
        %897 = vmatpush1.bf16.msra.mxu0 %v874
        %898 = vmatprep.subr.bf16.mxu0 0
        %899 = vmatpush1.bf16.msra.mxu0 %v875
        %900 = vmatprep.subr.bf16.mxu0 0
        %901 = vmatpush1.bf16.msra.mxu0 0
        %902 = vmatprep.subr.bf16.mxu0 0
        %903 = vmatpush1.bf16.msra.mxu0 0
        %904 = vmatprep.subr.bf16.mxu0 0
        %905 = vmatpush1.bf16.msra.mxu0 0
        %906 = vmatprep.subr.bf16.mxu0 0
        %907 = vmatpush1.bf16.msra.mxu0 0
        %908 = vmatprep.subr.bf16.mxu0 0
        %909 = vmatpush1.bf16.msra.mxu0 0
        %910 = vmatprep.subr.bf16.mxu0 0
        %911 = vmatpush1.bf16.msra.mxu0 0
        %912 = vmatprep.subr.bf16.mxu0 0
        %913 = vmatpush1.bf16.msra.mxu0 0
        %914 = vmatprep.subr.bf16.mxu0 0
        %915 = vmatpush1.bf16.msra.mxu0 0
        %916 = vmatprep.mubr.bf16.mxu0 0
        %917 = vmatmul.mubr.bf16.gmra.mrb[0].mxu0 %v678
        %v918 = vpop.f32.mrb[0].mxu0
        %v919 = vadd.f32 0.0, %v918
        %v920 = vpop.f32.mrb[0].mxu0
        %v921 = vpop.f32.mrb[0].mxu0
        %v922 = vadd.f32 0.0, %v921
        %v923 = vpop.f32.mrb[0].mxu0
        %924 = vmatprep.mubr.bf16.mxu0 0
        %925 = vmatmul.mubr.bf16.gmra.mrb[0].mxu0 %v679
        %v926 = vpop.f32.mrb[0].mxu0
        %v927 = vadd.f32 0.0, %v926
        %v928 = vpop.f32.mrb[0].mxu0
        %v929 = vpop.f32.mrb[0].mxu0
        %v930 = vadd.f32 0.0, %v929
        %v931 = vpop.f32.mrb[0].mxu0
        %932 = vmatprep.mubr.bf16.mxu0 0
        %933 = vmatmul.mubr.bf16.gmra.mrb[0].mxu0 %v680
        %v934 = vpop.f32.mrb[0].mxu0
        %v935 = vadd.f32 0.0, %v934
        %v936 = vpop.f32.mrb[0].mxu0
        %v937 = vpop.f32.mrb[0].mxu0
        %v938 = vadd.f32 0.0, %v937
        %v939 = vpop.f32.mrb[0].mxu0
        %940 = vmatprep.mubr.bf16.mxu0 0
        %941 = vmatmul.mubr.bf16.gmra.mrb[0].mxu0 %v681
        %v942 = vpop.f32.mrb[0].mxu0
        %v943 = vadd.f32 0.0, %v942
        %v944 = vpop.f32.mrb[0].mxu0
        %v945 = vpop.f32.mrb[0].mxu0
        %v946 = vadd.f32 0.0, %v945
        %v947 = vpop.f32.mrb[0].mxu0
        %948 = vdwg.mxu0
        %v949 = vpack.c.bf16 %v922, %v919
        %v950 = vpack.c.bf16 %v930, %v927
        %v951 = vpack.c.bf16 %v938, %v935
        %v952 = vpack.c.bf16 %v946, %v943
        %953 = vst [vmem:[#allocation3 + $0x20] sm:$0xff] %v949
        %954 = vst [vmem:[#allocation3 + $0x28] sm:$0xff] %v950
        %955 = vst [vmem:[#allocation3 + $0x30] sm:$0xff] %v951
        %956 = vst [vmem:[#allocation3 + $0x38] sm:$0xff] %v952
        %s957 = scalar_lea.vmem [#allocation9], 128
        %v958 = vld [vmem:[%s957] sm:$0xf]
        %v959 = vld [vmem:[%s957 + $0x4] sm:$0xf]
        %v960 = vld [vmem:[%s957 + $0x8] sm:$0xf]
        %v961 = vld [vmem:[%s957 + $0xc] sm:$0xf]
        %v962 = vld [vmem:[%s957 + $0x10] sm:$0xf]
        %v963 = vld [vmem:[%s957 + $0x14] sm:$0xf]
        %v964 = vld [vmem:[%s957 + $0x18] sm:$0xf]
        %v965 = vld [vmem:[%s957 + $0x1c] sm:$0xf]
        %v966 = vld [vmem:[%s957 + $0x20] sm:$0xf]
        %v967 = vld [vmem:[%s957 + $0x24] sm:$0xf]
        %v968 = vld [vmem:[%s957 + $0x28] sm:$0xf]
        %v969 = vld [vmem:[%s957 + $0x2c] sm:$0xf]
        %v970 = vld [vmem:[%s957 + $0x30] sm:$0xf]
        %v971 = vld [vmem:[%s957 + $0x34] sm:$0xf]
        %v972 = vld [vmem:[%s957 + $0x38] sm:$0xf]
        %v973 = vld [vmem:[%s957 + $0x3c] sm:$0xf]
        %v990 = vunpack.c.l.b16 %v958
        %v991 = vunpack.c.l.b16 %v959
        %v992 = vunpack.c.l.b16 %v960
        %v993 = vunpack.c.l.b16 %v961
        %v994 = vunpack.c.l.b16 %v962
        %v995 = vunpack.c.l.b16 %v963
        %v996 = vunpack.c.l.b16 %v964
        %v997 = vunpack.c.l.b16 %v965
        %v998 = vunpack.c.l.b16 %v966
        %v999 = vunpack.c.l.b16 %v967
        %v1000 = vunpack.c.l.b16 %v968
        %v1001 = vunpack.c.l.b16 %v969
        %v1002 = vunpack.c.l.b16 %v970
        %v1003 = vunpack.c.l.b16 %v971
        %v1004 = vunpack.c.l.b16 %v972
        %v1005 = vunpack.c.l.b16 %v973
        %v1006 = vpack.c.b16 %v991, %v990
        %v1007 = vpack.c.b16 %v993, %v992
        %v1008 = vpack.c.b16 %v995, %v994
        %v1009 = vpack.c.b16 %v997, %v996
        %v1010 = vpack.c.b16 %v999, %v998
        %v1011 = vpack.c.b16 %v1001, %v1000
        %v1012 = vpack.c.b16 %v1003, %v1002
        %v1013 = vpack.c.b16 %v1005, %v1004
        %1022 = vmatprep.subr.bf16.mxu0 0
        %1023 = vmatpush1.bf16.msra.mxu0 %v1006
        %1024 = vmatprep.subr.bf16.mxu0 0
        %1025 = vmatpush1.bf16.msra.mxu0 %v1007
        %1026 = vmatprep.subr.bf16.mxu0 0
        %1027 = vmatpush1.bf16.msra.mxu0 %v1008
        %1028 = vmatprep.subr.bf16.mxu0 0
        %1029 = vmatpush1.bf16.msra.mxu0 %v1009
        %1030 = vmatprep.subr.bf16.mxu0 0
        %1031 = vmatpush1.bf16.msra.mxu0 %v1010
        %1032 = vmatprep.subr.bf16.mxu0 0
        %1033 = vmatpush1.bf16.msra.mxu0 %v1011
        %1034 = vmatprep.subr.bf16.mxu0 0
        %1035 = vmatpush1.bf16.msra.mxu0 %v1012
        %1036 = vmatprep.subr.bf16.mxu0 0
        %1037 = vmatpush1.bf16.msra.mxu0 %v1013
        %1038 = vmatprep.subr.bf16.mxu0 0
        %1039 = vmatpush1.bf16.msra.mxu0 0
        %1040 = vmatprep.subr.bf16.mxu0 0
        %1041 = vmatpush1.bf16.msra.mxu0 0
        %1042 = vmatprep.subr.bf16.mxu0 0
        %1043 = vmatpush1.bf16.msra.mxu0 0
        %1044 = vmatprep.subr.bf16.mxu0 0
        %1045 = vmatpush1.bf16.msra.mxu0 0
        %1046 = vmatprep.subr.bf16.mxu0 0
        %1047 = vmatpush1.bf16.msra.mxu0 0
        %1048 = vmatprep.subr.bf16.mxu0 0
        %1049 = vmatpush1.bf16.msra.mxu0 0
        %1050 = vmatprep.subr.bf16.mxu0 0
        %1051 = vmatpush1.bf16.msra.mxu0 0
        %1052 = vmatprep.subr.bf16.mxu0 0
        %1053 = vmatpush1.bf16.msra.mxu0 0
        %1054 = vmatprep.mubr.bf16.mxu0 0
        %1055 = vmatmul.mubr.bf16.gmra.mrb[0].mxu0 %v678
        %v1056 = vpop.f32.mrb[0].mxu0
        %v1057 = vadd.f32 0.0, %v1056
        %v1058 = vpop.f32.mrb[0].mxu0
        %v1059 = vpop.f32.mrb[0].mxu0
        %v1060 = vadd.f32 0.0, %v1059
        %v1061 = vpop.f32.mrb[0].mxu0
        %1062 = vmatprep.mubr.bf16.mxu0 0
        %1063 = vmatmul.mubr.bf16.gmra.mrb[0].mxu0 %v679
        %v1064 = vpop.f32.mrb[0].mxu0
        %v1065 = vadd.f32 0.0, %v1064
        %v1066 = vpop.f32.mrb[0].mxu0
        %v1067 = vpop.f32.mrb[0].mxu0
        %v1068 = vadd.f32 0.0, %v1067
        %v1069 = vpop.f32.mrb[0].mxu0
        %1070 = vmatprep.mubr.bf16.mxu0 0
        %1071 = vmatmul.mubr.bf16.gmra.mrb[0].mxu0 %v680
        %v1072 = vpop.f32.mrb[0].mxu0
        %v1073 = vadd.f32 0.0, %v1072
        %v1074 = vpop.f32.mrb[0].mxu0
        %v1075 = vpop.f32.mrb[0].mxu0
        %v1076 = vadd.f32 0.0, %v1075
        %v1077 = vpop.f32.mrb[0].mxu0
        %1078 = vmatprep.mubr.bf16.mxu0 0
        %1079 = vmatmul.mubr.bf16.gmra.mrb[0].mxu0 %v681
        %v1080 = vpop.f32.mrb[0].mxu0
        %v1081 = vadd.f32 0.0, %v1080
        %v1082 = vpop.f32.mrb[0].mxu0
        %v1083 = vpop.f32.mrb[0].mxu0
        %v1084 = vadd.f32 0.0, %v1083
        %v1085 = vpop.f32.mrb[0].mxu0
        %1086 = vdwg.mxu0
        %v1087 = vpack.c.bf16 %v1060, %v1057
        %v1088 = vpack.c.bf16 %v1068, %v1065
        %v1089 = vpack.c.bf16 %v1076, %v1073
        %v1090 = vpack.c.bf16 %v1084, %v1081
        %1091 = vst [vmem:[#allocation3 + $0x40] sm:$0xff] %v1087
        %1092 = vst [vmem:[#allocation3 + $0x48] sm:$0xff] %v1088
        %1093 = vst [vmem:[#allocation3 + $0x50] sm:$0xff] %v1089
        %1094 = vst [vmem:[#allocation3 + $0x58] sm:$0xff] %v1090
        %s1095 = scalar_lea.vmem [#allocation9], 192
        %v1096 = vld [vmem:[%s1095] sm:$0xf]
        %v1097 = vld [vmem:[%s1095 + $0x4] sm:$0xf]
        %v1098 = vld [vmem:[%s1095 + $0x8] sm:$0xf]
        %v1099 = vld [vmem:[%s1095 + $0xc] sm:$0xf]
        %v1100 = vld [vmem:[%s1095 + $0x10] sm:$0xf]
        %v1101 = vld [vmem:[%s1095 + $0x14] sm:$0xf]
        %v1102 = vld [vmem:[%s1095 + $0x18] sm:$0xf]
        %v1103 = vld [vmem:[%s1095 + $0x1c] sm:$0xf]
        %v1104 = vld [vmem:[%s1095 + $0x20] sm:$0xf]
        %v1105 = vld [vmem:[%s1095 + $0x24] sm:$0xf]
        %v1106 = vld [vmem:[%s1095 + $0x28] sm:$0xf]
        %v1107 = vld [vmem:[%s1095 + $0x2c] sm:$0xf]
        %v1108 = vld [vmem:[%s1095 + $0x30] sm:$0xf]
        %v1109 = vld [vmem:[%s1095 + $0x34] sm:$0xf]
        %v1110 = vld [vmem:[%s1095 + $0x38] sm:$0xf]
        %v1111 = vld [vmem:[%s1095 + $0x3c] sm:$0xf]
        %v1128 = vunpack.c.l.b16 %v1096
        %v1129 = vunpack.c.l.b16 %v1097
        %v1130 = vunpack.c.l.b16 %v1098
        %v1131 = vunpack.c.l.b16 %v1099
        %v1132 = vunpack.c.l.b16 %v1100
        %v1133 = vunpack.c.l.b16 %v1101
        %v1134 = vunpack.c.l.b16 %v1102
        %v1135 = vunpack.c.l.b16 %v1103
        %v1136 = vunpack.c.l.b16 %v1104
        %v1137 = vunpack.c.l.b16 %v1105
        %v1138 = vunpack.c.l.b16 %v1106
        %v1139 = vunpack.c.l.b16 %v1107
        %v1140 = vunpack.c.l.b16 %v1108
        %v1141 = vunpack.c.l.b16 %v1109
        %v1142 = vunpack.c.l.b16 %v1110
        %v1143 = vunpack.c.l.b16 %v1111
        %v1144 = vpack.c.b16 %v1129, %v1128
        %v1145 = vpack.c.b16 %v1131, %v1130
        %v1146 = vpack.c.b16 %v1133, %v1132
        %v1147 = vpack.c.b16 %v1135, %v1134
        %v1148 = vpack.c.b16 %v1137, %v1136
        %v1149 = vpack.c.b16 %v1139, %v1138
        %v1150 = vpack.c.b16 %v1141, %v1140
        %v1151 = vpack.c.b16 %v1143, %v1142
        %1160 = vmatprep.subr.bf16.mxu0 0
        %1161 = vmatpush1.bf16.msra.mxu0 %v1144
        %1162 = vmatprep.subr.bf16.mxu0 0
        %1163 = vmatpush1.bf16.msra.mxu0 %v1145
        %1164 = vmatprep.subr.bf16.mxu0 0
        %1165 = vmatpush1.bf16.msra.mxu0 %v1146
        %1166 = vmatprep.subr.bf16.mxu0 0
        %1167 = vmatpush1.bf16.msra.mxu0 %v1147
        %1168 = vmatprep.subr.bf16.mxu0 0
        %1169 = vmatpush1.bf16.msra.mxu0 %v1148
        %1170 = vmatprep.subr.bf16.mxu0 0
        %1171 = vmatpush1.bf16.msra.mxu0 %v1149
        %1172 = vmatprep.subr.bf16.mxu0 0
        %1173 = vmatpush1.bf16.msra.mxu0 %v1150
        %1174 = vmatprep.subr.bf16.mxu0 0
        %1175 = vmatpush1.bf16.msra.mxu0 %v1151
        %1176 = vmatprep.subr.bf16.mxu0 0
        %1177 = vmatpush1.bf16.msra.mxu0 0
        %1178 = vmatprep.subr.bf16.mxu0 0
        %1179 = vmatpush1.bf16.msra.mxu0 0
        %1180 = vmatprep.subr.bf16.mxu0 0
        %1181 = vmatpush1.bf16.msra.mxu0 0
        %1182 = vmatprep.subr.bf16.mxu0 0
        %1183 = vmatpush1.bf16.msra.mxu0 0
        %1184 = vmatprep.subr.bf16.mxu0 0
        %1185 = vmatpush1.bf16.msra.mxu0 0
        %1186 = vmatprep.subr.bf16.mxu0 0
        %1187 = vmatpush1.bf16.msra.mxu0 0
        %1188 = vmatprep.subr.bf16.mxu0 0
        %1189 = vmatpush1.bf16.msra.mxu0 0
        %1190 = vmatprep.subr.bf16.mxu0 0
        %1191 = vmatpush1.bf16.msra.mxu0 0
        %1192 = vmatprep.mubr.bf16.mxu0 0
        %1193 = vmatmul.mubr.bf16.gmra.mrb[0].mxu0 %v678
        %v1194 = vpop.f32.mrb[0].mxu0
        %v1195 = vadd.f32 0.0, %v1194
        %v1196 = vpop.f32.mrb[0].mxu0
        %v1197 = vpop.f32.mrb[0].mxu0
        %v1198 = vadd.f32 0.0, %v1197
        %v1199 = vpop.f32.mrb[0].mxu0
        %1200 = vmatprep.mubr.bf16.mxu0 0
        %1201 = vmatmul.mubr.bf16.gmra.mrb[0].mxu0 %v679
        %v1202 = vpop.f32.mrb[0].mxu0
        %v1203 = vadd.f32 0.0, %v1202
        %v1204 = vpop.f32.mrb[0].mxu0
        %v1205 = vpop.f32.mrb[0].mxu0
        %v1206 = vadd.f32 0.0, %v1205
        %v1207 = vpop.f32.mrb[0].mxu0
        %1208 = vmatprep.mubr.bf16.mxu0 0
        %1209 = vmatmul.mubr.bf16.gmra.mrb[0].mxu0 %v680
        %v1210 = vpop.f32.mrb[0].mxu0
        %v1211 = vadd.f32 0.0, %v1210
        %v1212 = vpop.f32.mrb[0].mxu0
        %v1213 = vpop.f32.mrb[0].mxu0
        %v1214 = vadd.f32 0.0, %v1213
        %v1215 = vpop.f32.mrb[0].mxu0
        %1216 = vmatprep.mubr.bf16.mxu0 0
        %1217 = vmatmul.mubr.bf16.gmra.mrb[0].mxu0 %v681
        %v1218 = vpop.f32.mrb[0].mxu0
        %v1219 = vadd.f32 0.0, %v1218
        %v1220 = vpop.f32.mrb[0].mxu0
        %v1221 = vpop.f32.mrb[0].mxu0
        %v1222 = vadd.f32 0.0, %v1221
        %v1223 = vpop.f32.mrb[0].mxu0
        %1224 = vdwg.mxu0
        %v1225 = vpack.c.bf16 %v1198, %v1195
        %v1226 = vpack.c.bf16 %v1206, %v1203
        %v1227 = vpack.c.bf16 %v1214, %v1211
        %v1228 = vpack.c.bf16 %v1222, %v1219
        %1229 = vst [vmem:[#allocation3 + $0x60] sm:$0xff] %v1225
        %1230 = vst [vmem:[#allocation3 + $0x68] sm:$0xff] %v1226
        %1231 = vst [vmem:[#allocation3 + $0x70] sm:$0xff] %v1227
        %1232 = vst [vmem:[#allocation3 + $0x78] sm:$0xff] %v1228
        %s1233 = scalar_lea.vmem [#allocation9], 256
        %v1234 = vld [vmem:[%s1233] sm:$0xf]
        %v1235 = vld [vmem:[%s1233 + $0x4] sm:$0xf]
        %v1236 = vld [vmem:[%s1233 + $0x8] sm:$0xf]
        %v1237 = vld [vmem:[%s1233 + $0xc] sm:$0xf]
        %v1238 = vld [vmem:[%s1233 + $0x10] sm:$0xf]
        %v1239 = vld [vmem:[%s1233 + $0x14] sm:$0xf]
        %v1240 = vld [vmem:[%s1233 + $0x18] sm:$0xf]
        %v1241 = vld [vmem:[%s1233 + $0x1c] sm:$0xf]
        %v1242 = vld [vmem:[%s1233 + $0x20] sm:$0xf]
        %v1243 = vld [vmem:[%s1233 + $0x24] sm:$0xf]
        %v1244 = vld [vmem:[%s1233 + $0x28] sm:$0xf]
        %v1245 = vld [vmem:[%s1233 + $0x2c] sm:$0xf]
        %v1246 = vld [vmem:[%s1233 + $0x30] sm:$0xf]
        %v1247 = vld [vmem:[%s1233 + $0x34] sm:$0xf]
        %v1248 = vld [vmem:[%s1233 + $0x38] sm:$0xf]
        %v1249 = vld [vmem:[%s1233 + $0x3c] sm:$0xf]
        %v1266 = vunpack.c.l.b16 %v1234
        %v1267 = vunpack.c.l.b16 %v1235
        %v1268 = vunpack.c.l.b16 %v1236
        %v1269 = vunpack.c.l.b16 %v1237
        %v1270 = vunpack.c.l.b16 %v1238
        %v1271 = vunpack.c.l.b16 %v1239
        %v1272 = vunpack.c.l.b16 %v1240
        %v1273 = vunpack.c.l.b16 %v1241
        %v1274 = vunpack.c.l.b16 %v1242
        %v1275 = vunpack.c.l.b16 %v1243
        %v1276 = vunpack.c.l.b16 %v1244
        %v1277 = vunpack.c.l.b16 %v1245
        %v1278 = vunpack.c.l.b16 %v1246
        %v1279 = vunpack.c.l.b16 %v1247
        %v1280 = vunpack.c.l.b16 %v1248
        %v1281 = vunpack.c.l.b16 %v1249
        %v1282 = vpack.c.b16 %v1267, %v1266
        %v1283 = vpack.c.b16 %v1269, %v1268
        %v1284 = vpack.c.b16 %v1271, %v1270
        %v1285 = vpack.c.b16 %v1273, %v1272
        %v1286 = vpack.c.b16 %v1275, %v1274
        %v1287 = vpack.c.b16 %v1277, %v1276
        %v1288 = vpack.c.b16 %v1279, %v1278
        %v1289 = vpack.c.b16 %v1281, %v1280
        %1298 = vmatprep.subr.bf16.mxu0 0
        %1299 = vmatpush1.bf16.msra.mxu0 %v1282
        %1300 = vmatprep.subr.bf16.mxu0 0
        %1301 = vmatpush1.bf16.msra.mxu0 %v1283
        %1302 = vmatprep.subr.bf16.mxu0 0
        %1303 = vmatpush1.bf16.msra.mxu0 %v1284
        %1304 = vmatprep.subr.bf16.mxu0 0
        %1305 = vmatpush1.bf16.msra.mxu0 %v1285
        %1306 = vmatprep.subr.bf16.mxu0 0
        %1307 = vmatpush1.bf16.msra.mxu0 %v1286
        %1308 = vmatprep.subr.bf16.mxu0 0
        %1309 = vmatpush1.bf16.msra.mxu0 %v1287
        %1310 = vmatprep.subr.bf16.mxu0 0
        %1311 = vmatpush1.bf16.msra.mxu0 %v1288
        %1312 = vmatprep.subr.bf16.mxu0 0
        %1313 = vmatpush1.bf16.msra.mxu0 %v1289
        %1314 = vmatprep.subr.bf16.mxu0 0
        %1315 = vmatpush1.bf16.msra.mxu0 0
        %1316 = vmatprep.subr.bf16.mxu0 0
        %1317 = vmatpush1.bf16.msra.mxu0 0
        %1318 = vmatprep.subr.bf16.mxu0 0
        %1319 = vmatpush1.bf16.msra.mxu0 0
        %1320 = vmatprep.subr.bf16.mxu0 0
        %1321 = vmatpush1.bf16.msra.mxu0 0
        %1322 = vmatprep.subr.bf16.mxu0 0
        %1323 = vmatpush1.bf16.msra.mxu0 0
        %1324 = vmatprep.subr.bf16.mxu0 0
        %1325 = vmatpush1.bf16.msra.mxu0 0
        %1326 = vmatprep.subr.bf16.mxu0 0
        %1327 = vmatpush1.bf16.msra.mxu0 0
        %1328 = vmatprep.subr.bf16.mxu0 0
        %1329 = vmatpush1.bf16.msra.mxu0 0
        %1330 = vmatprep.mubr.bf16.mxu0 0
        %1331 = vmatmul.mubr.bf16.gmra.mrb[0].mxu0 %v678
        %v1332 = vpop.f32.mrb[0].mxu0
        %v1333 = vadd.f32 0.0, %v1332
        %v1334 = vpop.f32.mrb[0].mxu0
        %v1335 = vpop.f32.mrb[0].mxu0
        %v1336 = vadd.f32 0.0, %v1335
        %v1337 = vpop.f32.mrb[0].mxu0
        %1338 = vmatprep.mubr.bf16.mxu0 0
        %1339 = vmatmul.mubr.bf16.gmra.mrb[0].mxu0 %v679
        %v1340 = vpop.f32.mrb[0].mxu0
        %v1341 = vadd.f32 0.0, %v1340
        %v1342 = vpop.f32.mrb[0].mxu0
        %v1343 = vpop.f32.mrb[0].mxu0
        %v1344 = vadd.f32 0.0, %v1343
        %v1345 = vpop.f32.mrb[0].mxu0
        %1346 = vmatprep.mubr.bf16.mxu0 0
        %1347 = vmatmul.mubr.bf16.gmra.mrb[0].mxu0 %v680
        %v1348 = vpop.f32.mrb[0].mxu0
        %v1349 = vadd.f32 0.0, %v1348
        %v1350 = vpop.f32.mrb[0].mxu0
        %v1351 = vpop.f32.mrb[0].mxu0
        %v1352 = vadd.f32 0.0, %v1351
        %v1353 = vpop.f32.mrb[0].mxu0
        %1354 = vmatprep.mubr.bf16.mxu0 0
        %1355 = vmatmul.mubr.bf16.gmra.mrb[0].mxu0 %v681
        %v1356 = vpop.f32.mrb[0].mxu0
        %v1357 = vadd.f32 0.0, %v1356
        %v1358 = vpop.f32.mrb[0].mxu0
        %v1359 = vpop.f32.mrb[0].mxu0
        %v1360 = vadd.f32 0.0, %v1359
        %v1361 = vpop.f32.mrb[0].mxu0
        %1362 = vdwg.mxu0
        %v1363 = vpack.c.bf16 %v1336, %v1333
        %v1364 = vpack.c.bf16 %v1344, %v1341
        %v1365 = vpack.c.bf16 %v1352, %v1349
        %v1366 = vpack.c.bf16 %v1360, %v1357
        %1367 = vst [vmem:[#allocation3 + $0x80] sm:$0xff] %v1363
        %1368 = vst [vmem:[#allocation3 + $0x88] sm:$0xff] %v1364
        %1369 = vst [vmem:[#allocation3 + $0x90] sm:$0xff] %v1365
        %1370 = vst [vmem:[#allocation3 + $0x98] sm:$0xff] %v1366
        %s1371 = scalar_lea.vmem [#allocation9], 320
        %v1372 = vld [vmem:[%s1371] sm:$0xf]
        %v1373 = vld [vmem:[%s1371 + $0x4] sm:$0xf]
        %v1374 = vld [vmem:[%s1371 + $0x8] sm:$0xf]
        %v1375 = vld [vmem:[%s1371 + $0xc] sm:$0xf]
        %v1376 = vld [vmem:[%s1371 + $0x10] sm:$0xf]
        %v1377 = vld [vmem:[%s1371 + $0x14] sm:$0xf]
        %v1378 = vld [vmem:[%s1371 + $0x18] sm:$0xf]
        %v1379 = vld [vmem:[%s1371 + $0x1c] sm:$0xf]
        %v1380 = vld [vmem:[%s1371 + $0x20] sm:$0xf]
        %v1381 = vld [vmem:[%s1371 + $0x24] sm:$0xf]
        %v1382 = vld [vmem:[%s1371 + $0x28] sm:$0xf]
        %v1383 = vld [vmem:[%s1371 + $0x2c] sm:$0xf]
        %v1384 = vld [vmem:[%s1371 + $0x30] sm:$0xf]
        %v1385 = vld [vmem:[%s1371 + $0x34] sm:$0xf]
        %v1386 = vld [vmem:[%s1371 + $0x38] sm:$0xf]
        %v1387 = vld [vmem:[%s1371 + $0x3c] sm:$0xf]
        %v1404 = vunpack.c.l.b16 %v1372
        %v1405 = vunpack.c.l.b16 %v1373
        %v1406 = vunpack.c.l.b16 %v1374
        %v1407 = vunpack.c.l.b16 %v1375
        %v1408 = vunpack.c.l.b16 %v1376
        %v1409 = vunpack.c.l.b16 %v1377
        %v1410 = vunpack.c.l.b16 %v1378
        %v1411 = vunpack.c.l.b16 %v1379
        %v1412 = vunpack.c.l.b16 %v1380
        %v1413 = vunpack.c.l.b16 %v1381
        %v1414 = vunpack.c.l.b16 %v1382
        %v1415 = vunpack.c.l.b16 %v1383
        %v1416 = vunpack.c.l.b16 %v1384
        %v1417 = vunpack.c.l.b16 %v1385
        %v1418 = vunpack.c.l.b16 %v1386
        %v1419 = vunpack.c.l.b16 %v1387
        %v1420 = vpack.c.b16 %v1405, %v1404
        %v1421 = vpack.c.b16 %v1407, %v1406
        %v1422 = vpack.c.b16 %v1409, %v1408
        %v1423 = vpack.c.b16 %v1411, %v1410
        %v1424 = vpack.c.b16 %v1413, %v1412
        %v1425 = vpack.c.b16 %v1415, %v1414
        %v1426 = vpack.c.b16 %v1417, %v1416
        %v1427 = vpack.c.b16 %v1419, %v1418
        %1436 = vmatprep.subr.bf16.mxu0 0
        %1437 = vmatpush1.bf16.msra.mxu0 %v1420
        %1438 = vmatprep.subr.bf16.mxu0 0
        %1439 = vmatpush1.bf16.msra.mxu0 %v1421
        %1440 = vmatprep.subr.bf16.mxu0 0
        %1441 = vmatpush1.bf16.msra.mxu0 %v1422
        %1442 = vmatprep.subr.bf16.mxu0 0
        %1443 = vmatpush1.bf16.msra.mxu0 %v1423
        %1444 = vmatprep.subr.bf16.mxu0 0
        %1445 = vmatpush1.bf16.msra.mxu0 %v1424
        %1446 = vmatprep.subr.bf16.mxu0 0
        %1447 = vmatpush1.bf16.msra.mxu0 %v1425
        %1448 = vmatprep.subr.bf16.mxu0 0
        %1449 = vmatpush1.bf16.msra.mxu0 %v1426
        %1450 = vmatprep.subr.bf16.mxu0 0
        %1451 = vmatpush1.bf16.msra.mxu0 %v1427
        %1452 = vmatprep.subr.bf16.mxu0 0
        %1453 = vmatpush1.bf16.msra.mxu0 0
        %1454 = vmatprep.subr.bf16.mxu0 0
        %1455 = vmatpush1.bf16.msra.mxu0 0
        %1456 = vmatprep.subr.bf16.mxu0 0
        %1457 = vmatpush1.bf16.msra.mxu0 0
        %1458 = vmatprep.subr.bf16.mxu0 0
        %1459 = vmatpush1.bf16.msra.mxu0 0
        %1460 = vmatprep.subr.bf16.mxu0 0
        %1461 = vmatpush1.bf16.msra.mxu0 0
        %1462 = vmatprep.subr.bf16.mxu0 0
        %1463 = vmatpush1.bf16.msra.mxu0 0
        %1464 = vmatprep.subr.bf16.mxu0 0
        %1465 = vmatpush1.bf16.msra.mxu0 0
        %1466 = vmatprep.subr.bf16.mxu0 0
        %1467 = vmatpush1.bf16.msra.mxu0 0
        %1468 = vmatprep.mubr.bf16.mxu0 0
        %1469 = vmatmul.mubr.bf16.gmra.mrb[0].mxu0 %v678
        %v1470 = vpop.f32.mrb[0].mxu0
        %v1471 = vadd.f32 0.0, %v1470
        %v1472 = vpop.f32.mrb[0].mxu0
        %v1473 = vpop.f32.mrb[0].mxu0
        %v1474 = vadd.f32 0.0, %v1473
        %v1475 = vpop.f32.mrb[0].mxu0
        %1476 = vmatprep.mubr.bf16.mxu0 0
        %1477 = vmatmul.mubr.bf16.gmra.mrb[0].mxu0 %v679
        %v1478 = vpop.f32.mrb[0].mxu0
        %v1479 = vadd.f32 0.0, %v1478
        %v1480 = vpop.f32.mrb[0].mxu0
        %v1481 = vpop.f32.mrb[0].mxu0
        %v1482 = vadd.f32 0.0, %v1481
        %v1483 = vpop.f32.mrb[0].mxu0
        %1484 = vmatprep.mubr.bf16.mxu0 0
        %1485 = vmatmul.mubr.bf16.gmra.mrb[0].mxu0 %v680
        %v1486 = vpop.f32.mrb[0].mxu0
        %v1487 = vadd.f32 0.0, %v1486
        %v1488 = vpop.f32.mrb[0].mxu0
        %v1489 = vpop.f32.mrb[0].mxu0
        %v1490 = vadd.f32 0.0, %v1489
        %v1491 = vpop.f32.mrb[0].mxu0
        %1492 = vmatprep.mubr.bf16.mxu0 0
        %1493 = vmatmul.mubr.bf16.gmra.mrb[0].mxu0 %v681
        %v1494 = vpop.f32.mrb[0].mxu0
        %v1495 = vadd.f32 0.0, %v1494
        %v1496 = vpop.f32.mrb[0].mxu0
        %v1497 = vpop.f32.mrb[0].mxu0
        %v1498 = vadd.f32 0.0, %v1497
        %v1499 = vpop.f32.mrb[0].mxu0
        %1500 = vdwg.mxu0
        %v1501 = vpack.c.bf16 %v1474, %v1471
        %v1502 = vpack.c.bf16 %v1482, %v1479
        %v1503 = vpack.c.bf16 %v1490, %v1487
        %v1504 = vpack.c.bf16 %v1498, %v1495
        %1505 = vst [vmem:[#allocation3 + $0xa0] sm:$0xff] %v1501
        %1506 = vst [vmem:[#allocation3 + $0xa8] sm:$0xff] %v1502
        %1507 = vst [vmem:[#allocation3 + $0xb0] sm:$0xff] %v1503
        %1508 = vst [vmem:[#allocation3 + $0xb8] sm:$0xff] %v1504
        %s1509 = scalar_lea.vmem [#allocation9], 384
        %v1510 = vld [vmem:[%s1509] sm:$0xf]
        %v1511 = vld [vmem:[%s1509 + $0x4] sm:$0xf]
        %v1512 = vld [vmem:[%s1509 + $0x8] sm:$0xf]
        %v1513 = vld [vmem:[%s1509 + $0xc] sm:$0xf]
        %v1514 = vld [vmem:[%s1509 + $0x10] sm:$0xf]
        %v1515 = vld [vmem:[%s1509 + $0x14] sm:$0xf]
        %v1516 = vld [vmem:[%s1509 + $0x18] sm:$0xf]
        %v1517 = vld [vmem:[%s1509 + $0x1c] sm:$0xf]
        %v1518 = vld [vmem:[%s1509 + $0x20] sm:$0xf]
        %v1519 = vld [vmem:[%s1509 + $0x24] sm:$0xf]
        %v1520 = vld [vmem:[%s1509 + $0x28] sm:$0xf]
        %v1521 = vld [vmem:[%s1509 + $0x2c] sm:$0xf]
        %v1522 = vld [vmem:[%s1509 + $0x30] sm:$0xf]
        %v1523 = vld [vmem:[%s1509 + $0x34] sm:$0xf]
        %v1524 = vld [vmem:[%s1509 + $0x38] sm:$0xf]
        %v1525 = vld [vmem:[%s1509 + $0x3c] sm:$0xf]
        %v1542 = vunpack.c.l.b16 %v1510
        %v1543 = vunpack.c.l.b16 %v1511
        %v1544 = vunpack.c.l.b16 %v1512
        %v1545 = vunpack.c.l.b16 %v1513
        %v1546 = vunpack.c.l.b16 %v1514
        %v1547 = vunpack.c.l.b16 %v1515
        %v1548 = vunpack.c.l.b16 %v1516
        %v1549 = vunpack.c.l.b16 %v1517
        %v1550 = vunpack.c.l.b16 %v1518
        %v1551 = vunpack.c.l.b16 %v1519
        %v1552 = vunpack.c.l.b16 %v1520
        %v1553 = vunpack.c.l.b16 %v1521
        %v1554 = vunpack.c.l.b16 %v1522
        %v1555 = vunpack.c.l.b16 %v1523
        %v1556 = vunpack.c.l.b16 %v1524
        %v1557 = vunpack.c.l.b16 %v1525
        %v1558 = vpack.c.b16 %v1543, %v1542
        %v1559 = vpack.c.b16 %v1545, %v1544
        %v1560 = vpack.c.b16 %v1547, %v1546
        %v1561 = vpack.c.b16 %v1549, %v1548
        %v1562 = vpack.c.b16 %v1551, %v1550
        %v1563 = vpack.c.b16 %v1553, %v1552
        %v1564 = vpack.c.b16 %v1555, %v1554
        %v1565 = vpack.c.b16 %v1557, %v1556
        %1574 = vmatprep.subr.bf16.mxu0 0
        %1575 = vmatpush1.bf16.msra.mxu0 %v1558
        %1576 = vmatprep.subr.bf16.mxu0 0
        %1577 = vmatpush1.bf16.msra.mxu0 %v1559
        %1578 = vmatprep.subr.bf16.mxu0 0
        %1579 = vmatpush1.bf16.msra.mxu0 %v1560
        %1580 = vmatprep.subr.bf16.mxu0 0
        %1581 = vmatpush1.bf16.msra.mxu0 %v1561
        %1582 = vmatprep.subr.bf16.mxu0 0
        %1583 = vmatpush1.bf16.msra.mxu0 %v1562
        %1584 = vmatprep.subr.bf16.mxu0 0
        %1585 = vmatpush1.bf16.msra.mxu0 %v1563
        %1586 = vmatprep.subr.bf16.mxu0 0
        %1587 = vmatpush1.bf16.msra.mxu0 %v1564
        %1588 = vmatprep.subr.bf16.mxu0 0
        %1589 = vmatpush1.bf16.msra.mxu0 %v1565
        %1590 = vmatprep.subr.bf16.mxu0 0
        %1591 = vmatpush1.bf16.msra.mxu0 0
        %1592 = vmatprep.subr.bf16.mxu0 0
        %1593 = vmatpush1.bf16.msra.mxu0 0
        %1594 = vmatprep.subr.bf16.mxu0 0
        %1595 = vmatpush1.bf16.msra.mxu0 0
        %1596 = vmatprep.subr.bf16.mxu0 0
        %1597 = vmatpush1.bf16.msra.mxu0 0
        %1598 = vmatprep.subr.bf16.mxu0 0
        %1599 = vmatpush1.bf16.msra.mxu0 0
        %1600 = vmatprep.subr.bf16.mxu0 0
        %1601 = vmatpush1.bf16.msra.mxu0 0
        %1602 = vmatprep.subr.bf16.mxu0 0
        %1603 = vmatpush1.bf16.msra.mxu0 0
        %1604 = vmatprep.subr.bf16.mxu0 0
        %1605 = vmatpush1.bf16.msra.mxu0 0
        %1606 = vmatprep.mubr.bf16.mxu0 0
        %1607 = vmatmul.mubr.bf16.gmra.mrb[0].mxu0 %v678
        %v1608 = vpop.f32.mrb[0].mxu0
        %v1609 = vadd.f32 0.0, %v1608
        %v1610 = vpop.f32.mrb[0].mxu0
        %v1611 = vpop.f32.mrb[0].mxu0
        %v1612 = vadd.f32 0.0, %v1611
        %v1613 = vpop.f32.mrb[0].mxu0
        %1614 = vmatprep.mubr.bf16.mxu0 0
        %1615 = vmatmul.mubr.bf16.gmra.mrb[0].mxu0 %v679
        %v1616 = vpop.f32.mrb[0].mxu0
        %v1617 = vadd.f32 0.0, %v1616
        %v1618 = vpop.f32.mrb[0].mxu0
        %v1619 = vpop.f32.mrb[0].mxu0
        %v1620 = vadd.f32 0.0, %v1619
        %v1621 = vpop.f32.mrb[0].mxu0
        %1622 = vmatprep.mubr.bf16.mxu0 0
        %1623 = vmatmul.mubr.bf16.gmra.mrb[0].mxu0 %v680
        %v1624 = vpop.f32.mrb[0].mxu0
        %v1625 = vadd.f32 0.0, %v1624
        %v1626 = vpop.f32.mrb[0].mxu0
        %v1627 = vpop.f32.mrb[0].mxu0
        %v1628 = vadd.f32 0.0, %v1627
        %v1629 = vpop.f32.mrb[0].mxu0
        %1630 = vmatprep.mubr.bf16.mxu0 0
        %1631 = vmatmul.mubr.bf16.gmra.mrb[0].mxu0 %v681
        %v1632 = vpop.f32.mrb[0].mxu0
        %v1633 = vadd.f32 0.0, %v1632
        %v1634 = vpop.f32.mrb[0].mxu0
        %v1635 = vpop.f32.mrb[0].mxu0
        %v1636 = vadd.f32 0.0, %v1635
        %v1637 = vpop.f32.mrb[0].mxu0
        %1638 = vdwg.mxu0
        %v1639 = vpack.c.bf16 %v1612, %v1609
        %v1640 = vpack.c.bf16 %v1620, %v1617
        %v1641 = vpack.c.bf16 %v1628, %v1625
        %v1642 = vpack.c.bf16 %v1636, %v1633
        %1643 = vst [vmem:[#allocation3 + $0xc0] sm:$0xff] %v1639
        %1644 = vst [vmem:[#allocation3 + $0xc8] sm:$0xff] %v1640
        %1645 = vst [vmem:[#allocation3 + $0xd0] sm:$0xff] %v1641
        %1646 = vst [vmem:[#allocation3 + $0xd8] sm:$0xff] %v1642
        %s1647 = scalar_lea.vmem [#allocation9], 448
        %v1648 = vld [vmem:[%s1647] sm:$0xf]
        %v1649 = vld [vmem:[%s1647 + $0x4] sm:$0xf]
        %v1650 = vld [vmem:[%s1647 + $0x8] sm:$0xf]
        %v1651 = vld [vmem:[%s1647 + $0xc] sm:$0xf]
        %v1652 = vld [vmem:[%s1647 + $0x10] sm:$0xf]
        %v1653 = vld [vmem:[%s1647 + $0x14] sm:$0xf]
        %v1654 = vld [vmem:[%s1647 + $0x18] sm:$0xf]
        %v1655 = vld [vmem:[%s1647 + $0x1c] sm:$0xf]
        %v1656 = vld [vmem:[%s1647 + $0x20] sm:$0xf]
        %v1657 = vld [vmem:[%s1647 + $0x24] sm:$0xf]
        %v1658 = vld [vmem:[%s1647 + $0x28] sm:$0xf]
        %v1659 = vld [vmem:[%s1647 + $0x2c] sm:$0xf]
        %v1660 = vld [vmem:[%s1647 + $0x30] sm:$0xf]
        %v1661 = vld [vmem:[%s1647 + $0x34] sm:$0xf]
        %v1662 = vld [vmem:[%s1647 + $0x38] sm:$0xf]
        %v1663 = vld [vmem:[%s1647 + $0x3c] sm:$0xf]
        %v1680 = vunpack.c.l.b16 %v1648
        %v1681 = vunpack.c.l.b16 %v1649
        %v1682 = vunpack.c.l.b16 %v1650
        %v1683 = vunpack.c.l.b16 %v1651
        %v1684 = vunpack.c.l.b16 %v1652
        %v1685 = vunpack.c.l.b16 %v1653
        %v1686 = vunpack.c.l.b16 %v1654
        %v1687 = vunpack.c.l.b16 %v1655
        %v1688 = vunpack.c.l.b16 %v1656
        %v1689 = vunpack.c.l.b16 %v1657
        %v1690 = vunpack.c.l.b16 %v1658
        %v1691 = vunpack.c.l.b16 %v1659
        %v1692 = vunpack.c.l.b16 %v1660
        %v1693 = vunpack.c.l.b16 %v1661
        %v1694 = vunpack.c.l.b16 %v1662
        %v1695 = vunpack.c.l.b16 %v1663
        %v1696 = vpack.c.b16 %v1681, %v1680
        %v1697 = vpack.c.b16 %v1683, %v1682
        %v1698 = vpack.c.b16 %v1685, %v1684
        %v1699 = vpack.c.b16 %v1687, %v1686
        %v1700 = vpack.c.b16 %v1689, %v1688
        %v1701 = vpack.c.b16 %v1691, %v1690
        %v1702 = vpack.c.b16 %v1693, %v1692
        %v1703 = vpack.c.b16 %v1695, %v1694
        %1712 = vmatprep.subr.bf16.mxu0 0
        %1713 = vmatpush1.bf16.msra.mxu0 %v1696
        %1714 = vmatprep.subr.bf16.mxu0 0
        %1715 = vmatpush1.bf16.msra.mxu0 %v1697
        %1716 = vmatprep.subr.bf16.mxu0 0
        %1717 = vmatpush1.bf16.msra.mxu0 %v1698
        %1718 = vmatprep.subr.bf16.mxu0 0
        %1719 = vmatpush1.bf16.msra.mxu0 %v1699
        %1720 = vmatprep.subr.bf16.mxu0 0
        %1721 = vmatpush1.bf16.msra.mxu0 %v1700
        %1722 = vmatprep.subr.bf16.mxu0 0
        %1723 = vmatpush1.bf16.msra.mxu0 %v1701
        %1724 = vmatprep.subr.bf16.mxu0 0
        %1725 = vmatpush1.bf16.msra.mxu0 %v1702
        %1726 = vmatprep.subr.bf16.mxu0 0
        %1727 = vmatpush1.bf16.msra.mxu0 %v1703
        %1728 = vmatprep.subr.bf16.mxu0 0
        %1729 = vmatpush1.bf16.msra.mxu0 0
        %1730 = vmatprep.subr.bf16.mxu0 0
        %1731 = vmatpush1.bf16.msra.mxu0 0
        %1732 = vmatprep.subr.bf16.mxu0 0
        %1733 = vmatpush1.bf16.msra.mxu0 0
        %1734 = vmatprep.subr.bf16.mxu0 0
        %1735 = vmatpush1.bf16.msra.mxu0 0
        %1736 = vmatprep.subr.bf16.mxu0 0
        %1737 = vmatpush1.bf16.msra.mxu0 0
        %1738 = vmatprep.subr.bf16.mxu0 0
        %1739 = vmatpush1.bf16.msra.mxu0 0
        %1740 = vmatprep.subr.bf16.mxu0 0
        %1741 = vmatpush1.bf16.msra.mxu0 0
        %1742 = vmatprep.subr.bf16.mxu0 0
        %1743 = vmatpush1.bf16.msra.mxu0 0
        %1744 = vmatprep.mubr.bf16.mxu0 0
        %1745 = vmatmul.mubr.bf16.gmra.mrb[0].mxu0 %v678
        %v1746 = vpop.f32.mrb[0].mxu0
        %v1747 = vadd.f32 0.0, %v1746
        %v1748 = vpop.f32.mrb[0].mxu0
        %v1749 = vpop.f32.mrb[0].mxu0
        %v1750 = vadd.f32 0.0, %v1749
        %v1751 = vpop.f32.mrb[0].mxu0
        %1752 = vmatprep.mubr.bf16.mxu0 0
        %1753 = vmatmul.mubr.bf16.gmra.mrb[0].mxu0 %v679
        %v1754 = vpop.f32.mrb[0].mxu0
        %v1755 = vadd.f32 0.0, %v1754
        %v1756 = vpop.f32.mrb[0].mxu0
        %v1757 = vpop.f32.mrb[0].mxu0
        %v1758 = vadd.f32 0.0, %v1757
        %v1759 = vpop.f32.mrb[0].mxu0
        %1760 = vmatprep.mubr.bf16.mxu0 0
        %1761 = vmatmul.mubr.bf16.gmra.mrb[0].mxu0 %v680
        %v1762 = vpop.f32.mrb[0].mxu0
        %v1763 = vadd.f32 0.0, %v1762
        %v1764 = vpop.f32.mrb[0].mxu0
        %v1765 = vpop.f32.mrb[0].mxu0
        %v1766 = vadd.f32 0.0, %v1765
        %v1767 = vpop.f32.mrb[0].mxu0
        %1768 = vmatprep.mubr.bf16.mxu0 0
        %1769 = vmatmul.mubr.bf16.gmra.mrb[0].mxu0 %v681
        %v1770 = vpop.f32.mrb[0].mxu0
        %v1771 = vadd.f32 0.0, %v1770
        %v1772 = vpop.f32.mrb[0].mxu0
        %v1773 = vpop.f32.mrb[0].mxu0
        %v1774 = vadd.f32 0.0, %v1773
        %v1775 = vpop.f32.mrb[0].mxu0
        %1776 = vdwg.mxu0
        %v1777 = vpack.c.bf16 %v1750, %v1747
        %v1778 = vpack.c.bf16 %v1758, %v1755
        %v1779 = vpack.c.bf16 %v1766, %v1763
        %v1780 = vpack.c.bf16 %v1774, %v1771
        %1781 = vst [vmem:[#allocation3 + $0xe0] sm:$0xff] %v1777
        %1782 = vst [vmem:[#allocation3 + $0xe8] sm:$0xff] %v1778
        %1783 = vst [vmem:[#allocation3 + $0xf0] sm:$0xff] %v1779
        %1784 = vst [vmem:[#allocation3 + $0xf8] sm:$0xff] %v1780
        %s1785 = scalar_lea.vmem [#allocation9], 512
        %v1786 = vld [vmem:[%s1785] sm:$0xf]
        %v1787 = vld [vmem:[%s1785 + $0x4] sm:$0xf]
        %v1788 = vld [vmem:[%s1785 + $0x8] sm:$0xf]
        %v1789 = vld [vmem:[%s1785 + $0xc] sm:$0xf]
        %v1790 = vld [vmem:[%s1785 + $0x10] sm:$0xf]
        %v1791 = vld [vmem:[%s1785 + $0x14] sm:$0xf]
        %v1792 = vld [vmem:[%s1785 + $0x18] sm:$0xf]
        %v1793 = vld [vmem:[%s1785 + $0x1c] sm:$0xf]
        %v1794 = vld [vmem:[%s1785 + $0x20] sm:$0xf]
        %v1795 = vld [vmem:[%s1785 + $0x24] sm:$0xf]
        %v1796 = vld [vmem:[%s1785 + $0x28] sm:$0xf]
        %v1797 = vld [vmem:[%s1785 + $0x2c] sm:$0xf]
        %v1798 = vld [vmem:[%s1785 + $0x30] sm:$0xf]
        %v1799 = vld [vmem:[%s1785 + $0x34] sm:$0xf]
        %v1800 = vld [vmem:[%s1785 + $0x38] sm:$0xf]
        %v1801 = vld [vmem:[%s1785 + $0x3c] sm:$0xf]
        %v1818 = vunpack.c.l.b16 %v1786
        %v1819 = vunpack.c.l.b16 %v1787
        %v1820 = vunpack.c.l.b16 %v1788
        %v1821 = vunpack.c.l.b16 %v1789
        %v1822 = vunpack.c.l.b16 %v1790
        %v1823 = vunpack.c.l.b16 %v1791
        %v1824 = vunpack.c.l.b16 %v1792
        %v1825 = vunpack.c.l.b16 %v1793
        %v1826 = vunpack.c.l.b16 %v1794
        %v1827 = vunpack.c.l.b16 %v1795
        %v1828 = vunpack.c.l.b16 %v1796
        %v1829 = vunpack.c.l.b16 %v1797
        %v1830 = vunpack.c.l.b16 %v1798
        %v1831 = vunpack.c.l.b16 %v1799
        %v1832 = vunpack.c.l.b16 %v1800
        %v1833 = vunpack.c.l.b16 %v1801
        %v1834 = vpack.c.b16 %v1819, %v1818
        %v1835 = vpack.c.b16 %v1821, %v1820
        %v1836 = vpack.c.b16 %v1823, %v1822
        %v1837 = vpack.c.b16 %v1825, %v1824
        %v1838 = vpack.c.b16 %v1827, %v1826
        %v1839 = vpack.c.b16 %v1829, %v1828
        %v1840 = vpack.c.b16 %v1831, %v1830
        %v1841 = vpack.c.b16 %v1833, %v1832
        %1850 = vmatprep.subr.bf16.mxu0 0
        %1851 = vmatpush1.bf16.msra.mxu0 %v1834
        %1852 = vmatprep.subr.bf16.mxu0 0
        %1853 = vmatpush1.bf16.msra.mxu0 %v1835
        %1854 = vmatprep.subr.bf16.mxu0 0
        %1855 = vmatpush1.bf16.msra.mxu0 %v1836
        %1856 = vmatprep.subr.bf16.mxu0 0
        %1857 = vmatpush1.bf16.msra.mxu0 %v1837
        %1858 = vmatprep.subr.bf16.mxu0 0
        %1859 = vmatpush1.bf16.msra.mxu0 %v1838
        %1860 = vmatprep.subr.bf16.mxu0 0
        %1861 = vmatpush1.bf16.msra.mxu0 %v1839
        %1862 = vmatprep.subr.bf16.mxu0 0
        %1863 = vmatpush1.bf16.msra.mxu0 %v1840
        %1864 = vmatprep.subr.bf16.mxu0 0
        %1865 = vmatpush1.bf16.msra.mxu0 %v1841
        %1866 = vmatprep.subr.bf16.mxu0 0
        %1867 = vmatpush1.bf16.msra.mxu0 0
        %1868 = vmatprep.subr.bf16.mxu0 0
        %1869 = vmatpush1.bf16.msra.mxu0 0
        %1870 = vmatprep.subr.bf16.mxu0 0
        %1871 = vmatpush1.bf16.msra.mxu0 0
        %1872 = vmatprep.subr.bf16.mxu0 0
        %1873 = vmatpush1.bf16.msra.mxu0 0
        %1874 = vmatprep.subr.bf16.mxu0 0
        %1875 = vmatpush1.bf16.msra.mxu0 0
        %1876 = vmatprep.subr.bf16.mxu0 0
        %1877 = vmatpush1.bf16.msra.mxu0 0
        %1878 = vmatprep.subr.bf16.mxu0 0
        %1879 = vmatpush1.bf16.msra.mxu0 0
        %1880 = vmatprep.subr.bf16.mxu0 0
        %1881 = vmatpush1.bf16.msra.mxu0 0
        %1882 = vmatprep.mubr.bf16.mxu0 0
        %1883 = vmatmul.mubr.bf16.gmra.mrb[0].mxu0 %v678
        %v1884 = vpop.f32.mrb[0].mxu0
        %v1885 = vadd.f32 0.0, %v1884
        %v1886 = vpop.f32.mrb[0].mxu0
        %v1887 = vpop.f32.mrb[0].mxu0
        %v1888 = vadd.f32 0.0, %v1887
        %v1889 = vpop.f32.mrb[0].mxu0
        %1890 = vmatprep.mubr.bf16.mxu0 0
        %1891 = vmatmul.mubr.bf16.gmra.mrb[0].mxu0 %v679
        %v1892 = vpop.f32.mrb[0].mxu0
        %v1893 = vadd.f32 0.0, %v1892
        %v1894 = vpop.f32.mrb[0].mxu0
        %v1895 = vpop.f32.mrb[0].mxu0
        %v1896 = vadd.f32 0.0, %v1895
        %v1897 = vpop.f32.mrb[0].mxu0
        %1898 = vmatprep.mubr.bf16.mxu0 0
        %1899 = vmatmul.mubr.bf16.gmra.mrb[0].mxu0 %v680
        %v1900 = vpop.f32.mrb[0].mxu0
        %v1901 = vadd.f32 0.0, %v1900
        %v1902 = vpop.f32.mrb[0].mxu0
        %v1903 = vpop.f32.mrb[0].mxu0
        %v1904 = vadd.f32 0.0, %v1903
        %v1905 = vpop.f32.mrb[0].mxu0
        %1906 = vmatprep.mubr.bf16.mxu0 0
        %1907 = vmatmul.mubr.bf16.gmra.mrb[0].mxu0 %v681
        %v1908 = vpop.f32.mrb[0].mxu0
        %v1909 = vadd.f32 0.0, %v1908
        %v1910 = vpop.f32.mrb[0].mxu0
        %v1911 = vpop.f32.mrb[0].mxu0
        %v1912 = vadd.f32 0.0, %v1911
        %v1913 = vpop.f32.mrb[0].mxu0
        %1914 = vdwg.mxu0
        %v1915 = vpack.c.bf16 %v1888, %v1885
        %v1916 = vpack.c.bf16 %v1896, %v1893
        %v1917 = vpack.c.bf16 %v1904, %v1901
        %v1918 = vpack.c.bf16 %v1912, %v1909
        %1919 = vst [vmem:[#allocation3 + $0x100] sm:$0xff] %v1915
        %1920 = vst [vmem:[#allocation3 + $0x108] sm:$0xff] %v1916
        %1921 = vst [vmem:[#allocation3 + $0x110] sm:$0xff] %v1917
        %1922 = vst [vmem:[#allocation3 + $0x118] sm:$0xff] %v1918
        %s1923 = scalar_lea.vmem [#allocation9], 576
        %v1924 = vld [vmem:[%s1923] sm:$0xf]
        %v1925 = vld [vmem:[%s1923 + $0x4] sm:$0xf]
        %v1926 = vld [vmem:[%s1923 + $0x8] sm:$0xf]
        %v1927 = vld [vmem:[%s1923 + $0xc] sm:$0xf]
        %v1928 = vld [vmem:[%s1923 + $0x10] sm:$0xf]
        %v1929 = vld [vmem:[%s1923 + $0x14] sm:$0xf]
        %v1930 = vld [vmem:[%s1923 + $0x18] sm:$0xf]
        %v1931 = vld [vmem:[%s1923 + $0x1c] sm:$0xf]
        %v1932 = vld [vmem:[%s1923 + $0x20] sm:$0xf]
        %v1933 = vld [vmem:[%s1923 + $0x24] sm:$0xf]
        %v1934 = vld [vmem:[%s1923 + $0x28] sm:$0xf]
        %v1935 = vld [vmem:[%s1923 + $0x2c] sm:$0xf]
        %v1936 = vld [vmem:[%s1923 + $0x30] sm:$0xf]
        %v1937 = vld [vmem:[%s1923 + $0x34] sm:$0xf]
        %v1938 = vld [vmem:[%s1923 + $0x38] sm:$0xf]
        %v1939 = vld [vmem:[%s1923 + $0x3c] sm:$0xf]
        %v1956 = vunpack.c.l.b16 %v1924
        %v1957 = vunpack.c.l.b16 %v1925
        %v1958 = vunpack.c.l.b16 %v1926
        %v1959 = vunpack.c.l.b16 %v1927
        %v1960 = vunpack.c.l.b16 %v1928
        %v1961 = vunpack.c.l.b16 %v1929
        %v1962 = vunpack.c.l.b16 %v1930
        %v1963 = vunpack.c.l.b16 %v1931
        %v1964 = vunpack.c.l.b16 %v1932
        %v1965 = vunpack.c.l.b16 %v1933
        %v1966 = vunpack.c.l.b16 %v1934
        %v1967 = vunpack.c.l.b16 %v1935
        %v1968 = vunpack.c.l.b16 %v1936
        %v1969 = vunpack.c.l.b16 %v1937
        %v1970 = vunpack.c.l.b16 %v1938
        %v1971 = vunpack.c.l.b16 %v1939
        %v1972 = vpack.c.b16 %v1957, %v1956
        %v1973 = vpack.c.b16 %v1959, %v1958
        %v1974 = vpack.c.b16 %v1961, %v1960
        %v1975 = vpack.c.b16 %v1963, %v1962
        %v1976 = vpack.c.b16 %v1965, %v1964
        %v1977 = vpack.c.b16 %v1967, %v1966
        %v1978 = vpack.c.b16 %v1969, %v1968
        %v1979 = vpack.c.b16 %v1971, %v1970
        %1988 = vmatprep.subr.bf16.mxu0 0
        %1989 = vmatpush1.bf16.msra.mxu0 %v1972
        %1990 = vmatprep.subr.bf16.mxu0 0
        %1991 = vmatpush1.bf16.msra.mxu0 %v1973
        %1992 = vmatprep.subr.bf16.mxu0 0
        %1993 = vmatpush1.bf16.msra.mxu0 %v1974
        %1994 = vmatprep.subr.bf16.mxu0 0
        %1995 = vmatpush1.bf16.msra.mxu0 %v1975
        %1996 = vmatprep.subr.bf16.mxu0 0
        %1997 = vmatpush1.bf16.msra.mxu0 %v1976
        %1998 = vmatprep.subr.bf16.mxu0 0
        %1999 = vmatpush1.bf16.msra.mxu0 %v1977
        %2000 = vmatprep.subr.bf16.mxu0 0
        %2001 = vmatpush1.bf16.msra.mxu0 %v1978
        %2002 = vmatprep.subr.bf16.mxu0 0
        %2003 = vmatpush1.bf16.msra.mxu0 %v1979
        %2004 = vmatprep.subr.bf16.mxu0 0
        %2005 = vmatpush1.bf16.msra.mxu0 0
        %2006 = vmatprep.subr.bf16.mxu0 0
        %2007 = vmatpush1.bf16.msra.mxu0 0
        %2008 = vmatprep.subr.bf16.mxu0 0
        %2009 = vmatpush1.bf16.msra.mxu0 0
        %2010 = vmatprep.subr.bf16.mxu0 0
        %2011 = vmatpush1.bf16.msra.mxu0 0
        %2012 = vmatprep.subr.bf16.mxu0 0
        %2013 = vmatpush1.bf16.msra.mxu0 0
        %2014 = vmatprep.subr.bf16.mxu0 0
        %2015 = vmatpush1.bf16.msra.mxu0 0
        %2016 = vmatprep.subr.bf16.mxu0 0
        %2017 = vmatpush1.bf16.msra.mxu0 0
        %2018 = vmatprep.subr.bf16.mxu0 0
        %2019 = vmatpush1.bf16.msra.mxu0 0
        %2020 = vmatprep.mubr.bf16.mxu0 0
        %2021 = vmatmul.mubr.bf16.gmra.mrb[0].mxu0 %v678
        %v2022 = vpop.f32.mrb[0].mxu0
        %v2023 = vadd.f32 0.0, %v2022
        %v2024 = vpop.f32.mrb[0].mxu0
        %v2025 = vpop.f32.mrb[0].mxu0
        %v2026 = vadd.f32 0.0, %v2025
        %v2027 = vpop.f32.mrb[0].mxu0
        %2028 = vmatprep.mubr.bf16.mxu0 0
        %2029 = vmatmul.mubr.bf16.gmra.mrb[0].mxu0 %v679
        %v2030 = vpop.f32.mrb[0].mxu0
        %v2031 = vadd.f32 0.0, %v2030
        %v2032 = vpop.f32.mrb[0].mxu0
        %v2033 = vpop.f32.mrb[0].mxu0
        %v2034 = vadd.f32 0.0, %v2033
        %v2035 = vpop.f32.mrb[0].mxu0
        %2036 = vmatprep.mubr.bf16.mxu0 0
        %2037 = vmatmul.mubr.bf16.gmra.mrb[0].mxu0 %v680
        %v2038 = vpop.f32.mrb[0].mxu0
        %v2039 = vadd.f32 0.0, %v2038
        %v2040 = vpop.f32.mrb[0].mxu0
        %v2041 = vpop.f32.mrb[0].mxu0
        %v2042 = vadd.f32 0.0, %v2041
        %v2043 = vpop.f32.mrb[0].mxu0
        %2044 = vmatprep.mubr.bf16.mxu0 0
        %2045 = vmatmul.mubr.bf16.gmra.mrb[0].mxu0 %v681
        %v2046 = vpop.f32.mrb[0].mxu0
        %v2047 = vadd.f32 0.0, %v2046
        %v2048 = vpop.f32.mrb[0].mxu0
        %v2049 = vpop.f32.mrb[0].mxu0
        %v2050 = vadd.f32 0.0, %v2049
        %v2051 = vpop.f32.mrb[0].mxu0
        %2052 = vdwg.mxu0
        %v2053 = vpack.c.bf16 %v2026, %v2023
        %v2054 = vpack.c.bf16 %v2034, %v2031
        %v2055 = vpack.c.bf16 %v2042, %v2039
        %v2056 = vpack.c.bf16 %v2050, %v2047
        %2057 = vst [vmem:[#allocation3 + $0x120] sm:$0xff] %v2053
        %2058 = vst [vmem:[#allocation3 + $0x128] sm:$0xff] %v2054
        %2059 = vst [vmem:[#allocation3 + $0x130] sm:$0xff] %v2055
        %2060 = vst [vmem:[#allocation3 + $0x138] sm:$0xff] %v2056
        %v2061 = vld [vmem:[%s363] sm:$0xff]
        %v2062 = vld [vmem:[%s363 + $0x8] sm:$0xff]
        %v2063 = vld [vmem:[%s363 + $0x10] sm:$0xf]
        %v2064 = vld [vmem:[%s363 + $0x14] sm:$0xff]
        %v2065 = vld [vmem:[%s363 + $0x1c] sm:$0xff]
        %v2066 = vld [vmem:[%s363 + $0x24] sm:$0xf]
        %v2067 = vld [vmem:[%s363 + $0x28] sm:$0xff]
        %v2068 = vld [vmem:[%s363 + $0x30] sm:$0xff]
        %v2069 = vld [vmem:[%s363 + $0x38] sm:$0xf]
        %v2070 = vld [vmem:[%s363 + $0x3c] sm:$0xff]
        %v2071 = vld [vmem:[%s363 + $0x44] sm:$0xff]
        %v2072 = vld [vmem:[%s363 + $0x4c] sm:$0xf]
        %v2073 = vld [vmem:[%s363 + $0x50] sm:$0xff]
        %v2074 = vld [vmem:[%s363 + $0x58] sm:$0xff]
        %v2075 = vld [vmem:[%s363 + $0x60] sm:$0xf]
        %v2076 = vld [vmem:[%s363 + $0x64] sm:$0xff]
        %v2077 = vld [vmem:[%s363 + $0x6c] sm:$0xff]
        %v2078 = vld [vmem:[%s363 + $0x74] sm:$0xf]
        %v2079 = vld [vmem:[%s363 + $0x78] sm:$0xff]
        %v2080 = vld [vmem:[%s363 + $0x80] sm:$0xff]
        %v2081 = vld [vmem:[%s363 + $0x88] sm:$0xf]
        %v2082 = vld [vmem:[%s363 + $0x8c] sm:$0xff]
        %v2083 = vld [vmem:[%s363 + $0x94] sm:$0xff]
        %v2084 = vld [vmem:[%s363 + $0x9c] sm:$0xf]
        %v2085 = vld [vmem:[#allocation3] sm:$0xff]
        %v2086 = vld [vmem:[#allocation3 + $0x8] sm:$0xff]
        %v2087 = vld [vmem:[#allocation3 + $0x10] sm:$0xff]
        %v2088 = vld [vmem:[#allocation3 + $0x18] sm:$0xff]
        %v2089 = vld [vmem:[#allocation3 + $0x20] sm:$0xff]
        %v2090 = vld [vmem:[#allocation3 + $0x28] sm:$0xff]
        %v2091 = vld [vmem:[#allocation3 + $0x30] sm:$0xff]
        %v2092 = vld [vmem:[#allocation3 + $0x38] sm:$0xff]
        %v2093 = vld [vmem:[#allocation3 + $0x40] sm:$0xff]
        %v2094 = vld [vmem:[#allocation3 + $0x48] sm:$0xff]
        %v2095 = vld [vmem:[#allocation3 + $0x50] sm:$0xff]
        %v2096 = vld [vmem:[#allocation3 + $0x58] sm:$0xff]
        %v2097 = vld [vmem:[#allocation3 + $0x60] sm:$0xff]
        %v2098 = vld [vmem:[#allocation3 + $0x68] sm:$0xff]
        %v2099 = vld [vmem:[#allocation3 + $0x70] sm:$0xff]
        %v2100 = vld [vmem:[#allocation3 + $0x78] sm:$0xff]
        %v2101 = vld [vmem:[#allocation3 + $0x80] sm:$0xff]
        %v2102 = vld [vmem:[#allocation3 + $0x88] sm:$0xff]
        %v2103 = vld [vmem:[#allocation3 + $0x90] sm:$0xff]
        %v2104 = vld [vmem:[#allocation3 + $0x98] sm:$0xff]
        %v2105 = vld [vmem:[#allocation3 + $0xa0] sm:$0xff]
        %v2106 = vld [vmem:[#allocation3 + $0xa8] sm:$0xff]
        %v2107 = vld [vmem:[#allocation3 + $0xb0] sm:$0xff]
        %v2108 = vld [vmem:[#allocation3 + $0xb8] sm:$0xff]
        %v2109 = vld [vmem:[#allocation3 + $0xc0] sm:$0xff]
        %v2110 = vld [vmem:[#allocation3 + $0xc8] sm:$0xff]
        %v2111 = vld [vmem:[#allocation3 + $0xd0] sm:$0xff]
        %v2112 = vld [vmem:[#allocation3 + $0xd8] sm:$0xff]
        %v2113 = vld [vmem:[#allocation3 + $0xe0] sm:$0xff]
        %v2114 = vld [vmem:[#allocation3 + $0xe8] sm:$0xff]
        %v2115 = vld [vmem:[#allocation3 + $0xf0] sm:$0xff]
        %v2116 = vld [vmem:[#allocation3 + $0xf8] sm:$0xff]
        %v2117 = vld [vmem:[#allocation3 + $0x100] sm:$0xff]
        %v2118 = vld [vmem:[#allocation3 + $0x108] sm:$0xff]
        %v2119 = vld [vmem:[#allocation3 + $0x110] sm:$0xff]
        %v2120 = vld [vmem:[#allocation3 + $0x118] sm:$0xff]
        %v2121 = vld [vmem:[#allocation3 + $0x120] sm:$0xff]
        %v2122 = vld [vmem:[#allocation3 + $0x128] sm:$0xff]
        %v2123 = vld [vmem:[#allocation3 + $0x130] sm:$0xff]
        %v2124 = vld [vmem:[#allocation3 + $0x138] sm:$0xff]
        %v2149 = vunpack.c.l.b16 %v2061
        %v2150 = vunpack.c.h.b16 %v2061
        %v2151 = vunpack.c.l.b16 %v2062
        %v2152 = vunpack.c.h.b16 %v2062
        %v2153 = vunpack.c.l.b16 %v2063
        %v2154 = vunpack.c.l.b16 %v2064
        %v2155 = vunpack.c.h.b16 %v2064
        %v2156 = vunpack.c.l.b16 %v2065
        %v2157 = vunpack.c.h.b16 %v2065
        %v2158 = vunpack.c.l.b16 %v2066
        %v2159 = vunpack.c.l.b16 %v2067
        %v2160 = vunpack.c.h.b16 %v2067
        %v2161 = vunpack.c.l.b16 %v2068
        %v2162 = vunpack.c.h.b16 %v2068
        %v2163 = vunpack.c.l.b16 %v2069
        %v2164 = vunpack.c.l.b16 %v2070
        %v2165 = vunpack.c.h.b16 %v2070
        %v2166 = vunpack.c.l.b16 %v2071
        %v2167 = vunpack.c.h.b16 %v2071
        %v2168 = vunpack.c.l.b16 %v2072
        %v2169 = vunpack.c.l.b16 %v2073
        %v2170 = vunpack.c.h.b16 %v2073
        %v2171 = vunpack.c.l.b16 %v2074
        %v2172 = vunpack.c.h.b16 %v2074
        %v2173 = vunpack.c.l.b16 %v2075
        %v2174 = vunpack.c.l.b16 %v2076
        %v2175 = vunpack.c.h.b16 %v2076
        %v2176 = vunpack.c.l.b16 %v2077
        %v2177 = vunpack.c.h.b16 %v2077
        %v2178 = vunpack.c.l.b16 %v2078
        %v2179 = vunpack.c.l.b16 %v2079
        %v2180 = vunpack.c.h.b16 %v2079
        %v2181 = vunpack.c.l.b16 %v2080
        %v2182 = vunpack.c.h.b16 %v2080
        %v2183 = vunpack.c.l.b16 %v2081
        %v2184 = vunpack.c.l.b16 %v2082
        %v2185 = vunpack.c.h.b16 %v2082
        %v2186 = vunpack.c.l.b16 %v2083
        %v2187 = vunpack.c.h.b16 %v2083
        %v2188 = vunpack.c.l.b16 %v2084
        %v2189 = vpack.c.b16 %v2154, %v2149
        %v2190 = vpack.c.b16 %v2155, %v2150
        %v2191 = vpack.c.b16 %v2156, %v2151
        %v2192 = vpack.c.b16 %v2157, %v2152
        %v2193 = vpack.c.b16 %v2158, %v2153
        %v2194 = vpack.c.b16 %v2164, %v2159
        %v2195 = vpack.c.b16 %v2165, %v2160
        %v2196 = vpack.c.b16 %v2166, %v2161
        %v2197 = vpack.c.b16 %v2167, %v2162
        %v2198 = vpack.c.b16 %v2168, %v2163
        %v2199 = vpack.c.b16 %v2174, %v2169
        %v2200 = vpack.c.b16 %v2175, %v2170
        %v2201 = vpack.c.b16 %v2176, %v2171
        %v2202 = vpack.c.b16 %v2177, %v2172
        %v2203 = vpack.c.b16 %v2178, %v2173
        %v2204 = vpack.c.b16 %v2184, %v2179
        %v2205 = vpack.c.b16 %v2185, %v2180
        %v2206 = vpack.c.b16 %v2186, %v2181
        %v2207 = vpack.c.b16 %v2187, %v2182
        %v2208 = vpack.c.b16 %v2188, %v2183
        %2229 = vmatprep.subr.bf16.mxu0 0
        %2230 = vmatpush1.bf16.msra.mxu0 %v2085
        %2231 = vmatprep.subr.bf16.mxu0 0
        %2232 = vmatpush1.bf16.msra.mxu0 %v2086
        %2233 = vmatprep.subr.bf16.mxu0 0
        %2234 = vmatpush1.bf16.msra.mxu0 %v2087
        %2235 = vmatprep.subr.bf16.mxu0 0
        %2236 = vmatpush1.bf16.msra.mxu0 %v2088
        %2237 = vmatprep.subr.bf16.mxu0 0
        %2238 = vmatpush1.bf16.msra.mxu0 %v2089
        %2239 = vmatprep.subr.bf16.mxu0 0
        %2240 = vmatpush1.bf16.msra.mxu0 %v2090
        %2241 = vmatprep.subr.bf16.mxu0 0
        %2242 = vmatpush1.bf16.msra.mxu0 %v2091
        %2243 = vmatprep.subr.bf16.mxu0 0
        %2244 = vmatpush1.bf16.msra.mxu0 %v2092
        %2245 = vmatprep.subr.bf16.mxu0 0
        %2246 = vmatpush1.bf16.msra.mxu0 %v2093
        %2247 = vmatprep.subr.bf16.mxu0 0
        %2248 = vmatpush1.bf16.msra.mxu0 %v2094
        %2249 = vmatprep.subr.bf16.mxu0 0
        %2250 = vmatpush1.bf16.msra.mxu0 %v2095
        %2251 = vmatprep.subr.bf16.mxu0 0
        %2252 = vmatpush1.bf16.msra.mxu0 %v2096
        %2253 = vmatprep.subr.bf16.mxu0 0
        %2254 = vmatpush1.bf16.msra.mxu0 %v2097
        %2255 = vmatprep.subr.bf16.mxu0 0
        %2256 = vmatpush1.bf16.msra.mxu0 %v2098
        %2257 = vmatprep.subr.bf16.mxu0 0
        %2258 = vmatpush1.bf16.msra.mxu0 %v2099
        %2259 = vmatprep.subr.bf16.mxu0 0
        %2260 = vmatpush1.bf16.msra.mxu0 %v2100
        %2261 = vmatprep.mubr.bf16.mxu0 %v2190
        %2262 = vmatmul.mubr.bf16.gmra.mrb[0].mxu0 %v2189
        %v2263 = vpop.f32.mrb[0].mxu0
        %v2264 = vadd.f32 0.0, %v2263
        %v2265 = vpop.f32.mrb[0].mxu0
        %v2266 = vpop.f32.mrb[0].mxu0
        %v2267 = vadd.f32 0.0, %v2266
        %v2268 = vpop.f32.mrb[0].mxu0
        %2269 = vmatprep.mubr.bf16.mxu0 %v2195
        %2270 = vmatmul.mubr.bf16.gmra.mrb[0].mxu0 %v2194
        %v2271 = vpop.f32.mrb[0].mxu0
        %v2272 = vadd.f32 0.0, %v2271
        %v2273 = vpop.f32.mrb[0].mxu0
        %v2274 = vpop.f32.mrb[0].mxu0
        %v2275 = vadd.f32 0.0, %v2274
        %v2276 = vpop.f32.mrb[0].mxu0
        %2277 = vmatprep.mubr.bf16.mxu0 %v2200
        %2278 = vmatmul.mubr.bf16.gmra.mrb[0].mxu0 %v2199
        %v2279 = vpop.f32.mrb[0].mxu0
        %v2280 = vadd.f32 0.0, %v2279
        %v2281 = vpop.f32.mrb[0].mxu0
        %v2282 = vpop.f32.mrb[0].mxu0
        %v2283 = vadd.f32 0.0, %v2282
        %v2284 = vpop.f32.mrb[0].mxu0
        %2285 = vmatprep.mubr.bf16.mxu0 %v2205
        %2286 = vmatmul.mubr.bf16.gmra.mrb[0].mxu0 %v2204
        %v2287 = vpop.f32.mrb[0].mxu0
        %v2288 = vadd.f32 0.0, %v2287
        %v2289 = vpop.f32.mrb[0].mxu0
        %v2290 = vpop.f32.mrb[0].mxu0
        %v2291 = vadd.f32 0.0, %v2290
        %v2292 = vpop.f32.mrb[0].mxu0
        %2293 = vdwg.mxu0
        %2294 = vmatprep.subr.bf16.mxu0 0
        %2295 = vmatpush1.bf16.msra.mxu0 %v2101
        %2296 = vmatprep.subr.bf16.mxu0 0
        %2297 = vmatpush1.bf16.msra.mxu0 %v2102
        %2298 = vmatprep.subr.bf16.mxu0 0
        %2299 = vmatpush1.bf16.msra.mxu0 %v2103
        %2300 = vmatprep.subr.bf16.mxu0 0
        %2301 = vmatpush1.bf16.msra.mxu0 %v2104
        %2302 = vmatprep.subr.bf16.mxu0 0
        %2303 = vmatpush1.bf16.msra.mxu0 %v2105
        %2304 = vmatprep.subr.bf16.mxu0 0
        %2305 = vmatpush1.bf16.msra.mxu0 %v2106
        %2306 = vmatprep.subr.bf16.mxu0 0
        %2307 = vmatpush1.bf16.msra.mxu0 %v2107
        %2308 = vmatprep.subr.bf16.mxu0 0
        %2309 = vmatpush1.bf16.msra.mxu0 %v2108
        %2310 = vmatprep.subr.bf16.mxu0 0
        %2311 = vmatpush1.bf16.msra.mxu0 %v2109
        %2312 = vmatprep.subr.bf16.mxu0 0
        %2313 = vmatpush1.bf16.msra.mxu0 %v2110
        %2314 = vmatprep.subr.bf16.mxu0 0
        %2315 = vmatpush1.bf16.msra.mxu0 %v2111
        %2316 = vmatprep.subr.bf16.mxu0 0
        %2317 = vmatpush1.bf16.msra.mxu0 %v2112
        %2318 = vmatprep.subr.bf16.mxu0 0
        %2319 = vmatpush1.bf16.msra.mxu0 %v2113
        %2320 = vmatprep.subr.bf16.mxu0 0
        %2321 = vmatpush1.bf16.msra.mxu0 %v2114
        %2322 = vmatprep.subr.bf16.mxu0 0
        %2323 = vmatpush1.bf16.msra.mxu0 %v2115
        %2324 = vmatprep.subr.bf16.mxu0 0
        %2325 = vmatpush1.bf16.msra.mxu0 %v2116
        %2326 = vmatprep.mubr.bf16.mxu0 %v2192
        %2327 = vmatmul.mubr.bf16.gmra.mrb[0].mxu0 %v2191
        %v2328 = vpop.f32.mrb[0].mxu0
        %v2329 = vadd.f32 %v2264, %v2328
        %v2330 = vpop.f32.mrb[0].mxu0
        %v2331 = vpop.f32.mrb[0].mxu0
        %v2332 = vadd.f32 %v2267, %v2331
        %v2333 = vpop.f32.mrb[0].mxu0
        %2334 = vmatprep.mubr.bf16.mxu0 %v2197
        %2335 = vmatmul.mubr.bf16.gmra.mrb[0].mxu0 %v2196
        %v2336 = vpop.f32.mrb[0].mxu0
        %v2337 = vadd.f32 %v2272, %v2336
        %v2338 = vpop.f32.mrb[0].mxu0
        %v2339 = vpop.f32.mrb[0].mxu0
        %v2340 = vadd.f32 %v2275, %v2339
        %v2341 = vpop.f32.mrb[0].mxu0
        %2342 = vmatprep.mubr.bf16.mxu0 %v2202
        %2343 = vmatmul.mubr.bf16.gmra.mrb[0].mxu0 %v2201
        %v2344 = vpop.f32.mrb[0].mxu0
        %v2345 = vadd.f32 %v2280, %v2344
        %v2346 = vpop.f32.mrb[0].mxu0
        %v2347 = vpop.f32.mrb[0].mxu0
        %v2348 = vadd.f32 %v2283, %v2347
        %v2349 = vpop.f32.mrb[0].mxu0
        %2350 = vmatprep.mubr.bf16.mxu0 %v2207
        %2351 = vmatmul.mubr.bf16.gmra.mrb[0].mxu0 %v2206
        %v2352 = vpop.f32.mrb[0].mxu0
        %v2353 = vadd.f32 %v2288, %v2352
        %v2354 = vpop.f32.mrb[0].mxu0
        %v2355 = vpop.f32.mrb[0].mxu0
        %v2356 = vadd.f32 %v2291, %v2355
        %v2357 = vpop.f32.mrb[0].mxu0
        %2358 = vdwg.mxu0
        %2359 = vmatprep.subr.bf16.mxu0 0
        %2360 = vmatpush1.bf16.msra.mxu0 %v2117
        %2361 = vmatprep.subr.bf16.mxu0 0
        %2362 = vmatpush1.bf16.msra.mxu0 %v2118
        %2363 = vmatprep.subr.bf16.mxu0 0
        %2364 = vmatpush1.bf16.msra.mxu0 %v2119
        %2365 = vmatprep.subr.bf16.mxu0 0
        %2366 = vmatpush1.bf16.msra.mxu0 %v2120
        %2367 = vmatprep.subr.bf16.mxu0 0
        %2368 = vmatpush1.bf16.msra.mxu0 %v2121
        %2369 = vmatprep.subr.bf16.mxu0 0
        %2370 = vmatpush1.bf16.msra.mxu0 %v2122
        %2371 = vmatprep.subr.bf16.mxu0 0
        %2372 = vmatpush1.bf16.msra.mxu0 %v2123
        %2373 = vmatprep.subr.bf16.mxu0 0
        %2374 = vmatpush1.bf16.msra.mxu0 %v2124
        %2375 = vmatprep.subr.bf16.mxu0 0
        %2376 = vmatpush1.bf16.msra.mxu0 0
        %2377 = vmatprep.subr.bf16.mxu0 0
        %2378 = vmatpush1.bf16.msra.mxu0 0
        %2379 = vmatprep.subr.bf16.mxu0 0
        %2380 = vmatpush1.bf16.msra.mxu0 0
        %2381 = vmatprep.subr.bf16.mxu0 0
        %2382 = vmatpush1.bf16.msra.mxu0 0
        %2383 = vmatprep.subr.bf16.mxu0 0
        %2384 = vmatpush1.bf16.msra.mxu0 0
        %2385 = vmatprep.subr.bf16.mxu0 0
        %2386 = vmatpush1.bf16.msra.mxu0 0
        %2387 = vmatprep.subr.bf16.mxu0 0
        %2388 = vmatpush1.bf16.msra.mxu0 0
        %2389 = vmatprep.subr.bf16.mxu0 0
        %2390 = vmatpush1.bf16.msra.mxu0 0
        %2391 = vmatprep.mubr.bf16.mxu0 0
        %2392 = vmatmul.mubr.bf16.gmra.mrb[0].mxu0 %v2193
        %v2393 = vpop.f32.mrb[0].mxu0
        %v2394 = vadd.f32 %v2329, %v2393
        %v2395 = vpop.f32.mrb[0].mxu0
        %v2396 = vpop.f32.mrb[0].mxu0
        %v2397 = vadd.f32 %v2332, %v2396
        %v2398 = vpop.f32.mrb[0].mxu0
        %2399 = vmatprep.mubr.bf16.mxu0 0
        %2400 = vmatmul.mubr.bf16.gmra.mrb[0].mxu0 %v2198
        %v2401 = vpop.f32.mrb[0].mxu0
        %v2402 = vadd.f32 %v2337, %v2401
        %v2403 = vpop.f32.mrb[0].mxu0
        %v2404 = vpop.f32.mrb[0].mxu0
        %v2405 = vadd.f32 %v2340, %v2404
        %v2406 = vpop.f32.mrb[0].mxu0
        %2407 = vmatprep.mubr.bf16.mxu0 0
        %2408 = vmatmul.mubr.bf16.gmra.mrb[0].mxu0 %v2203
        %v2409 = vpop.f32.mrb[0].mxu0
        %v2410 = vadd.f32 %v2345, %v2409
        %v2411 = vpop.f32.mrb[0].mxu0
        %v2412 = vpop.f32.mrb[0].mxu0
        %v2413 = vadd.f32 %v2348, %v2412
        %v2414 = vpop.f32.mrb[0].mxu0
        %2415 = vmatprep.mubr.bf16.mxu0 0
        %2416 = vmatmul.mubr.bf16.gmra.mrb[0].mxu0 %v2208
        %v2417 = vpop.f32.mrb[0].mxu0
        %v2418 = vadd.f32 %v2353, %v2417
        %v2419 = vpop.f32.mrb[0].mxu0
        %v2420 = vpop.f32.mrb[0].mxu0
        %v2421 = vadd.f32 %v2356, %v2420
        %v2422 = vpop.f32.mrb[0].mxu0
        %2423 = vdwg.mxu0
        %v2424 = vadd.f32 %v640, %v2394
        %v2425 = vadd.f32 %v645, %v2397
        %v2426 = vadd.f32 %v650, %v2402
        %v2427 = vadd.f32 %v655, %v2405
        %v2428 = vadd.f32 %v660, %v2410
        %v2429 = vadd.f32 %v665, %v2413
        %v2430 = vadd.f32 %v670, %v2418
        %v2431 = vadd.f32 %v675, %v2421
        %v2432 = vmax.f32 %v2424, 0.0
        %v2433 = vmax.f32 %v2425, 0.0
        %v2434 = vmax.f32 %v2426, 0.0
        %v2435 = vmax.f32 %v2427, 0.0
        %v2436 = vmax.f32 %v2428, 0.0
        %v2437 = vmax.f32 %v2429, 0.0
        %v2438 = vmax.f32 %v2430, 0.0
        %v2439 = vmax.f32 %v2431, 0.0
        %v2440 = vadd.f32 %v2432, %v2433
        %v2441 = vadd.f32 %v2440, %v2434
        %v2442 = vadd.f32 %v2441, %v2435
        %v2443 = vadd.f32 %v2442, %v2436
        %v2444 = vadd.f32 %v2443, %v2437
        %v2445 = vadd.f32 %v2444, %v2438
        %v2446 = vadd.f32 %v2445, %v2439
        %v2447 = vrot.slane %v2446, 4
        %v2448 = vadd.f32 %v2446, %v2447
        %v2449 = vrot.slane %v2448, 2
        %v2450 = vadd.f32 %v2448, %v2449
        %v2451 = vrot.slane %v2450, 1
        %v2452 = vadd.f32 %v2450, %v2451
        %v2453 = vmul.f32 %v2452, 0.015625
        %v2454 = vsub.f32 %v2432, %v2453
        %v2455 = vsub.f32 %v2433, %v2453
        %v2456 = vsub.f32 %v2434, %v2453
        %v2457 = vsub.f32 %v2435, %v2453
        %v2458 = vsub.f32 %v2436, %v2453
        %v2459 = vsub.f32 %v2437, %v2453
        %v2460 = vsub.f32 %v2438, %v2453
        %v2461 = vsub.f32 %v2439, %v2453
        %v2462 = vmul.f32 %v2454, %v2454
        %v2463 = vmul.f32 %v2455, %v2455
        %v2464 = vmul.f32 %v2456, %v2456
        %v2465 = vmul.f32 %v2457, %v2457
        %v2466 = vmul.f32 %v2458, %v2458
        %v2467 = vmul.f32 %v2459, %v2459
        %v2468 = vmul.f32 %v2460, %v2460
        %v2469 = vmul.f32 %v2461, %v2461
        %v2470 = vadd.f32 %v2462, %v2463
        %v2471 = vadd.f32 %v2470, %v2464
        %v2472 = vadd.f32 %v2471, %v2465
        %v2473 = vadd.f32 %v2472, %v2466
        %v2474 = vadd.f32 %v2473, %v2467
        %v2475 = vadd.f32 %v2474, %v2468
        %v2476 = vadd.f32 %v2475, %v2469
        %v2477 = vrot.slane %v2476, 4
        %v2478 = vadd.f32 %v2476, %v2477
        %v2479 = vrot.slane %v2478, 2
        %v2480 = vadd.f32 %v2478, %v2479
        %v2481 = vrot.slane %v2480, 1
        %v2482 = vadd.f32 %v2480, %v2481
        %v2483 = vmul.f32 %v2482, 0.015625
        %v2484 = vadd.f32 %v2483, 1e-05
        %v2485 = vrsqrt.pop %v2484
        %v2486 = vmul.f32 %v2454, %v2485
        %v2487 = vmul.f32 %v2455, %v2485
        %v2488 = vmul.f32 %v2456, %v2485
        %v2489 = vmul.f32 %v2457, %v2485
        %v2490 = vmul.f32 %v2458, %v2485
        %v2491 = vmul.f32 %v2459, %v2485
        %v2492 = vmul.f32 %v2460, %v2485
        %v2493 = vmul.f32 %v2461, %v2485
        %s2494 = scalar_lea.vmem %s1, 1
        %v2495 = vld [vmem:[%s2494] sm:$0x1]
        %v2497 = vlaneseq
        %v2498 = vshrl.u32 %v2497, 7
        %v2499 = vsub.s32 0, %v2498
        %v2500 = vrot.slane %v2495, %v2499
        %v2502 = vmul.f32 %v2486, %v2500
        %v2503 = vmul.f32 %v2487, %v2500
        %v2504 = vmul.f32 %v2488, %v2500
        %v2505 = vmul.f32 %v2489, %v2500
        %v2506 = vmul.f32 %v2490, %v2500
        %v2507 = vmul.f32 %v2491, %v2500
        %v2508 = vmul.f32 %v2492, %v2500
        %v2509 = vmul.f32 %v2493, %v2500
        %s2510 = scalar_lea.vmem %s2, 1
        %v2511 = vld [vmem:[%s2510] sm:$0x1]
        %v2513 = vlaneseq
        %v2514 = vshrl.u32 %v2513, 7
        %v2515 = vsub.s32 0, %v2514
        %v2516 = vrot.slane %v2511, %v2515
        %v2518 = vadd.f32 %v2502, %v2516
        %v2519 = vadd.f32 %v2503, %v2516
        %v2520 = vadd.f32 %v2504, %v2516
        %v2521 = vadd.f32 %v2505, %v2516
        %v2522 = vadd.f32 %v2506, %v2516
        %v2523 = vadd.f32 %v2507, %v2516
        %v2524 = vadd.f32 %v2508, %v2516
        %v2525 = vadd.f32 %v2509, %v2516
        %s2526 = scalar_lea.vmem [#allocation7], 128
        %v2527 = vld [vmem:[%s2526] sm:$0xff]
        %v2528 = vld [vmem:[%s2526 + $0x8] sm:$0xff]
        %v2529 = vld [vmem:[%s2526 + $0x10] sm:$0xff]
        %v2530 = vld [vmem:[%s2526 + $0x18] sm:$0xff]
        %v2531 = vld [vmem:[%s2526 + $0x20] sm:$0xff]
        %v2532 = vld [vmem:[%s2526 + $0x28] sm:$0xff]
        %v2533 = vld [vmem:[%s2526 + $0x30] sm:$0xff]
        %v2534 = vld [vmem:[%s2526 + $0x38] sm:$0xff]
        %v2535 = vld [vmem:[%s2526 + $0x40] sm:$0xff]
        %v2536 = vld [vmem:[%s2526 + $0x48] sm:$0xff]
        %v2537 = vld [vmem:[%s2526 + $0x50] sm:$0xff]
        %v2538 = vld [vmem:[%s2526 + $0x58] sm:$0xff]
        %v2539 = vld [vmem:[%s2526 + $0x60] sm:$0xff]
        %v2540 = vld [vmem:[%s2526 + $0x68] sm:$0xff]
        %v2541 = vld [vmem:[%s2526 + $0x70] sm:$0xff]
        %v2542 = vld [vmem:[%s2526 + $0x78] sm:$0xff]
        %s2543 = scalar_lea.vmem %s4, 1
        %v2544 = vld [vmem:[%s2543] sm:$0x1]
        %v2546 = vlaneseq
        %v2547 = vshrl.u32 %v2546, 7
        %v2548 = vsub.s32 0, %v2547
        %v2549 = vrot.slane %v2544, %v2548
        %2551 = vmatprep.subr.mxu0 0.0
        %2552 = vmatpush1.msra.mxu0 %v2527
        %2553 = vmatprep.subr.mxu0 0.0
        %2554 = vmatpush1.msra.mxu0 %v2528
        %2555 = vmatprep.subr.mxu0 0.0
        %2556 = vmatpush1.msra.mxu0 %v2529
        %2557 = vmatprep.subr.mxu0 0.0
        %2558 = vmatpush1.msra.mxu0 %v2530
        %2559 = vmatprep.subr.mxu0 0.0
        %2560 = vmatpush1.msra.mxu0 %v2531
        %2561 = vmatprep.subr.mxu0 0.0
        %2562 = vmatpush1.msra.mxu0 %v2532
        %2563 = vmatprep.subr.mxu0 0.0
        %2564 = vmatpush1.msra.mxu0 %v2533
        %2565 = vmatprep.subr.mxu0 0.0
        %2566 = vmatpush1.msra.mxu0 %v2534
        %2567 = vmatprep.subr.mxu0 0.0
        %2568 = vmatpush1.msra.mxu0 %v2535
        %2569 = vmatprep.subr.mxu0 0.0
        %2570 = vmatpush1.msra.mxu0 %v2536
        %2571 = vmatprep.subr.mxu0 0.0
        %2572 = vmatpush1.msra.mxu0 %v2537
        %2573 = vmatprep.subr.mxu0 0.0
        %2574 = vmatpush1.msra.mxu0 %v2538
        %2575 = vmatprep.subr.mxu0 0.0
        %2576 = vmatpush1.msra.mxu0 %v2539
        %2577 = vmatprep.subr.mxu0 0.0
        %2578 = vmatpush1.msra.mxu0 %v2540
        %2579 = vmatprep.subr.mxu0 0.0
        %2580 = vmatpush1.msra.mxu0 %v2541
        %2581 = vmatprep.subr.mxu0 0.0
        %2582 = vmatpush1.msra.mxu0 %v2542
        %2583 = vmatprep.subr.mxu0 0.0
        %2584 = vmatpush1.msra.mxu0 0.0
        %2585 = vmatprep.subr.mxu0 0.0
        %2586 = vmatpush1.msra.mxu0 0.0
        %2587 = vmatprep.subr.mxu0 0.0
        %2588 = vmatpush1.msra.mxu0 0.0
        %2589 = vmatprep.subr.mxu0 0.0
        %2590 = vmatpush1.msra.mxu0 0.0
        %2591 = vmatprep.subr.mxu0 0.0
        %2592 = vmatpush1.msra.mxu0 0.0
        %2593 = vmatprep.subr.mxu0 0.0
        %2594 = vmatpush1.msra.mxu0 0.0
        %2595 = vmatprep.subr.mxu0 0.0
        %2596 = vmatpush1.msra.mxu0 0.0
        %2597 = vmatprep.subr.mxu0 0.0
        %2598 = vmatpush1.msra.mxu0 0.0
        %2599 = vmatprep.subr.mxu0 0.0
        %2600 = vmatpush1.msra.mxu0 0.0
        %2601 = vmatprep.subr.mxu0 0.0
        %2602 = vmatpush1.msra.mxu0 0.0
        %2603 = vmatprep.subr.mxu0 0.0
        %2604 = vmatpush1.msra.mxu0 0.0
        %2605 = vmatprep.subr.mxu0 0.0
        %2606 = vmatpush1.msra.mxu0 0.0
        %2607 = vmatprep.subr.mxu0 0.0
        %2608 = vmatpush1.msra.mxu0 0.0
        %2609 = vmatprep.subr.mxu0 0.0
        %2610 = vmatpush1.msra.mxu0 0.0
        %2611 = vmatprep.subr.mxu0 0.0
        %2612 = vmatpush1.msra.mxu0 0.0
        %2613 = vmatprep.subr.mxu0 0.0
        %2614 = vmatpush1.msra.mxu0 0.0
        %2615 = vmatprep.mubr.f32.mxu0 0.0
        %2616 = vmatmul.mubr.f32.gmra.mrb[0].mxu0 %v2518
        %v2617 = vpop.f32.mrb[0].mxu0
        %v2618 = vadd.f32 %v2549, %v2617
        %v2619 = vpop.f32.mrb[0].mxu0
        %2620 = vmatprep.mubr.f32.mxu0 0.0
        %2621 = vmatmul.mubr.f32.gmra.mrb[0].mxu0 %v2519
        %v2622 = vpop.f32.mrb[0].mxu0
        %v2623 = vadd.f32 %v2549, %v2622
        %v2624 = vpop.f32.mrb[0].mxu0
        %2625 = vmatprep.mubr.f32.mxu0 0.0
        %2626 = vmatmul.mubr.f32.gmra.mrb[0].mxu0 %v2520
        %v2627 = vpop.f32.mrb[0].mxu0
        %v2628 = vadd.f32 %v2549, %v2627
        %v2629 = vpop.f32.mrb[0].mxu0
        %2630 = vmatprep.mubr.f32.mxu0 0.0
        %2631 = vmatmul.mubr.f32.gmra.mrb[0].mxu0 %v2521
        %v2632 = vpop.f32.mrb[0].mxu0
        %v2633 = vadd.f32 %v2549, %v2632
        %v2634 = vpop.f32.mrb[0].mxu0
        %2635 = vmatprep.mubr.f32.mxu0 0.0
        %2636 = vmatmul.mubr.f32.gmra.mrb[0].mxu0 %v2522
        %v2637 = vpop.f32.mrb[0].mxu0
        %v2638 = vadd.f32 %v2549, %v2637
        %v2639 = vpop.f32.mrb[0].mxu0
        %2640 = vmatprep.mubr.f32.mxu0 0.0
        %2641 = vmatmul.mubr.f32.gmra.mrb[0].mxu0 %v2523
        %v2642 = vpop.f32.mrb[0].mxu0
        %v2643 = vadd.f32 %v2549, %v2642
        %v2644 = vpop.f32.mrb[0].mxu0
        %2645 = vmatprep.mubr.f32.mxu0 0.0
        %2646 = vmatmul.mubr.f32.gmra.mrb[0].mxu0 %v2524
        %v2647 = vpop.f32.mrb[0].mxu0
        %v2648 = vadd.f32 %v2549, %v2647
        %v2649 = vpop.f32.mrb[0].mxu0
        %2650 = vmatprep.mubr.f32.mxu0 0.0
        %2651 = vmatmul.mubr.f32.gmra.mrb[0].mxu0 %v2525
        %v2652 = vpop.f32.mrb[0].mxu0
        %v2653 = vadd.f32 %v2549, %v2652
        %v2654 = vpop.f32.mrb[0].mxu0
        %2655 = vdwg.mxu0
        %v2656 = vpack.c.bf16 %v2519, %v2518
        %v2657 = vpack.c.bf16 %v2521, %v2520
        %v2658 = vpack.c.bf16 %v2523, %v2522
        %v2659 = vpack.c.bf16 %v2525, %v2524
        %s2660 = scalar_lea.vmem [#allocation9], 640
        %v2661 = vld [vmem:[%s2660] sm:$0xf]
        %v2662 = vld [vmem:[%s2660 + $0x4] sm:$0xf]
        %v2663 = vld [vmem:[%s2660 + $0x8] sm:$0xf]
        %v2664 = vld [vmem:[%s2660 + $0xc] sm:$0xf]
        %v2665 = vld [vmem:[%s2660 + $0x10] sm:$0xf]
        %v2666 = vld [vmem:[%s2660 + $0x14] sm:$0xf]
        %v2667 = vld [vmem:[%s2660 + $0x18] sm:$0xf]
        %v2668 = vld [vmem:[%s2660 + $0x1c] sm:$0xf]
        %v2669 = vld [vmem:[%s2660 + $0x20] sm:$0xf]
        %v2670 = vld [vmem:[%s2660 + $0x24] sm:$0xf]
        %v2671 = vld [vmem:[%s2660 + $0x28] sm:$0xf]
        %v2672 = vld [vmem:[%s2660 + $0x2c] sm:$0xf]
        %v2673 = vld [vmem:[%s2660 + $0x30] sm:$0xf]
        %v2674 = vld [vmem:[%s2660 + $0x34] sm:$0xf]
        %v2675 = vld [vmem:[%s2660 + $0x38] sm:$0xf]
        %v2676 = vld [vmem:[%s2660 + $0x3c] sm:$0xf]
        %v2693 = vunpack.c.l.b16 %v2661
        %v2694 = vunpack.c.l.b16 %v2662
        %v2695 = vunpack.c.l.b16 %v2663
        %v2696 = vunpack.c.l.b16 %v2664
        %v2697 = vunpack.c.l.b16 %v2665
        %v2698 = vunpack.c.l.b16 %v2666
        %v2699 = vunpack.c.l.b16 %v2667
        %v2700 = vunpack.c.l.b16 %v2668
        %v2701 = vunpack.c.l.b16 %v2669
        %v2702 = vunpack.c.l.b16 %v2670
        %v2703 = vunpack.c.l.b16 %v2671
        %v2704 = vunpack.c.l.b16 %v2672
        %v2705 = vunpack.c.l.b16 %v2673
        %v2706 = vunpack.c.l.b16 %v2674
        %v2707 = vunpack.c.l.b16 %v2675
        %v2708 = vunpack.c.l.b16 %v2676
        %v2709 = vpack.c.b16 %v2694, %v2693
        %v2710 = vpack.c.b16 %v2696, %v2695
        %v2711 = vpack.c.b16 %v2698, %v2697
        %v2712 = vpack.c.b16 %v2700, %v2699
        %v2713 = vpack.c.b16 %v2702, %v2701
        %v2714 = vpack.c.b16 %v2704, %v2703
        %v2715 = vpack.c.b16 %v2706, %v2705
        %v2716 = vpack.c.b16 %v2708, %v2707
        %2725 = vmatprep.subr.bf16.mxu0 0
        %2726 = vmatpush1.bf16.msra.mxu0 %v2709
        %2727 = vmatprep.subr.bf16.mxu0 0
        %2728 = vmatpush1.bf16.msra.mxu0 %v2710
        %2729 = vmatprep.subr.bf16.mxu0 0
        %2730 = vmatpush1.bf16.msra.mxu0 %v2711
        %2731 = vmatprep.subr.bf16.mxu0 0
        %2732 = vmatpush1.bf16.msra.mxu0 %v2712
        %2733 = vmatprep.subr.bf16.mxu0 0
        %2734 = vmatpush1.bf16.msra.mxu0 %v2713
        %2735 = vmatprep.subr.bf16.mxu0 0
        %2736 = vmatpush1.bf16.msra.mxu0 %v2714
        %2737 = vmatprep.subr.bf16.mxu0 0
        %2738 = vmatpush1.bf16.msra.mxu0 %v2715
        %2739 = vmatprep.subr.bf16.mxu0 0
        %2740 = vmatpush1.bf16.msra.mxu0 %v2716
        %2741 = vmatprep.subr.bf16.mxu0 0
        %2742 = vmatpush1.bf16.msra.mxu0 0
        %2743 = vmatprep.subr.bf16.mxu0 0
        %2744 = vmatpush1.bf16.msra.mxu0 0
        %2745 = vmatprep.subr.bf16.mxu0 0
        %2746 = vmatpush1.bf16.msra.mxu0 0
        %2747 = vmatprep.subr.bf16.mxu0 0
        %2748 = vmatpush1.bf16.msra.mxu0 0
        %2749 = vmatprep.subr.bf16.mxu0 0
        %2750 = vmatpush1.bf16.msra.mxu0 0
        %2751 = vmatprep.subr.bf16.mxu0 0
        %2752 = vmatpush1.bf16.msra.mxu0 0
        %2753 = vmatprep.subr.bf16.mxu0 0
        %2754 = vmatpush1.bf16.msra.mxu0 0
        %2755 = vmatprep.subr.bf16.mxu0 0
        %2756 = vmatpush1.bf16.msra.mxu0 0
        %2757 = vmatprep.mubr.bf16.mxu0 0
        %2758 = vmatmul.mubr.bf16.gmra.mrb[0].mxu0 %v2656
        %v2759 = vpop.f32.mrb[0].mxu0
        %v2760 = vadd.f32 0.0, %v2759
        %v2761 = vpop.f32.mrb[0].mxu0
        %v2762 = vpop.f32.mrb[0].mxu0
        %v2763 = vadd.f32 0.0, %v2762
        %v2764 = vpop.f32.mrb[0].mxu0
        %2765 = vmatprep.mubr.bf16.mxu0 0
        %2766 = vmatmul.mubr.bf16.gmra.mrb[0].mxu0 %v2657
        %v2767 = vpop.f32.mrb[0].mxu0
        %v2768 = vadd.f32 0.0, %v2767
        %v2769 = vpop.f32.mrb[0].mxu0
        %v2770 = vpop.f32.mrb[0].mxu0
        %v2771 = vadd.f32 0.0, %v2770
        %v2772 = vpop.f32.mrb[0].mxu0
        %2773 = vmatprep.mubr.bf16.mxu0 0
        %2774 = vmatmul.mubr.bf16.gmra.mrb[0].mxu0 %v2658
        %v2775 = vpop.f32.mrb[0].mxu0
        %v2776 = vadd.f32 0.0, %v2775
        %v2777 = vpop.f32.mrb[0].mxu0
        %v2778 = vpop.f32.mrb[0].mxu0
        %v2779 = vadd.f32 0.0, %v2778
        %v2780 = vpop.f32.mrb[0].mxu0
        %2781 = vmatprep.mubr.bf16.mxu0 0
        %2782 = vmatmul.mubr.bf16.gmra.mrb[0].mxu0 %v2659
        %v2783 = vpop.f32.mrb[0].mxu0
        %v2784 = vadd.f32 0.0, %v2783
        %v2785 = vpop.f32.mrb[0].mxu0
        %v2786 = vpop.f32.mrb[0].mxu0
        %v2787 = vadd.f32 0.0, %v2786
        %v2788 = vpop.f32.mrb[0].mxu0
        %2789 = vdwg.mxu0
        %v2790 = vpack.c.bf16 %v2763, %v2760
        %v2791 = vpack.c.bf16 %v2771, %v2768
        %v2792 = vpack.c.bf16 %v2779, %v2776
        %v2793 = vpack.c.bf16 %v2787, %v2784
        %2794 = vst [vmem:[#allocation3] sm:$0xff] %v2790
        %2795 = vst [vmem:[#allocation3 + $0x8] sm:$0xff] %v2791
        %2796 = vst [vmem:[#allocation3 + $0x10] sm:$0xff] %v2792
        %2797 = vst [vmem:[#allocation3 + $0x18] sm:$0xff] %v2793
        %s2798 = scalar_lea.vmem [#allocation9], 704
        %v2799 = vld [vmem:[%s2798] sm:$0xf]
        %v2800 = vld [vmem:[%s2798 + $0x4] sm:$0xf]
        %v2801 = vld [vmem:[%s2798 + $0x8] sm:$0xf]
        %v2802 = vld [vmem:[%s2798 + $0xc] sm:$0xf]
        %v2803 = vld [vmem:[%s2798 + $0x10] sm:$0xf]
        %v2804 = vld [vmem:[%s2798 + $0x14] sm:$0xf]
        %v2805 = vld [vmem:[%s2798 + $0x18] sm:$0xf]
        %v2806 = vld [vmem:[%s2798 + $0x1c] sm:$0xf]
        %v2807 = vld [vmem:[%s2798 + $0x20] sm:$0xf]
        %v2808 = vld [vmem:[%s2798 + $0x24] sm:$0xf]
        %v2809 = vld [vmem:[%s2798 + $0x28] sm:$0xf]
        %v2810 = vld [vmem:[%s2798 + $0x2c] sm:$0xf]
        %v2811 = vld [vmem:[%s2798 + $0x30] sm:$0xf]
        %v2812 = vld [vmem:[%s2798 + $0x34] sm:$0xf]
        %v2813 = vld [vmem:[%s2798 + $0x38] sm:$0xf]
        %v2814 = vld [vmem:[%s2798 + $0x3c] sm:$0xf]
        %v2831 = vunpack.c.l.b16 %v2799
        %v2832 = vunpack.c.l.b16 %v2800
        %v2833 = vunpack.c.l.b16 %v2801
        %v2834 = vunpack.c.l.b16 %v2802
        %v2835 = vunpack.c.l.b16 %v2803
        %v2836 = vunpack.c.l.b16 %v2804
        %v2837 = vunpack.c.l.b16 %v2805
        %v2838 = vunpack.c.l.b16 %v2806
        %v2839 = vunpack.c.l.b16 %v2807
        %v2840 = vunpack.c.l.b16 %v2808
        %v2841 = vunpack.c.l.b16 %v2809
        %v2842 = vunpack.c.l.b16 %v2810
        %v2843 = vunpack.c.l.b16 %v2811
        %v2844 = vunpack.c.l.b16 %v2812
        %v2845 = vunpack.c.l.b16 %v2813
        %v2846 = vunpack.c.l.b16 %v2814
        %v2847 = vpack.c.b16 %v2832, %v2831
        %v2848 = vpack.c.b16 %v2834, %v2833
        %v2849 = vpack.c.b16 %v2836, %v2835
        %v2850 = vpack.c.b16 %v2838, %v2837
        %v2851 = vpack.c.b16 %v2840, %v2839
        %v2852 = vpack.c.b16 %v2842, %v2841
        %v2853 = vpack.c.b16 %v2844, %v2843
        %v2854 = vpack.c.b16 %v2846, %v2845
        %2863 = vmatprep.subr.bf16.mxu0 0
        %2864 = vmatpush1.bf16.msra.mxu0 %v2847
        %2865 = vmatprep.subr.bf16.mxu0 0
        %2866 = vmatpush1.bf16.msra.mxu0 %v2848
        %2867 = vmatprep.subr.bf16.mxu0 0
        %2868 = vmatpush1.bf16.msra.mxu0 %v2849
        %2869 = vmatprep.subr.bf16.mxu0 0
        %2870 = vmatpush1.bf16.msra.mxu0 %v2850
        %2871 = vmatprep.subr.bf16.mxu0 0
        %2872 = vmatpush1.bf16.msra.mxu0 %v2851
        %2873 = vmatprep.subr.bf16.mxu0 0
        %2874 = vmatpush1.bf16.msra.mxu0 %v2852
        %2875 = vmatprep.subr.bf16.mxu0 0
        %2876 = vmatpush1.bf16.msra.mxu0 %v2853
        %2877 = vmatprep.subr.bf16.mxu0 0
        %2878 = vmatpush1.bf16.msra.mxu0 %v2854
        %2879 = vmatprep.subr.bf16.mxu0 0
        %2880 = vmatpush1.bf16.msra.mxu0 0
        %2881 = vmatprep.subr.bf16.mxu0 0
        %2882 = vmatpush1.bf16.msra.mxu0 0
        %2883 = vmatprep.subr.bf16.mxu0 0
        %2884 = vmatpush1.bf16.msra.mxu0 0
        %2885 = vmatprep.subr.bf16.mxu0 0
        %2886 = vmatpush1.bf16.msra.mxu0 0
        %2887 = vmatprep.subr.bf16.mxu0 0
        %2888 = vmatpush1.bf16.msra.mxu0 0
        %2889 = vmatprep.subr.bf16.mxu0 0
        %2890 = vmatpush1.bf16.msra.mxu0 0
        %2891 = vmatprep.subr.bf16.mxu0 0
        %2892 = vmatpush1.bf16.msra.mxu0 0
        %2893 = vmatprep.subr.bf16.mxu0 0
        %2894 = vmatpush1.bf16.msra.mxu0 0
        %2895 = vmatprep.mubr.bf16.mxu0 0
        %2896 = vmatmul.mubr.bf16.gmra.mrb[0].mxu0 %v2656
        %v2897 = vpop.f32.mrb[0].mxu0
        %v2898 = vadd.f32 0.0, %v2897
        %v2899 = vpop.f32.mrb[0].mxu0
        %v2900 = vpop.f32.mrb[0].mxu0
        %v2901 = vadd.f32 0.0, %v2900
        %v2902 = vpop.f32.mrb[0].mxu0
        %2903 = vmatprep.mubr.bf16.mxu0 0
        %2904 = vmatmul.mubr.bf16.gmra.mrb[0].mxu0 %v2657
        %v2905 = vpop.f32.mrb[0].mxu0
        %v2906 = vadd.f32 0.0, %v2905
        %v2907 = vpop.f32.mrb[0].mxu0
        %v2908 = vpop.f32.mrb[0].mxu0
        %v2909 = vadd.f32 0.0, %v2908
        %v2910 = vpop.f32.mrb[0].mxu0
        %2911 = vmatprep.mubr.bf16.mxu0 0
        %2912 = vmatmul.mubr.bf16.gmra.mrb[0].mxu0 %v2658
        %v2913 = vpop.f32.mrb[0].mxu0
        %v2914 = vadd.f32 0.0, %v2913
        %v2915 = vpop.f32.mrb[0].mxu0
        %v2916 = vpop.f32.mrb[0].mxu0
        %v2917 = vadd.f32 0.0, %v2916
        %v2918 = vpop.f32.mrb[0].mxu0
        %2919 = vmatprep.mubr.bf16.mxu0 0
        %2920 = vmatmul.mubr.bf16.gmra.mrb[0].mxu0 %v2659
        %v2921 = vpop.f32.mrb[0].mxu0
        %v2922 = vadd.f32 0.0, %v2921
        %v2923 = vpop.f32.mrb[0].mxu0
        %v2924 = vpop.f32.mrb[0].mxu0
        %v2925 = vadd.f32 0.0, %v2924
        %v2926 = vpop.f32.mrb[0].mxu0
        %2927 = vdwg.mxu0
        %v2928 = vpack.c.bf16 %v2901, %v2898
        %v2929 = vpack.c.bf16 %v2909, %v2906
        %v2930 = vpack.c.bf16 %v2917, %v2914
        %v2931 = vpack.c.bf16 %v2925, %v2922
        %2932 = vst [vmem:[#allocation3 + $0x20] sm:$0xff] %v2928
        %2933 = vst [vmem:[#allocation3 + $0x28] sm:$0xff] %v2929
        %2934 = vst [vmem:[#allocation3 + $0x30] sm:$0xff] %v2930
        %2935 = vst [vmem:[#allocation3 + $0x38] sm:$0xff] %v2931
        %s2936 = scalar_lea.vmem [#allocation9], 768
        %v2937 = vld [vmem:[%s2936] sm:$0xf]
        %v2938 = vld [vmem:[%s2936 + $0x4] sm:$0xf]
        %v2939 = vld [vmem:[%s2936 + $0x8] sm:$0xf]
        %v2940 = vld [vmem:[%s2936 + $0xc] sm:$0xf]
        %v2941 = vld [vmem:[%s2936 + $0x10] sm:$0xf]
        %v2942 = vld [vmem:[%s2936 + $0x14] sm:$0xf]
        %v2943 = vld [vmem:[%s2936 + $0x18] sm:$0xf]
        %v2944 = vld [vmem:[%s2936 + $0x1c] sm:$0xf]
        %v2945 = vld [vmem:[%s2936 + $0x20] sm:$0xf]
        %v2946 = vld [vmem:[%s2936 + $0x24] sm:$0xf]
        %v2947 = vld [vmem:[%s2936 + $0x28] sm:$0xf]
        %v2948 = vld [vmem:[%s2936 + $0x2c] sm:$0xf]
        %v2949 = vld [vmem:[%s2936 + $0x30] sm:$0xf]
        %v2950 = vld [vmem:[%s2936 + $0x34] sm:$0xf]
        %v2951 = vld [vmem:[%s2936 + $0x38] sm:$0xf]
        %v2952 = vld [vmem:[%s2936 + $0x3c] sm:$0xf]
        %v2969 = vunpack.c.l.b16 %v2937
        %v2970 = vunpack.c.l.b16 %v2938
        %v2971 = vunpack.c.l.b16 %v2939
        %v2972 = vunpack.c.l.b16 %v2940
        %v2973 = vunpack.c.l.b16 %v2941
        %v2974 = vunpack.c.l.b16 %v2942
        %v2975 = vunpack.c.l.b16 %v2943
        %v2976 = vunpack.c.l.b16 %v2944
        %v2977 = vunpack.c.l.b16 %v2945
        %v2978 = vunpack.c.l.b16 %v2946
        %v2979 = vunpack.c.l.b16 %v2947
        %v2980 = vunpack.c.l.b16 %v2948
        %v2981 = vunpack.c.l.b16 %v2949
        %v2982 = vunpack.c.l.b16 %v2950
        %v2983 = vunpack.c.l.b16 %v2951
        %v2984 = vunpack.c.l.b16 %v2952
        %v2985 = vpack.c.b16 %v2970, %v2969
        %v2986 = vpack.c.b16 %v2972, %v2971
        %v2987 = vpack.c.b16 %v2974, %v2973
        %v2988 = vpack.c.b16 %v2976, %v2975
        %v2989 = vpack.c.b16 %v2978, %v2977
        %v2990 = vpack.c.b16 %v2980, %v2979
        %v2991 = vpack.c.b16 %v2982, %v2981
        %v2992 = vpack.c.b16 %v2984, %v2983
        %3001 = vmatprep.subr.bf16.mxu0 0
        %3002 = vmatpush1.bf16.msra.mxu0 %v2985
        %3003 = vmatprep.subr.bf16.mxu0 0
        %3004 = vmatpush1.bf16.msra.mxu0 %v2986
        %3005 = vmatprep.subr.bf16.mxu0 0
        %3006 = vmatpush1.bf16.msra.mxu0 %v2987
        %3007 = vmatprep.subr.bf16.mxu0 0
        %3008 = vmatpush1.bf16.msra.mxu0 %v2988
        %3009 = vmatprep.subr.bf16.mxu0 0
        %3010 = vmatpush1.bf16.msra.mxu0 %v2989
        %3011 = vmatprep.subr.bf16.mxu0 0
        %3012 = vmatpush1.bf16.msra.mxu0 %v2990
        %3013 = vmatprep.subr.bf16.mxu0 0
        %3014 = vmatpush1.bf16.msra.mxu0 %v2991
        %3015 = vmatprep.subr.bf16.mxu0 0
        %3016 = vmatpush1.bf16.msra.mxu0 %v2992
        %3017 = vmatprep.subr.bf16.mxu0 0
        %3018 = vmatpush1.bf16.msra.mxu0 0
        %3019 = vmatprep.subr.bf16.mxu0 0
        %3020 = vmatpush1.bf16.msra.mxu0 0
        %3021 = vmatprep.subr.bf16.mxu0 0
        %3022 = vmatpush1.bf16.msra.mxu0 0
        %3023 = vmatprep.subr.bf16.mxu0 0
        %3024 = vmatpush1.bf16.msra.mxu0 0
        %3025 = vmatprep.subr.bf16.mxu0 0
        %3026 = vmatpush1.bf16.msra.mxu0 0
        %3027 = vmatprep.subr.bf16.mxu0 0
        %3028 = vmatpush1.bf16.msra.mxu0 0
        %3029 = vmatprep.subr.bf16.mxu0 0
        %3030 = vmatpush1.bf16.msra.mxu0 0
        %3031 = vmatprep.subr.bf16.mxu0 0
        %3032 = vmatpush1.bf16.msra.mxu0 0
        %3033 = vmatprep.mubr.bf16.mxu0 0
        %3034 = vmatmul.mubr.bf16.gmra.mrb[0].mxu0 %v2656
        %v3035 = vpop.f32.mrb[0].mxu0
        %v3036 = vadd.f32 0.0, %v3035
        %v3037 = vpop.f32.mrb[0].mxu0
        %v3038 = vpop.f32.mrb[0].mxu0
        %v3039 = vadd.f32 0.0, %v3038
        %v3040 = vpop.f32.mrb[0].mxu0
        %3041 = vmatprep.mubr.bf16.mxu0 0
        %3042 = vmatmul.mubr.bf16.gmra.mrb[0].mxu0 %v2657
        %v3043 = vpop.f32.mrb[0].mxu0
        %v3044 = vadd.f32 0.0, %v3043
        %v3045 = vpop.f32.mrb[0].mxu0
        %v3046 = vpop.f32.mrb[0].mxu0
        %v3047 = vadd.f32 0.0, %v3046
        %v3048 = vpop.f32.mrb[0].mxu0
        %3049 = vmatprep.mubr.bf16.mxu0 0
        %3050 = vmatmul.mubr.bf16.gmra.mrb[0].mxu0 %v2658
        %v3051 = vpop.f32.mrb[0].mxu0
        %v3052 = vadd.f32 0.0, %v3051
        %v3053 = vpop.f32.mrb[0].mxu0
        %v3054 = vpop.f32.mrb[0].mxu0
        %v3055 = vadd.f32 0.0, %v3054
        %v3056 = vpop.f32.mrb[0].mxu0
        %3057 = vmatprep.mubr.bf16.mxu0 0
        %3058 = vmatmul.mubr.bf16.gmra.mrb[0].mxu0 %v2659
        %v3059 = vpop.f32.mrb[0].mxu0
        %v3060 = vadd.f32 0.0, %v3059
        %v3061 = vpop.f32.mrb[0].mxu0
        %v3062 = vpop.f32.mrb[0].mxu0
        %v3063 = vadd.f32 0.0, %v3062
        %v3064 = vpop.f32.mrb[0].mxu0
        %3065 = vdwg.mxu0
        %v3066 = vpack.c.bf16 %v3039, %v3036
        %v3067 = vpack.c.bf16 %v3047, %v3044
        %v3068 = vpack.c.bf16 %v3055, %v3052
        %v3069 = vpack.c.bf16 %v3063, %v3060
        %3070 = vst [vmem:[#allocation3 + $0x40] sm:$0xff] %v3066
        %3071 = vst [vmem:[#allocation3 + $0x48] sm:$0xff] %v3067
        %3072 = vst [vmem:[#allocation3 + $0x50] sm:$0xff] %v3068
        %3073 = vst [vmem:[#allocation3 + $0x58] sm:$0xff] %v3069
        %s3074 = scalar_lea.vmem [#allocation9], 832
        %v3075 = vld [vmem:[%s3074] sm:$0xf]
        %v3076 = vld [vmem:[%s3074 + $0x4] sm:$0xf]
        %v3077 = vld [vmem:[%s3074 + $0x8] sm:$0xf]
        %v3078 = vld [vmem:[%s3074 + $0xc] sm:$0xf]
        %v3079 = vld [vmem:[%s3074 + $0x10] sm:$0xf]
        %v3080 = vld [vmem:[%s3074 + $0x14] sm:$0xf]
        %v3081 = vld [vmem:[%s3074 + $0x18] sm:$0xf]
        %v3082 = vld [vmem:[%s3074 + $0x1c] sm:$0xf]
        %v3083 = vld [vmem:[%s3074 + $0x20] sm:$0xf]
        %v3084 = vld [vmem:[%s3074 + $0x24] sm:$0xf]
        %v3085 = vld [vmem:[%s3074 + $0x28] sm:$0xf]
        %v3086 = vld [vmem:[%s3074 + $0x2c] sm:$0xf]
        %v3087 = vld [vmem:[%s3074 + $0x30] sm:$0xf]
        %v3088 = vld [vmem:[%s3074 + $0x34] sm:$0xf]
        %v3089 = vld [vmem:[%s3074 + $0x38] sm:$0xf]
        %v3090 = vld [vmem:[%s3074 + $0x3c] sm:$0xf]
        %v3107 = vunpack.c.l.b16 %v3075
        %v3108 = vunpack.c.l.b16 %v3076
        %v3109 = vunpack.c.l.b16 %v3077
        %v3110 = vunpack.c.l.b16 %v3078
        %v3111 = vunpack.c.l.b16 %v3079
        %v3112 = vunpack.c.l.b16 %v3080
        %v3113 = vunpack.c.l.b16 %v3081
        %v3114 = vunpack.c.l.b16 %v3082
        %v3115 = vunpack.c.l.b16 %v3083
        %v3116 = vunpack.c.l.b16 %v3084
        %v3117 = vunpack.c.l.b16 %v3085
        %v3118 = vunpack.c.l.b16 %v3086
        %v3119 = vunpack.c.l.b16 %v3087
        %v3120 = vunpack.c.l.b16 %v3088
        %v3121 = vunpack.c.l.b16 %v3089
        %v3122 = vunpack.c.l.b16 %v3090
        %v3123 = vpack.c.b16 %v3108, %v3107
        %v3124 = vpack.c.b16 %v3110, %v3109
        %v3125 = vpack.c.b16 %v3112, %v3111
        %v3126 = vpack.c.b16 %v3114, %v3113
        %v3127 = vpack.c.b16 %v3116, %v3115
        %v3128 = vpack.c.b16 %v3118, %v3117
        %v3129 = vpack.c.b16 %v3120, %v3119
        %v3130 = vpack.c.b16 %v3122, %v3121
        %3139 = vmatprep.subr.bf16.mxu0 0
        %3140 = vmatpush1.bf16.msra.mxu0 %v3123
        %3141 = vmatprep.subr.bf16.mxu0 0
        %3142 = vmatpush1.bf16.msra.mxu0 %v3124
        %3143 = vmatprep.subr.bf16.mxu0 0
        %3144 = vmatpush1.bf16.msra.mxu0 %v3125
        %3145 = vmatprep.subr.bf16.mxu0 0
        %3146 = vmatpush1.bf16.msra.mxu0 %v3126
        %3147 = vmatprep.subr.bf16.mxu0 0
        %3148 = vmatpush1.bf16.msra.mxu0 %v3127
        %3149 = vmatprep.subr.bf16.mxu0 0
        %3150 = vmatpush1.bf16.msra.mxu0 %v3128
        %3151 = vmatprep.subr.bf16.mxu0 0
        %3152 = vmatpush1.bf16.msra.mxu0 %v3129
        %3153 = vmatprep.subr.bf16.mxu0 0
        %3154 = vmatpush1.bf16.msra.mxu0 %v3130
        %3155 = vmatprep.subr.bf16.mxu0 0
        %3156 = vmatpush1.bf16.msra.mxu0 0
        %3157 = vmatprep.subr.bf16.mxu0 0
        %3158 = vmatpush1.bf16.msra.mxu0 0
        %3159 = vmatprep.subr.bf16.mxu0 0
        %3160 = vmatpush1.bf16.msra.mxu0 0
        %3161 = vmatprep.subr.bf16.mxu0 0
        %3162 = vmatpush1.bf16.msra.mxu0 0
        %3163 = vmatprep.subr.bf16.mxu0 0
        %3164 = vmatpush1.bf16.msra.mxu0 0
        %3165 = vmatprep.subr.bf16.mxu0 0
        %3166 = vmatpush1.bf16.msra.mxu0 0
        %3167 = vmatprep.subr.bf16.mxu0 0
        %3168 = vmatpush1.bf16.msra.mxu0 0
        %3169 = vmatprep.subr.bf16.mxu0 0
        %3170 = vmatpush1.bf16.msra.mxu0 0
        %3171 = vmatprep.mubr.bf16.mxu0 0
        %3172 = vmatmul.mubr.bf16.gmra.mrb[0].mxu0 %v2656
        %v3173 = vpop.f32.mrb[0].mxu0
        %v3174 = vadd.f32 0.0, %v3173
        %v3175 = vpop.f32.mrb[0].mxu0
        %v3176 = vpop.f32.mrb[0].mxu0
        %v3177 = vadd.f32 0.0, %v3176
        %v3178 = vpop.f32.mrb[0].mxu0
        %3179 = vmatprep.mubr.bf16.mxu0 0
        %3180 = vmatmul.mubr.bf16.gmra.mrb[0].mxu0 %v2657
        %v3181 = vpop.f32.mrb[0].mxu0
        %v3182 = vadd.f32 0.0, %v3181
        %v3183 = vpop.f32.mrb[0].mxu0
        %v3184 = vpop.f32.mrb[0].mxu0
        %v3185 = vadd.f32 0.0, %v3184
        %v3186 = vpop.f32.mrb[0].mxu0
        %3187 = vmatprep.mubr.bf16.mxu0 0
        %3188 = vmatmul.mubr.bf16.gmra.mrb[0].mxu0 %v2658
        %v3189 = vpop.f32.mrb[0].mxu0
        %v3190 = vadd.f32 0.0, %v3189
        %v3191 = vpop.f32.mrb[0].mxu0
        %v3192 = vpop.f32.mrb[0].mxu0
        %v3193 = vadd.f32 0.0, %v3192
        %v3194 = vpop.f32.mrb[0].mxu0
        %3195 = vmatprep.mubr.bf16.mxu0 0
        %3196 = vmatmul.mubr.bf16.gmra.mrb[0].mxu0 %v2659
        %v3197 = vpop.f32.mrb[0].mxu0
        %v3198 = vadd.f32 0.0, %v3197
        %v3199 = vpop.f32.mrb[0].mxu0
        %v3200 = vpop.f32.mrb[0].mxu0
        %v3201 = vadd.f32 0.0, %v3200
        %v3202 = vpop.f32.mrb[0].mxu0
        %3203 = vdwg.mxu0
        %v3204 = vpack.c.bf16 %v3177, %v3174
        %v3205 = vpack.c.bf16 %v3185, %v3182
        %v3206 = vpack.c.bf16 %v3193, %v3190
        %v3207 = vpack.c.bf16 %v3201, %v3198
        %3208 = vst [vmem:[#allocation3 + $0x60] sm:$0xff] %v3204
        %3209 = vst [vmem:[#allocation3 + $0x68] sm:$0xff] %v3205
        %3210 = vst [vmem:[#allocation3 + $0x70] sm:$0xff] %v3206
        %3211 = vst [vmem:[#allocation3 + $0x78] sm:$0xff] %v3207
        %s3212 = scalar_lea.vmem [#allocation9], 896
        %v3213 = vld [vmem:[%s3212] sm:$0xf]
        %v3214 = vld [vmem:[%s3212 + $0x4] sm:$0xf]
        %v3215 = vld [vmem:[%s3212 + $0x8] sm:$0xf]
        %v3216 = vld [vmem:[%s3212 + $0xc] sm:$0xf]
        %v3217 = vld [vmem:[%s3212 + $0x10] sm:$0xf]
        %v3218 = vld [vmem:[%s3212 + $0x14] sm:$0xf]
        %v3219 = vld [vmem:[%s3212 + $0x18] sm:$0xf]
        %v3220 = vld [vmem:[%s3212 + $0x1c] sm:$0xf]
        %v3221 = vld [vmem:[%s3212 + $0x20] sm:$0xf]
        %v3222 = vld [vmem:[%s3212 + $0x24] sm:$0xf]
        %v3223 = vld [vmem:[%s3212 + $0x28] sm:$0xf]
        %v3224 = vld [vmem:[%s3212 + $0x2c] sm:$0xf]
        %v3225 = vld [vmem:[%s3212 + $0x30] sm:$0xf]
        %v3226 = vld [vmem:[%s3212 + $0x34] sm:$0xf]
        %v3227 = vld [vmem:[%s3212 + $0x38] sm:$0xf]
        %v3228 = vld [vmem:[%s3212 + $0x3c] sm:$0xf]
        %v3245 = vunpack.c.l.b16 %v3213
        %v3246 = vunpack.c.l.b16 %v3214
        %v3247 = vunpack.c.l.b16 %v3215
        %v3248 = vunpack.c.l.b16 %v3216
        %v3249 = vunpack.c.l.b16 %v3217
        %v3250 = vunpack.c.l.b16 %v3218
        %v3251 = vunpack.c.l.b16 %v3219
        %v3252 = vunpack.c.l.b16 %v3220
        %v3253 = vunpack.c.l.b16 %v3221
        %v3254 = vunpack.c.l.b16 %v3222
        %v3255 = vunpack.c.l.b16 %v3223
        %v3256 = vunpack.c.l.b16 %v3224
        %v3257 = vunpack.c.l.b16 %v3225
        %v3258 = vunpack.c.l.b16 %v3226
        %v3259 = vunpack.c.l.b16 %v3227
        %v3260 = vunpack.c.l.b16 %v3228
        %v3261 = vpack.c.b16 %v3246, %v3245
        %v3262 = vpack.c.b16 %v3248, %v3247
        %v3263 = vpack.c.b16 %v3250, %v3249
        %v3264 = vpack.c.b16 %v3252, %v3251
        %v3265 = vpack.c.b16 %v3254, %v3253
        %v3266 = vpack.c.b16 %v3256, %v3255
        %v3267 = vpack.c.b16 %v3258, %v3257
        %v3268 = vpack.c.b16 %v3260, %v3259
        %3277 = vmatprep.subr.bf16.mxu0 0
        %3278 = vmatpush1.bf16.msra.mxu0 %v3261
        %3279 = vmatprep.subr.bf16.mxu0 0
        %3280 = vmatpush1.bf16.msra.mxu0 %v3262
        %3281 = vmatprep.subr.bf16.mxu0 0
        %3282 = vmatpush1.bf16.msra.mxu0 %v3263
        %3283 = vmatprep.subr.bf16.mxu0 0
        %3284 = vmatpush1.bf16.msra.mxu0 %v3264
        %3285 = vmatprep.subr.bf16.mxu0 0
        %3286 = vmatpush1.bf16.msra.mxu0 %v3265
        %3287 = vmatprep.subr.bf16.mxu0 0
        %3288 = vmatpush1.bf16.msra.mxu0 %v3266
        %3289 = vmatprep.subr.bf16.mxu0 0
        %3290 = vmatpush1.bf16.msra.mxu0 %v3267
        %3291 = vmatprep.subr.bf16.mxu0 0
        %3292 = vmatpush1.bf16.msra.mxu0 %v3268
        %3293 = vmatprep.subr.bf16.mxu0 0
        %3294 = vmatpush1.bf16.msra.mxu0 0
        %3295 = vmatprep.subr.bf16.mxu0 0
        %3296 = vmatpush1.bf16.msra.mxu0 0
        %3297 = vmatprep.subr.bf16.mxu0 0
        %3298 = vmatpush1.bf16.msra.mxu0 0
        %3299 = vmatprep.subr.bf16.mxu0 0
        %3300 = vmatpush1.bf16.msra.mxu0 0
        %3301 = vmatprep.subr.bf16.mxu0 0
        %3302 = vmatpush1.bf16.msra.mxu0 0
        %3303 = vmatprep.subr.bf16.mxu0 0
        %3304 = vmatpush1.bf16.msra.mxu0 0
        %3305 = vmatprep.subr.bf16.mxu0 0
        %3306 = vmatpush1.bf16.msra.mxu0 0
        %3307 = vmatprep.subr.bf16.mxu0 0
        %3308 = vmatpush1.bf16.msra.mxu0 0
        %3309 = vmatprep.mubr.bf16.mxu0 0
        %3310 = vmatmul.mubr.bf16.gmra.mrb[0].mxu0 %v2656
        %v3311 = vpop.f32.mrb[0].mxu0
        %v3312 = vadd.f32 0.0, %v3311
        %v3313 = vpop.f32.mrb[0].mxu0
        %v3314 = vpop.f32.mrb[0].mxu0
        %v3315 = vadd.f32 0.0, %v3314
        %v3316 = vpop.f32.mrb[0].mxu0
        %3317 = vmatprep.mubr.bf16.mxu0 0
        %3318 = vmatmul.mubr.bf16.gmra.mrb[0].mxu0 %v2657
        %v3319 = vpop.f32.mrb[0].mxu0
        %v3320 = vadd.f32 0.0, %v3319
        %v3321 = vpop.f32.mrb[0].mxu0
        %v3322 = vpop.f32.mrb[0].mxu0
        %v3323 = vadd.f32 0.0, %v3322
        %v3324 = vpop.f32.mrb[0].mxu0
        %3325 = vmatprep.mubr.bf16.mxu0 0
        %3326 = vmatmul.mubr.bf16.gmra.mrb[0].mxu0 %v2658
        %v3327 = vpop.f32.mrb[0].mxu0
        %v3328 = vadd.f32 0.0, %v3327
        %v3329 = vpop.f32.mrb[0].mxu0
        %v3330 = vpop.f32.mrb[0].mxu0
        %v3331 = vadd.f32 0.0, %v3330
        %v3332 = vpop.f32.mrb[0].mxu0
        %3333 = vmatprep.mubr.bf16.mxu0 0
        %3334 = vmatmul.mubr.bf16.gmra.mrb[0].mxu0 %v2659
        %v3335 = vpop.f32.mrb[0].mxu0
        %v3336 = vadd.f32 0.0, %v3335
        %v3337 = vpop.f32.mrb[0].mxu0
        %v3338 = vpop.f32.mrb[0].mxu0
        %v3339 = vadd.f32 0.0, %v3338
        %v3340 = vpop.f32.mrb[0].mxu0
        %3341 = vdwg.mxu0
        %v3342 = vpack.c.bf16 %v3315, %v3312
        %v3343 = vpack.c.bf16 %v3323, %v3320
        %v3344 = vpack.c.bf16 %v3331, %v3328
        %v3345 = vpack.c.bf16 %v3339, %v3336
        %3346 = vst [vmem:[#allocation3 + $0x80] sm:$0xff] %v3342
        %3347 = vst [vmem:[#allocation3 + $0x88] sm:$0xff] %v3343
        %3348 = vst [vmem:[#allocation3 + $0x90] sm:$0xff] %v3344
        %3349 = vst [vmem:[#allocation3 + $0x98] sm:$0xff] %v3345
        %s3350 = scalar_lea.vmem [#allocation9], 960
        %v3351 = vld [vmem:[%s3350] sm:$0xf]
        %v3352 = vld [vmem:[%s3350 + $0x4] sm:$0xf]
        %v3353 = vld [vmem:[%s3350 + $0x8] sm:$0xf]
        %v3354 = vld [vmem:[%s3350 + $0xc] sm:$0xf]
        %v3355 = vld [vmem:[%s3350 + $0x10] sm:$0xf]
        %v3356 = vld [vmem:[%s3350 + $0x14] sm:$0xf]
        %v3357 = vld [vmem:[%s3350 + $0x18] sm:$0xf]
        %v3358 = vld [vmem:[%s3350 + $0x1c] sm:$0xf]
        %v3359 = vld [vmem:[%s3350 + $0x20] sm:$0xf]
        %v3360 = vld [vmem:[%s3350 + $0x24] sm:$0xf]
        %v3361 = vld [vmem:[%s3350 + $0x28] sm:$0xf]
        %v3362 = vld [vmem:[%s3350 + $0x2c] sm:$0xf]
        %v3363 = vld [vmem:[%s3350 + $0x30] sm:$0xf]
        %v3364 = vld [vmem:[%s3350 + $0x34] sm:$0xf]
        %v3365 = vld [vmem:[%s3350 + $0x38] sm:$0xf]
        %v3366 = vld [vmem:[%s3350 + $0x3c] sm:$0xf]
        %v3383 = vunpack.c.l.b16 %v3351
        %v3384 = vunpack.c.l.b16 %v3352
        %v3385 = vunpack.c.l.b16 %v3353
        %v3386 = vunpack.c.l.b16 %v3354
        %v3387 = vunpack.c.l.b16 %v3355
        %v3388 = vunpack.c.l.b16 %v3356
        %v3389 = vunpack.c.l.b16 %v3357
        %v3390 = vunpack.c.l.b16 %v3358
        %v3391 = vunpack.c.l.b16 %v3359
        %v3392 = vunpack.c.l.b16 %v3360
        %v3393 = vunpack.c.l.b16 %v3361
        %v3394 = vunpack.c.l.b16 %v3362
        %v3395 = vunpack.c.l.b16 %v3363
        %v3396 = vunpack.c.l.b16 %v3364
        %v3397 = vunpack.c.l.b16 %v3365
        %v3398 = vunpack.c.l.b16 %v3366
        %v3399 = vpack.c.b16 %v3384, %v3383
        %v3400 = vpack.c.b16 %v3386, %v3385
        %v3401 = vpack.c.b16 %v3388, %v3387
        %v3402 = vpack.c.b16 %v3390, %v3389
        %v3403 = vpack.c.b16 %v3392, %v3391
        %v3404 = vpack.c.b16 %v3394, %v3393
        %v3405 = vpack.c.b16 %v3396, %v3395
        %v3406 = vpack.c.b16 %v3398, %v3397
        %3415 = vmatprep.subr.bf16.mxu0 0
        %3416 = vmatpush1.bf16.msra.mxu0 %v3399
        %3417 = vmatprep.subr.bf16.mxu0 0
        %3418 = vmatpush1.bf16.msra.mxu0 %v3400
        %3419 = vmatprep.subr.bf16.mxu0 0
        %3420 = vmatpush1.bf16.msra.mxu0 %v3401
        %3421 = vmatprep.subr.bf16.mxu0 0
        %3422 = vmatpush1.bf16.msra.mxu0 %v3402
        %3423 = vmatprep.subr.bf16.mxu0 0
        %3424 = vmatpush1.bf16.msra.mxu0 %v3403
        %3425 = vmatprep.subr.bf16.mxu0 0
        %3426 = vmatpush1.bf16.msra.mxu0 %v3404
        %3427 = vmatprep.subr.bf16.mxu0 0
        %3428 = vmatpush1.bf16.msra.mxu0 %v3405
        %3429 = vmatprep.subr.bf16.mxu0 0
        %3430 = vmatpush1.bf16.msra.mxu0 %v3406
        %3431 = vmatprep.subr.bf16.mxu0 0
        %3432 = vmatpush1.bf16.msra.mxu0 0
        %3433 = vmatprep.subr.bf16.mxu0 0
        %3434 = vmatpush1.bf16.msra.mxu0 0
        %3435 = vmatprep.subr.bf16.mxu0 0
        %3436 = vmatpush1.bf16.msra.mxu0 0
        %3437 = vmatprep.subr.bf16.mxu0 0
        %3438 = vmatpush1.bf16.msra.mxu0 0
        %3439 = vmatprep.subr.bf16.mxu0 0
        %3440 = vmatpush1.bf16.msra.mxu0 0
        %3441 = vmatprep.subr.bf16.mxu0 0
        %3442 = vmatpush1.bf16.msra.mxu0 0
        %3443 = vmatprep.subr.bf16.mxu0 0
        %3444 = vmatpush1.bf16.msra.mxu0 0
        %3445 = vmatprep.subr.bf16.mxu0 0
        %3446 = vmatpush1.bf16.msra.mxu0 0
        %3447 = vmatprep.mubr.bf16.mxu0 0
        %3448 = vmatmul.mubr.bf16.gmra.mrb[0].mxu0 %v2656
        %v3449 = vpop.f32.mrb[0].mxu0
        %v3450 = vadd.f32 0.0, %v3449
        %v3451 = vpop.f32.mrb[0].mxu0
        %v3452 = vpop.f32.mrb[0].mxu0
        %v3453 = vadd.f32 0.0, %v3452
        %v3454 = vpop.f32.mrb[0].mxu0
        %3455 = vmatprep.mubr.bf16.mxu0 0
        %3456 = vmatmul.mubr.bf16.gmra.mrb[0].mxu0 %v2657
        %v3457 = vpop.f32.mrb[0].mxu0
        %v3458 = vadd.f32 0.0, %v3457
        %v3459 = vpop.f32.mrb[0].mxu0
        %v3460 = vpop.f32.mrb[0].mxu0
        %v3461 = vadd.f32 0.0, %v3460
        %v3462 = vpop.f32.mrb[0].mxu0
        %3463 = vmatprep.mubr.bf16.mxu0 0
        %3464 = vmatmul.mubr.bf16.gmra.mrb[0].mxu0 %v2658
        %v3465 = vpop.f32.mrb[0].mxu0
        %v3466 = vadd.f32 0.0, %v3465
        %v3467 = vpop.f32.mrb[0].mxu0
        %v3468 = vpop.f32.mrb[0].mxu0
        %v3469 = vadd.f32 0.0, %v3468
        %v3470 = vpop.f32.mrb[0].mxu0
        %3471 = vmatprep.mubr.bf16.mxu0 0
        %3472 = vmatmul.mubr.bf16.gmra.mrb[0].mxu0 %v2659
        %v3473 = vpop.f32.mrb[0].mxu0
        %v3474 = vadd.f32 0.0, %v3473
        %v3475 = vpop.f32.mrb[0].mxu0
        %v3476 = vpop.f32.mrb[0].mxu0
        %v3477 = vadd.f32 0.0, %v3476
        %v3478 = vpop.f32.mrb[0].mxu0
        %3479 = vdwg.mxu0
        %v3480 = vpack.c.bf16 %v3453, %v3450
        %v3481 = vpack.c.bf16 %v3461, %v3458
        %v3482 = vpack.c.bf16 %v3469, %v3466
        %v3483 = vpack.c.bf16 %v3477, %v3474
        %3484 = vst [vmem:[#allocation3 + $0xa0] sm:$0xff] %v3480
        %3485 = vst [vmem:[#allocation3 + $0xa8] sm:$0xff] %v3481
        %3486 = vst [vmem:[#allocation3 + $0xb0] sm:$0xff] %v3482
        %3487 = vst [vmem:[#allocation3 + $0xb8] sm:$0xff] %v3483
        %s3488 = scalar_lea.vmem [#allocation9], 1024
        %v3489 = vld [vmem:[%s3488] sm:$0xf]
        %v3490 = vld [vmem:[%s3488 + $0x4] sm:$0xf]
        %v3491 = vld [vmem:[%s3488 + $0x8] sm:$0xf]
        %v3492 = vld [vmem:[%s3488 + $0xc] sm:$0xf]
        %v3493 = vld [vmem:[%s3488 + $0x10] sm:$0xf]
        %v3494 = vld [vmem:[%s3488 + $0x14] sm:$0xf]
        %v3495 = vld [vmem:[%s3488 + $0x18] sm:$0xf]
        %v3496 = vld [vmem:[%s3488 + $0x1c] sm:$0xf]
        %v3497 = vld [vmem:[%s3488 + $0x20] sm:$0xf]
        %v3498 = vld [vmem:[%s3488 + $0x24] sm:$0xf]
        %v3499 = vld [vmem:[%s3488 + $0x28] sm:$0xf]
        %v3500 = vld [vmem:[%s3488 + $0x2c] sm:$0xf]
        %v3501 = vld [vmem:[%s3488 + $0x30] sm:$0xf]
        %v3502 = vld [vmem:[%s3488 + $0x34] sm:$0xf]
        %v3503 = vld [vmem:[%s3488 + $0x38] sm:$0xf]
        %v3504 = vld [vmem:[%s3488 + $0x3c] sm:$0xf]
        %v3521 = vunpack.c.l.b16 %v3489
        %v3522 = vunpack.c.l.b16 %v3490
        %v3523 = vunpack.c.l.b16 %v3491
        %v3524 = vunpack.c.l.b16 %v3492
        %v3525 = vunpack.c.l.b16 %v3493
        %v3526 = vunpack.c.l.b16 %v3494
        %v3527 = vunpack.c.l.b16 %v3495
        %v3528 = vunpack.c.l.b16 %v3496
        %v3529 = vunpack.c.l.b16 %v3497
        %v3530 = vunpack.c.l.b16 %v3498
        %v3531 = vunpack.c.l.b16 %v3499
        %v3532 = vunpack.c.l.b16 %v3500
        %v3533 = vunpack.c.l.b16 %v3501
        %v3534 = vunpack.c.l.b16 %v3502
        %v3535 = vunpack.c.l.b16 %v3503
        %v3536 = vunpack.c.l.b16 %v3504
        %v3537 = vpack.c.b16 %v3522, %v3521
        %v3538 = vpack.c.b16 %v3524, %v3523
        %v3539 = vpack.c.b16 %v3526, %v3525
        %v3540 = vpack.c.b16 %v3528, %v3527
        %v3541 = vpack.c.b16 %v3530, %v3529
        %v3542 = vpack.c.b16 %v3532, %v3531
        %v3543 = vpack.c.b16 %v3534, %v3533
        %v3544 = vpack.c.b16 %v3536, %v3535
        %3553 = vmatprep.subr.bf16.mxu0 0
        %3554 = vmatpush1.bf16.msra.mxu0 %v3537
        %3555 = vmatprep.subr.bf16.mxu0 0
        %3556 = vmatpush1.bf16.msra.mxu0 %v3538
        %3557 = vmatprep.subr.bf16.mxu0 0
        %3558 = vmatpush1.bf16.msra.mxu0 %v3539
        %3559 = vmatprep.subr.bf16.mxu0 0
        %3560 = vmatpush1.bf16.msra.mxu0 %v3540
        %3561 = vmatprep.subr.bf16.mxu0 0
        %3562 = vmatpush1.bf16.msra.mxu0 %v3541
        %3563 = vmatprep.subr.bf16.mxu0 0
        %3564 = vmatpush1.bf16.msra.mxu0 %v3542
        %3565 = vmatprep.subr.bf16.mxu0 0
        %3566 = vmatpush1.bf16.msra.mxu0 %v3543
        %3567 = vmatprep.subr.bf16.mxu0 0
        %3568 = vmatpush1.bf16.msra.mxu0 %v3544
        %3569 = vmatprep.subr.bf16.mxu0 0
        %3570 = vmatpush1.bf16.msra.mxu0 0
        %3571 = vmatprep.subr.bf16.mxu0 0
        %3572 = vmatpush1.bf16.msra.mxu0 0
        %3573 = vmatprep.subr.bf16.mxu0 0
        %3574 = vmatpush1.bf16.msra.mxu0 0
        %3575 = vmatprep.subr.bf16.mxu0 0
        %3576 = vmatpush1.bf16.msra.mxu0 0
        %3577 = vmatprep.subr.bf16.mxu0 0
        %3578 = vmatpush1.bf16.msra.mxu0 0
        %3579 = vmatprep.subr.bf16.mxu0 0
        %3580 = vmatpush1.bf16.msra.mxu0 0
        %3581 = vmatprep.subr.bf16.mxu0 0
        %3582 = vmatpush1.bf16.msra.mxu0 0
        %3583 = vmatprep.subr.bf16.mxu0 0
        %3584 = vmatpush1.bf16.msra.mxu0 0
        %3585 = vmatprep.mubr.bf16.mxu0 0
        %3586 = vmatmul.mubr.bf16.gmra.mrb[0].mxu0 %v2656
        %v3587 = vpop.f32.mrb[0].mxu0
        %v3588 = vadd.f32 0.0, %v3587
        %v3589 = vpop.f32.mrb[0].mxu0
        %v3590 = vpop.f32.mrb[0].mxu0
        %v3591 = vadd.f32 0.0, %v3590
        %v3592 = vpop.f32.mrb[0].mxu0
        %3593 = vmatprep.mubr.bf16.mxu0 0
        %3594 = vmatmul.mubr.bf16.gmra.mrb[0].mxu0 %v2657
        %v3595 = vpop.f32.mrb[0].mxu0
        %v3596 = vadd.f32 0.0, %v3595
        %v3597 = vpop.f32.mrb[0].mxu0
        %v3598 = vpop.f32.mrb[0].mxu0
        %v3599 = vadd.f32 0.0, %v3598
        %v3600 = vpop.f32.mrb[0].mxu0
        %3601 = vmatprep.mubr.bf16.mxu0 0
        %3602 = vmatmul.mubr.bf16.gmra.mrb[0].mxu0 %v2658
        %v3603 = vpop.f32.mrb[0].mxu0
        %v3604 = vadd.f32 0.0, %v3603
        %v3605 = vpop.f32.mrb[0].mxu0
        %v3606 = vpop.f32.mrb[0].mxu0
        %v3607 = vadd.f32 0.0, %v3606
        %v3608 = vpop.f32.mrb[0].mxu0
        %3609 = vmatprep.mubr.bf16.mxu0 0
        %3610 = vmatmul.mubr.bf16.gmra.mrb[0].mxu0 %v2659
        %v3611 = vpop.f32.mrb[0].mxu0
        %v3612 = vadd.f32 0.0, %v3611
        %v3613 = vpop.f32.mrb[0].mxu0
        %v3614 = vpop.f32.mrb[0].mxu0
        %v3615 = vadd.f32 0.0, %v3614
        %v3616 = vpop.f32.mrb[0].mxu0
        %3617 = vdwg.mxu0
        %v3618 = vpack.c.bf16 %v3591, %v3588
        %v3619 = vpack.c.bf16 %v3599, %v3596
        %v3620 = vpack.c.bf16 %v3607, %v3604
        %v3621 = vpack.c.bf16 %v3615, %v3612
        %3622 = vst [vmem:[#allocation3 + $0xc0] sm:$0xff] %v3618
        %3623 = vst [vmem:[#allocation3 + $0xc8] sm:$0xff] %v3619
        %3624 = vst [vmem:[#allocation3 + $0xd0] sm:$0xff] %v3620
        %3625 = vst [vmem:[#allocation3 + $0xd8] sm:$0xff] %v3621
        %s3626 = scalar_lea.vmem [#allocation9], 1088
        %v3627 = vld [vmem:[%s3626] sm:$0xf]
        %v3628 = vld [vmem:[%s3626 + $0x4] sm:$0xf]
        %v3629 = vld [vmem:[%s3626 + $0x8] sm:$0xf]
        %v3630 = vld [vmem:[%s3626 + $0xc] sm:$0xf]
        %v3631 = vld [vmem:[%s3626 + $0x10] sm:$0xf]
        %v3632 = vld [vmem:[%s3626 + $0x14] sm:$0xf]
        %v3633 = vld [vmem:[%s3626 + $0x18] sm:$0xf]
        %v3634 = vld [vmem:[%s3626 + $0x1c] sm:$0xf]
        %v3635 = vld [vmem:[%s3626 + $0x20] sm:$0xf]
        %v3636 = vld [vmem:[%s3626 + $0x24] sm:$0xf]
        %v3637 = vld [vmem:[%s3626 + $0x28] sm:$0xf]
        %v3638 = vld [vmem:[%s3626 + $0x2c] sm:$0xf]
        %v3639 = vld [vmem:[%s3626 + $0x30] sm:$0xf]
        %v3640 = vld [vmem:[%s3626 + $0x34] sm:$0xf]
        %v3641 = vld [vmem:[%s3626 + $0x38] sm:$0xf]
        %v3642 = vld [vmem:[%s3626 + $0x3c] sm:$0xf]
        %v3659 = vunpack.c.l.b16 %v3627
        %v3660 = vunpack.c.l.b16 %v3628
        %v3661 = vunpack.c.l.b16 %v3629
        %v3662 = vunpack.c.l.b16 %v3630
        %v3663 = vunpack.c.l.b16 %v3631
        %v3664 = vunpack.c.l.b16 %v3632
        %v3665 = vunpack.c.l.b16 %v3633
        %v3666 = vunpack.c.l.b16 %v3634
        %v3667 = vunpack.c.l.b16 %v3635
        %v3668 = vunpack.c.l.b16 %v3636
        %v3669 = vunpack.c.l.b16 %v3637
        %v3670 = vunpack.c.l.b16 %v3638
        %v3671 = vunpack.c.l.b16 %v3639
        %v3672 = vunpack.c.l.b16 %v3640
        %v3673 = vunpack.c.l.b16 %v3641
        %v3674 = vunpack.c.l.b16 %v3642
        %v3675 = vpack.c.b16 %v3660, %v3659
        %v3676 = vpack.c.b16 %v3662, %v3661
        %v3677 = vpack.c.b16 %v3664, %v3663
        %v3678 = vpack.c.b16 %v3666, %v3665
        %v3679 = vpack.c.b16 %v3668, %v3667
        %v3680 = vpack.c.b16 %v3670, %v3669
        %v3681 = vpack.c.b16 %v3672, %v3671
        %v3682 = vpack.c.b16 %v3674, %v3673
        %3691 = vmatprep.subr.bf16.mxu0 0
        %3692 = vmatpush1.bf16.msra.mxu0 %v3675
        %3693 = vmatprep.subr.bf16.mxu0 0
        %3694 = vmatpush1.bf16.msra.mxu0 %v3676
        %3695 = vmatprep.subr.bf16.mxu0 0
        %3696 = vmatpush1.bf16.msra.mxu0 %v3677
        %3697 = vmatprep.subr.bf16.mxu0 0
        %3698 = vmatpush1.bf16.msra.mxu0 %v3678
        %3699 = vmatprep.subr.bf16.mxu0 0
        %3700 = vmatpush1.bf16.msra.mxu0 %v3679
        %3701 = vmatprep.subr.bf16.mxu0 0
        %3702 = vmatpush1.bf16.msra.mxu0 %v3680
        %3703 = vmatprep.subr.bf16.mxu0 0
        %3704 = vmatpush1.bf16.msra.mxu0 %v3681
        %3705 = vmatprep.subr.bf16.mxu0 0
        %3706 = vmatpush1.bf16.msra.mxu0 %v3682
        %3707 = vmatprep.subr.bf16.mxu0 0
        %3708 = vmatpush1.bf16.msra.mxu0 0
        %3709 = vmatprep.subr.bf16.mxu0 0
        %3710 = vmatpush1.bf16.msra.mxu0 0
        %3711 = vmatprep.subr.bf16.mxu0 0
        %3712 = vmatpush1.bf16.msra.mxu0 0
        %3713 = vmatprep.subr.bf16.mxu0 0
        %3714 = vmatpush1.bf16.msra.mxu0 0
        %3715 = vmatprep.subr.bf16.mxu0 0
        %3716 = vmatpush1.bf16.msra.mxu0 0
        %3717 = vmatprep.subr.bf16.mxu0 0
        %3718 = vmatpush1.bf16.msra.mxu0 0
        %3719 = vmatprep.subr.bf16.mxu0 0
        %3720 = vmatpush1.bf16.msra.mxu0 0
        %3721 = vmatprep.subr.bf16.mxu0 0
        %3722 = vmatpush1.bf16.msra.mxu0 0
        %3723 = vmatprep.mubr.bf16.mxu0 0
        %3724 = vmatmul.mubr.bf16.gmra.mrb[0].mxu0 %v2656
        %v3725 = vpop.f32.mrb[0].mxu0
        %v3726 = vadd.f32 0.0, %v3725
        %v3727 = vpop.f32.mrb[0].mxu0
        %v3728 = vpop.f32.mrb[0].mxu0
        %v3729 = vadd.f32 0.0, %v3728
        %v3730 = vpop.f32.mrb[0].mxu0
        %3731 = vmatprep.mubr.bf16.mxu0 0
        %3732 = vmatmul.mubr.bf16.gmra.mrb[0].mxu0 %v2657
        %v3733 = vpop.f32.mrb[0].mxu0
        %v3734 = vadd.f32 0.0, %v3733
        %v3735 = vpop.f32.mrb[0].mxu0
        %v3736 = vpop.f32.mrb[0].mxu0
        %v3737 = vadd.f32 0.0, %v3736
        %v3738 = vpop.f32.mrb[0].mxu0
        %3739 = vmatprep.mubr.bf16.mxu0 0
        %3740 = vmatmul.mubr.bf16.gmra.mrb[0].mxu0 %v2658
        %v3741 = vpop.f32.mrb[0].mxu0
        %v3742 = vadd.f32 0.0, %v3741
        %v3743 = vpop.f32.mrb[0].mxu0
        %v3744 = vpop.f32.mrb[0].mxu0
        %v3745 = vadd.f32 0.0, %v3744
        %v3746 = vpop.f32.mrb[0].mxu0
        %3747 = vmatprep.mubr.bf16.mxu0 0
        %3748 = vmatmul.mubr.bf16.gmra.mrb[0].mxu0 %v2659
        %v3749 = vpop.f32.mrb[0].mxu0
        %v3750 = vadd.f32 0.0, %v3749
        %v3751 = vpop.f32.mrb[0].mxu0
        %v3752 = vpop.f32.mrb[0].mxu0
        %v3753 = vadd.f32 0.0, %v3752
        %v3754 = vpop.f32.mrb[0].mxu0
        %3755 = vdwg.mxu0
        %v3756 = vpack.c.bf16 %v3729, %v3726
        %v3757 = vpack.c.bf16 %v3737, %v3734
        %v3758 = vpack.c.bf16 %v3745, %v3742
        %v3759 = vpack.c.bf16 %v3753, %v3750
        %3760 = vst [vmem:[#allocation3 + $0xe0] sm:$0xff] %v3756
        %3761 = vst [vmem:[#allocation3 + $0xe8] sm:$0xff] %v3757
        %3762 = vst [vmem:[#allocation3 + $0xf0] sm:$0xff] %v3758
        %3763 = vst [vmem:[#allocation3 + $0xf8] sm:$0xff] %v3759
        %s3764 = scalar_lea.vmem [#allocation9], 1152
        %v3765 = vld [vmem:[%s3764] sm:$0xf]
        %v3766 = vld [vmem:[%s3764 + $0x4] sm:$0xf]
        %v3767 = vld [vmem:[%s3764 + $0x8] sm:$0xf]
        %v3768 = vld [vmem:[%s3764 + $0xc] sm:$0xf]
        %v3769 = vld [vmem:[%s3764 + $0x10] sm:$0xf]
        %v3770 = vld [vmem:[%s3764 + $0x14] sm:$0xf]
        %v3771 = vld [vmem:[%s3764 + $0x18] sm:$0xf]
        %v3772 = vld [vmem:[%s3764 + $0x1c] sm:$0xf]
        %v3773 = vld [vmem:[%s3764 + $0x20] sm:$0xf]
        %v3774 = vld [vmem:[%s3764 + $0x24] sm:$0xf]
        %v3775 = vld [vmem:[%s3764 + $0x28] sm:$0xf]
        %v3776 = vld [vmem:[%s3764 + $0x2c] sm:$0xf]
        %v3777 = vld [vmem:[%s3764 + $0x30] sm:$0xf]
        %v3778 = vld [vmem:[%s3764 + $0x34] sm:$0xf]
        %v3779 = vld [vmem:[%s3764 + $0x38] sm:$0xf]
        %v3780 = vld [vmem:[%s3764 + $0x3c] sm:$0xf]
        %v3797 = vunpack.c.l.b16 %v3765
        %v3798 = vunpack.c.l.b16 %v3766
        %v3799 = vunpack.c.l.b16 %v3767
        %v3800 = vunpack.c.l.b16 %v3768
        %v3801 = vunpack.c.l.b16 %v3769
        %v3802 = vunpack.c.l.b16 %v3770
        %v3803 = vunpack.c.l.b16 %v3771
        %v3804 = vunpack.c.l.b16 %v3772
        %v3805 = vunpack.c.l.b16 %v3773
        %v3806 = vunpack.c.l.b16 %v3774
        %v3807 = vunpack.c.l.b16 %v3775
        %v3808 = vunpack.c.l.b16 %v3776
        %v3809 = vunpack.c.l.b16 %v3777
        %v3810 = vunpack.c.l.b16 %v3778
        %v3811 = vunpack.c.l.b16 %v3779
        %v3812 = vunpack.c.l.b16 %v3780
        %v3813 = vpack.c.b16 %v3798, %v3797
        %v3814 = vpack.c.b16 %v3800, %v3799
        %v3815 = vpack.c.b16 %v3802, %v3801
        %v3816 = vpack.c.b16 %v3804, %v3803
        %v3817 = vpack.c.b16 %v3806, %v3805
        %v3818 = vpack.c.b16 %v3808, %v3807
        %v3819 = vpack.c.b16 %v3810, %v3809
        %v3820 = vpack.c.b16 %v3812, %v3811
        %3829 = vmatprep.subr.bf16.mxu0 0
        %3830 = vmatpush1.bf16.msra.mxu0 %v3813
        %3831 = vmatprep.subr.bf16.mxu0 0
        %3832 = vmatpush1.bf16.msra.mxu0 %v3814
        %3833 = vmatprep.subr.bf16.mxu0 0
        %3834 = vmatpush1.bf16.msra.mxu0 %v3815
        %3835 = vmatprep.subr.bf16.mxu0 0
        %3836 = vmatpush1.bf16.msra.mxu0 %v3816
        %3837 = vmatprep.subr.bf16.mxu0 0
        %3838 = vmatpush1.bf16.msra.mxu0 %v3817
        %3839 = vmatprep.subr.bf16.mxu0 0
        %3840 = vmatpush1.bf16.msra.mxu0 %v3818
        %3841 = vmatprep.subr.bf16.mxu0 0
        %3842 = vmatpush1.bf16.msra.mxu0 %v3819
        %3843 = vmatprep.subr.bf16.mxu0 0
        %3844 = vmatpush1.bf16.msra.mxu0 %v3820
        %3845 = vmatprep.subr.bf16.mxu0 0
        %3846 = vmatpush1.bf16.msra.mxu0 0
        %3847 = vmatprep.subr.bf16.mxu0 0
        %3848 = vmatpush1.bf16.msra.mxu0 0
        %3849 = vmatprep.subr.bf16.mxu0 0
        %3850 = vmatpush1.bf16.msra.mxu0 0
        %3851 = vmatprep.subr.bf16.mxu0 0
        %3852 = vmatpush1.bf16.msra.mxu0 0
        %3853 = vmatprep.subr.bf16.mxu0 0
        %3854 = vmatpush1.bf16.msra.mxu0 0
        %3855 = vmatprep.subr.bf16.mxu0 0
        %3856 = vmatpush1.bf16.msra.mxu0 0
        %3857 = vmatprep.subr.bf16.mxu0 0
        %3858 = vmatpush1.bf16.msra.mxu0 0
        %3859 = vmatprep.subr.bf16.mxu0 0
        %3860 = vmatpush1.bf16.msra.mxu0 0
        %3861 = vmatprep.mubr.bf16.mxu0 0
        %3862 = vmatmul.mubr.bf16.gmra.mrb[0].mxu0 %v2656
        %v3863 = vpop.f32.mrb[0].mxu0
        %v3864 = vadd.f32 0.0, %v3863
        %v3865 = vpop.f32.mrb[0].mxu0
        %v3866 = vpop.f32.mrb[0].mxu0
        %v3867 = vadd.f32 0.0, %v3866
        %v3868 = vpop.f32.mrb[0].mxu0
        %3869 = vmatprep.mubr.bf16.mxu0 0
        %3870 = vmatmul.mubr.bf16.gmra.mrb[0].mxu0 %v2657
        %v3871 = vpop.f32.mrb[0].mxu0
        %v3872 = vadd.f32 0.0, %v3871
        %v3873 = vpop.f32.mrb[0].mxu0
        %v3874 = vpop.f32.mrb[0].mxu0
        %v3875 = vadd.f32 0.0, %v3874
        %v3876 = vpop.f32.mrb[0].mxu0
        %3877 = vmatprep.mubr.bf16.mxu0 0
        %3878 = vmatmul.mubr.bf16.gmra.mrb[0].mxu0 %v2658
        %v3879 = vpop.f32.mrb[0].mxu0
        %v3880 = vadd.f32 0.0, %v3879
        %v3881 = vpop.f32.mrb[0].mxu0
        %v3882 = vpop.f32.mrb[0].mxu0
        %v3883 = vadd.f32 0.0, %v3882
        %v3884 = vpop.f32.mrb[0].mxu0
        %3885 = vmatprep.mubr.bf16.mxu0 0
        %3886 = vmatmul.mubr.bf16.gmra.mrb[0].mxu0 %v2659
        %v3887 = vpop.f32.mrb[0].mxu0
        %v3888 = vadd.f32 0.0, %v3887
        %v3889 = vpop.f32.mrb[0].mxu0
        %v3890 = vpop.f32.mrb[0].mxu0
        %v3891 = vadd.f32 0.0, %v3890
        %v3892 = vpop.f32.mrb[0].mxu0
        %3893 = vdwg.mxu0
        %v3894 = vpack.c.bf16 %v3867, %v3864
        %v3895 = vpack.c.bf16 %v3875, %v3872
        %v3896 = vpack.c.bf16 %v3883, %v3880
        %v3897 = vpack.c.bf16 %v3891, %v3888
        %3898 = vst [vmem:[#allocation3 + $0x100] sm:$0xff] %v3894
        %3899 = vst [vmem:[#allocation3 + $0x108] sm:$0xff] %v3895
        %3900 = vst [vmem:[#allocation3 + $0x110] sm:$0xff] %v3896
        %3901 = vst [vmem:[#allocation3 + $0x118] sm:$0xff] %v3897
        %s3902 = scalar_lea.vmem [#allocation9], 1216
        %v3903 = vld [vmem:[%s3902] sm:$0xf]
        %v3904 = vld [vmem:[%s3902 + $0x4] sm:$0xf]
        %v3905 = vld [vmem:[%s3902 + $0x8] sm:$0xf]
        %v3906 = vld [vmem:[%s3902 + $0xc] sm:$0xf]
        %v3907 = vld [vmem:[%s3902 + $0x10] sm:$0xf]
        %v3908 = vld [vmem:[%s3902 + $0x14] sm:$0xf]
        %v3909 = vld [vmem:[%s3902 + $0x18] sm:$0xf]
        %v3910 = vld [vmem:[%s3902 + $0x1c] sm:$0xf]
        %v3911 = vld [vmem:[%s3902 + $0x20] sm:$0xf]
        %v3912 = vld [vmem:[%s3902 + $0x24] sm:$0xf]
        %v3913 = vld [vmem:[%s3902 + $0x28] sm:$0xf]
        %v3914 = vld [vmem:[%s3902 + $0x2c] sm:$0xf]
        %v3915 = vld [vmem:[%s3902 + $0x30] sm:$0xf]
        %v3916 = vld [vmem:[%s3902 + $0x34] sm:$0xf]
        %v3917 = vld [vmem:[%s3902 + $0x38] sm:$0xf]
        %v3918 = vld [vmem:[%s3902 + $0x3c] sm:$0xf]
        %v3935 = vunpack.c.l.b16 %v3903
        %v3936 = vunpack.c.l.b16 %v3904
        %v3937 = vunpack.c.l.b16 %v3905
        %v3938 = vunpack.c.l.b16 %v3906
        %v3939 = vunpack.c.l.b16 %v3907
        %v3940 = vunpack.c.l.b16 %v3908
        %v3941 = vunpack.c.l.b16 %v3909
        %v3942 = vunpack.c.l.b16 %v3910
        %v3943 = vunpack.c.l.b16 %v3911
        %v3944 = vunpack.c.l.b16 %v3912
        %v3945 = vunpack.c.l.b16 %v3913
        %v3946 = vunpack.c.l.b16 %v3914
        %v3947 = vunpack.c.l.b16 %v3915
        %v3948 = vunpack.c.l.b16 %v3916
        %v3949 = vunpack.c.l.b16 %v3917
        %v3950 = vunpack.c.l.b16 %v3918
        %v3951 = vpack.c.b16 %v3936, %v3935
        %v3952 = vpack.c.b16 %v3938, %v3937
        %v3953 = vpack.c.b16 %v3940, %v3939
        %v3954 = vpack.c.b16 %v3942, %v3941
        %v3955 = vpack.c.b16 %v3944, %v3943
        %v3956 = vpack.c.b16 %v3946, %v3945
        %v3957 = vpack.c.b16 %v3948, %v3947
        %v3958 = vpack.c.b16 %v3950, %v3949
        %3967 = vmatprep.subr.bf16.mxu0 0
        %3968 = vmatpush1.bf16.msra.mxu0 %v3951
        %3969 = vmatprep.subr.bf16.mxu0 0
        %3970 = vmatpush1.bf16.msra.mxu0 %v3952
        %3971 = vmatprep.subr.bf16.mxu0 0
        %3972 = vmatpush1.bf16.msra.mxu0 %v3953
        %3973 = vmatprep.subr.bf16.mxu0 0
        %3974 = vmatpush1.bf16.msra.mxu0 %v3954
        %3975 = vmatprep.subr.bf16.mxu0 0
        %3976 = vmatpush1.bf16.msra.mxu0 %v3955
        %3977 = vmatprep.subr.bf16.mxu0 0
        %3978 = vmatpush1.bf16.msra.mxu0 %v3956
        %3979 = vmatprep.subr.bf16.mxu0 0
        %3980 = vmatpush1.bf16.msra.mxu0 %v3957
        %3981 = vmatprep.subr.bf16.mxu0 0
        %3982 = vmatpush1.bf16.msra.mxu0 %v3958
        %3983 = vmatprep.subr.bf16.mxu0 0
        %3984 = vmatpush1.bf16.msra.mxu0 0
        %3985 = vmatprep.subr.bf16.mxu0 0
        %3986 = vmatpush1.bf16.msra.mxu0 0
        %3987 = vmatprep.subr.bf16.mxu0 0
        %3988 = vmatpush1.bf16.msra.mxu0 0
        %3989 = vmatprep.subr.bf16.mxu0 0
        %3990 = vmatpush1.bf16.msra.mxu0 0
        %3991 = vmatprep.subr.bf16.mxu0 0
        %3992 = vmatpush1.bf16.msra.mxu0 0
        %3993 = vmatprep.subr.bf16.mxu0 0
        %3994 = vmatpush1.bf16.msra.mxu0 0
        %3995 = vmatprep.subr.bf16.mxu0 0
        %3996 = vmatpush1.bf16.msra.mxu0 0
        %3997 = vmatprep.subr.bf16.mxu0 0
        %3998 = vmatpush1.bf16.msra.mxu0 0
        %3999 = vmatprep.mubr.bf16.mxu0 0
        %4000 = vmatmul.mubr.bf16.gmra.mrb[0].mxu0 %v2656
        %v4001 = vpop.f32.mrb[0].mxu0
        %v4002 = vadd.f32 0.0, %v4001
        %v4003 = vpop.f32.mrb[0].mxu0
        %v4004 = vpop.f32.mrb[0].mxu0
        %v4005 = vadd.f32 0.0, %v4004
        %v4006 = vpop.f32.mrb[0].mxu0
        %4007 = vmatprep.mubr.bf16.mxu0 0
        %4008 = vmatmul.mubr.bf16.gmra.mrb[0].mxu0 %v2657
        %v4009 = vpop.f32.mrb[0].mxu0
        %v4010 = vadd.f32 0.0, %v4009
        %v4011 = vpop.f32.mrb[0].mxu0
        %v4012 = vpop.f32.mrb[0].mxu0
        %v4013 = vadd.f32 0.0, %v4012
        %v4014 = vpop.f32.mrb[0].mxu0
        %4015 = vmatprep.mubr.bf16.mxu0 0
        %4016 = vmatmul.mubr.bf16.gmra.mrb[0].mxu0 %v2658
        %v4017 = vpop.f32.mrb[0].mxu0
        %v4018 = vadd.f32 0.0, %v4017
        %v4019 = vpop.f32.mrb[0].mxu0
        %v4020 = vpop.f32.mrb[0].mxu0
        %v4021 = vadd.f32 0.0, %v4020
        %v4022 = vpop.f32.mrb[0].mxu0
        %4023 = vmatprep.mubr.bf16.mxu0 0
        %4024 = vmatmul.mubr.bf16.gmra.mrb[0].mxu0 %v2659
        %v4025 = vpop.f32.mrb[0].mxu0
        %v4026 = vadd.f32 0.0, %v4025
        %v4027 = vpop.f32.mrb[0].mxu0
        %v4028 = vpop.f32.mrb[0].mxu0
        %v4029 = vadd.f32 0.0, %v4028
        %v4030 = vpop.f32.mrb[0].mxu0
        %4031 = vdwg.mxu0
        %v4032 = vpack.c.bf16 %v4005, %v4002
        %v4033 = vpack.c.bf16 %v4013, %v4010
        %v4034 = vpack.c.bf16 %v4021, %v4018
        %v4035 = vpack.c.bf16 %v4029, %v4026
        %4036 = vst [vmem:[#allocation3 + $0x120] sm:$0xff] %v4032
        %4037 = vst [vmem:[#allocation3 + $0x128] sm:$0xff] %v4033
        %4038 = vst [vmem:[#allocation3 + $0x130] sm:$0xff] %v4034
        %4039 = vst [vmem:[#allocation3 + $0x138] sm:$0xff] %v4035
        %v4040 = vld [vmem:[%s363] sm:$0xff]
        %v4041 = vld [vmem:[%s363 + $0x8] sm:$0xff]
        %v4042 = vld [vmem:[%s363 + $0x10] sm:$0xf]
        %v4043 = vld [vmem:[%s363 + $0x14] sm:$0xff]
        %v4044 = vld [vmem:[%s363 + $0x1c] sm:$0xff]
        %v4045 = vld [vmem:[%s363 + $0x24] sm:$0xf]
        %v4046 = vld [vmem:[%s363 + $0x28] sm:$0xff]
        %v4047 = vld [vmem:[%s363 + $0x30] sm:$0xff]
        %v4048 = vld [vmem:[%s363 + $0x38] sm:$0xf]
        %v4049 = vld [vmem:[%s363 + $0x3c] sm:$0xff]
        %v4050 = vld [vmem:[%s363 + $0x44] sm:$0xff]
        %v4051 = vld [vmem:[%s363 + $0x4c] sm:$0xf]
        %v4052 = vld [vmem:[%s363 + $0x50] sm:$0xff]
        %v4053 = vld [vmem:[%s363 + $0x58] sm:$0xff]
        %v4054 = vld [vmem:[%s363 + $0x60] sm:$0xf]
        %v4055 = vld [vmem:[%s363 + $0x64] sm:$0xff]
        %v4056 = vld [vmem:[%s363 + $0x6c] sm:$0xff]
        %v4057 = vld [vmem:[%s363 + $0x74] sm:$0xf]
        %v4058 = vld [vmem:[%s363 + $0x78] sm:$0xff]
        %v4059 = vld [vmem:[%s363 + $0x80] sm:$0xff]
        %v4060 = vld [vmem:[%s363 + $0x88] sm:$0xf]
        %v4061 = vld [vmem:[%s363 + $0x8c] sm:$0xff]
        %v4062 = vld [vmem:[%s363 + $0x94] sm:$0xff]
        %v4063 = vld [vmem:[%s363 + $0x9c] sm:$0xf]
        %v4064 = vld [vmem:[#allocation3] sm:$0xff]
        %v4065 = vld [vmem:[#allocation3 + $0x8] sm:$0xff]
        %v4066 = vld [vmem:[#allocation3 + $0x10] sm:$0xff]
        %v4067 = vld [vmem:[#allocation3 + $0x18] sm:$0xff]
        %v4068 = vld [vmem:[#allocation3 + $0x20] sm:$0xff]
        %v4069 = vld [vmem:[#allocation3 + $0x28] sm:$0xff]
        %v4070 = vld [vmem:[#allocation3 + $0x30] sm:$0xff]
        %v4071 = vld [vmem:[#allocation3 + $0x38] sm:$0xff]
        %v4072 = vld [vmem:[#allocation3 + $0x40] sm:$0xff]
        %v4073 = vld [vmem:[#allocation3 + $0x48] sm:$0xff]
        %v4074 = vld [vmem:[#allocation3 + $0x50] sm:$0xff]
        %v4075 = vld [vmem:[#allocation3 + $0x58] sm:$0xff]
        %v4076 = vld [vmem:[#allocation3 + $0x60] sm:$0xff]
        %v4077 = vld [vmem:[#allocation3 + $0x68] sm:$0xff]
        %v4078 = vld [vmem:[#allocation3 + $0x70] sm:$0xff]
        %v4079 = vld [vmem:[#allocation3 + $0x78] sm:$0xff]
        %v4080 = vld [vmem:[#allocation3 + $0x80] sm:$0xff]
        %v4081 = vld [vmem:[#allocation3 + $0x88] sm:$0xff]
        %v4082 = vld [vmem:[#allocation3 + $0x90] sm:$0xff]
        %v4083 = vld [vmem:[#allocation3 + $0x98] sm:$0xff]
        %v4084 = vld [vmem:[#allocation3 + $0xa0] sm:$0xff]
        %v4085 = vld [vmem:[#allocation3 + $0xa8] sm:$0xff]
        %v4086 = vld [vmem:[#allocation3 + $0xb0] sm:$0xff]
        %v4087 = vld [vmem:[#allocation3 + $0xb8] sm:$0xff]
        %v4088 = vld [vmem:[#allocation3 + $0xc0] sm:$0xff]
        %v4089 = vld [vmem:[#allocation3 + $0xc8] sm:$0xff]
        %v4090 = vld [vmem:[#allocation3 + $0xd0] sm:$0xff]
        %v4091 = vld [vmem:[#allocation3 + $0xd8] sm:$0xff]
        %v4092 = vld [vmem:[#allocation3 + $0xe0] sm:$0xff]
        %v4093 = vld [vmem:[#allocation3 + $0xe8] sm:$0xff]
        %v4094 = vld [vmem:[#allocation3 + $0xf0] sm:$0xff]
        %v4095 = vld [vmem:[#allocation3 + $0xf8] sm:$0xff]
        %v4096 = vld [vmem:[#allocation3 + $0x100] sm:$0xff]
        %v4097 = vld [vmem:[#allocation3 + $0x108] sm:$0xff]
        %v4098 = vld [vmem:[#allocation3 + $0x110] sm:$0xff]
        %v4099 = vld [vmem:[#allocation3 + $0x118] sm:$0xff]
        %v4100 = vld [vmem:[#allocation3 + $0x120] sm:$0xff]
        %v4101 = vld [vmem:[#allocation3 + $0x128] sm:$0xff]
        %v4102 = vld [vmem:[#allocation3 + $0x130] sm:$0xff]
        %v4103 = vld [vmem:[#allocation3 + $0x138] sm:$0xff]
        %v4128 = vunpack.c.l.b16 %v4040
        %v4129 = vunpack.c.h.b16 %v4040
        %v4130 = vunpack.c.l.b16 %v4041
        %v4131 = vunpack.c.h.b16 %v4041
        %v4132 = vunpack.c.l.b16 %v4042
        %v4133 = vunpack.c.l.b16 %v4043
        %v4134 = vunpack.c.h.b16 %v4043
        %v4135 = vunpack.c.l.b16 %v4044
        %v4136 = vunpack.c.h.b16 %v4044
        %v4137 = vunpack.c.l.b16 %v4045
        %v4138 = vunpack.c.l.b16 %v4046
        %v4139 = vunpack.c.h.b16 %v4046
        %v4140 = vunpack.c.l.b16 %v4047
        %v4141 = vunpack.c.h.b16 %v4047
        %v4142 = vunpack.c.l.b16 %v4048
        %v4143 = vunpack.c.l.b16 %v4049
        %v4144 = vunpack.c.h.b16 %v4049
        %v4145 = vunpack.c.l.b16 %v4050
        %v4146 = vunpack.c.h.b16 %v4050
        %v4147 = vunpack.c.l.b16 %v4051
        %v4148 = vunpack.c.l.b16 %v4052
        %v4149 = vunpack.c.h.b16 %v4052
        %v4150 = vunpack.c.l.b16 %v4053
        %v4151 = vunpack.c.h.b16 %v4053
        %v4152 = vunpack.c.l.b16 %v4054
        %v4153 = vunpack.c.l.b16 %v4055
        %v4154 = vunpack.c.h.b16 %v4055
        %v4155 = vunpack.c.l.b16 %v4056
        %v4156 = vunpack.c.h.b16 %v4056
        %v4157 = vunpack.c.l.b16 %v4057
        %v4158 = vunpack.c.l.b16 %v4058
        %v4159 = vunpack.c.h.b16 %v4058
        %v4160 = vunpack.c.l.b16 %v4059
        %v4161 = vunpack.c.h.b16 %v4059
        %v4162 = vunpack.c.l.b16 %v4060
        %v4163 = vunpack.c.l.b16 %v4061
        %v4164 = vunpack.c.h.b16 %v4061
        %v4165 = vunpack.c.l.b16 %v4062
        %v4166 = vunpack.c.h.b16 %v4062
        %v4167 = vunpack.c.l.b16 %v4063
        %v4168 = vpack.c.b16 %v4133, %v4128
        %v4169 = vpack.c.b16 %v4134, %v4129
        %v4170 = vpack.c.b16 %v4135, %v4130
        %v4171 = vpack.c.b16 %v4136, %v4131
        %v4172 = vpack.c.b16 %v4137, %v4132
        %v4173 = vpack.c.b16 %v4143, %v4138
        %v4174 = vpack.c.b16 %v4144, %v4139
        %v4175 = vpack.c.b16 %v4145, %v4140
        %v4176 = vpack.c.b16 %v4146, %v4141
        %v4177 = vpack.c.b16 %v4147, %v4142
        %v4178 = vpack.c.b16 %v4153, %v4148
        %v4179 = vpack.c.b16 %v4154, %v4149
        %v4180 = vpack.c.b16 %v4155, %v4150
        %v4181 = vpack.c.b16 %v4156, %v4151
        %v4182 = vpack.c.b16 %v4157, %v4152
        %v4183 = vpack.c.b16 %v4163, %v4158
        %v4184 = vpack.c.b16 %v4164, %v4159
        %v4185 = vpack.c.b16 %v4165, %v4160
        %v4186 = vpack.c.b16 %v4166, %v4161
        %v4187 = vpack.c.b16 %v4167, %v4162
        %4208 = vmatprep.subr.bf16.mxu0 0
        %4209 = vmatpush1.bf16.msra.mxu0 %v4064
        %4210 = vmatprep.subr.bf16.mxu0 0
        %4211 = vmatpush1.bf16.msra.mxu0 %v4065
        %4212 = vmatprep.subr.bf16.mxu0 0
        %4213 = vmatpush1.bf16.msra.mxu0 %v4066
        %4214 = vmatprep.subr.bf16.mxu0 0
        %4215 = vmatpush1.bf16.msra.mxu0 %v4067
        %4216 = vmatprep.subr.bf16.mxu0 0
        %4217 = vmatpush1.bf16.msra.mxu0 %v4068
        %4218 = vmatprep.subr.bf16.mxu0 0
        %4219 = vmatpush1.bf16.msra.mxu0 %v4069
        %4220 = vmatprep.subr.bf16.mxu0 0
        %4221 = vmatpush1.bf16.msra.mxu0 %v4070
        %4222 = vmatprep.subr.bf16.mxu0 0
        %4223 = vmatpush1.bf16.msra.mxu0 %v4071
        %4224 = vmatprep.subr.bf16.mxu0 0
        %4225 = vmatpush1.bf16.msra.mxu0 %v4072
        %4226 = vmatprep.subr.bf16.mxu0 0
        %4227 = vmatpush1.bf16.msra.mxu0 %v4073
        %4228 = vmatprep.subr.bf16.mxu0 0
        %4229 = vmatpush1.bf16.msra.mxu0 %v4074
        %4230 = vmatprep.subr.bf16.mxu0 0
        %4231 = vmatpush1.bf16.msra.mxu0 %v4075
        %4232 = vmatprep.subr.bf16.mxu0 0
        %4233 = vmatpush1.bf16.msra.mxu0 %v4076
        %4234 = vmatprep.subr.bf16.mxu0 0
        %4235 = vmatpush1.bf16.msra.mxu0 %v4077
        %4236 = vmatprep.subr.bf16.mxu0 0
        %4237 = vmatpush1.bf16.msra.mxu0 %v4078
        %4238 = vmatprep.subr.bf16.mxu0 0
        %4239 = vmatpush1.bf16.msra.mxu0 %v4079
        %4240 = vmatprep.mubr.bf16.mxu0 %v4169
        %4241 = vmatmul.mubr.bf16.gmra.mrb[0].mxu0 %v4168
        %v4242 = vpop.f32.mrb[0].mxu0
        %v4243 = vadd.f32 0.0, %v4242
        %v4244 = vpop.f32.mrb[0].mxu0
        %v4245 = vpop.f32.mrb[0].mxu0
        %v4246 = vadd.f32 0.0, %v4245
        %v4247 = vpop.f32.mrb[0].mxu0
        %4248 = vmatprep.mubr.bf16.mxu0 %v4174
        %4249 = vmatmul.mubr.bf16.gmra.mrb[0].mxu0 %v4173
        %v4250 = vpop.f32.mrb[0].mxu0
        %v4251 = vadd.f32 0.0, %v4250
        %v4252 = vpop.f32.mrb[0].mxu0
        %v4253 = vpop.f32.mrb[0].mxu0
        %v4254 = vadd.f32 0.0, %v4253
        %v4255 = vpop.f32.mrb[0].mxu0
        %4256 = vmatprep.mubr.bf16.mxu0 %v4179
        %4257 = vmatmul.mubr.bf16.gmra.mrb[0].mxu0 %v4178
        %v4258 = vpop.f32.mrb[0].mxu0
        %v4259 = vadd.f32 0.0, %v4258
        %v4260 = vpop.f32.mrb[0].mxu0
        %v4261 = vpop.f32.mrb[0].mxu0
        %v4262 = vadd.f32 0.0, %v4261
        %v4263 = vpop.f32.mrb[0].mxu0
        %4264 = vmatprep.mubr.bf16.mxu0 %v4184
        %4265 = vmatmul.mubr.bf16.gmra.mrb[0].mxu0 %v4183
        %v4266 = vpop.f32.mrb[0].mxu0
        %v4267 = vadd.f32 0.0, %v4266
        %v4268 = vpop.f32.mrb[0].mxu0
        %v4269 = vpop.f32.mrb[0].mxu0
        %v4270 = vadd.f32 0.0, %v4269
        %v4271 = vpop.f32.mrb[0].mxu0
        %4272 = vdwg.mxu0
        %4273 = vmatprep.subr.bf16.mxu0 0
        %4274 = vmatpush1.bf16.msra.mxu0 %v4080
        %4275 = vmatprep.subr.bf16.mxu0 0
        %4276 = vmatpush1.bf16.msra.mxu0 %v4081
        %4277 = vmatprep.subr.bf16.mxu0 0
        %4278 = vmatpush1.bf16.msra.mxu0 %v4082
        %4279 = vmatprep.subr.bf16.mxu0 0
        %4280 = vmatpush1.bf16.msra.mxu0 %v4083
        %4281 = vmatprep.subr.bf16.mxu0 0
        %4282 = vmatpush1.bf16.msra.mxu0 %v4084
        %4283 = vmatprep.subr.bf16.mxu0 0
        %4284 = vmatpush1.bf16.msra.mxu0 %v4085
        %4285 = vmatprep.subr.bf16.mxu0 0
        %4286 = vmatpush1.bf16.msra.mxu0 %v4086
        %4287 = vmatprep.subr.bf16.mxu0 0
        %4288 = vmatpush1.bf16.msra.mxu0 %v4087
        %4289 = vmatprep.subr.bf16.mxu0 0
        %4290 = vmatpush1.bf16.msra.mxu0 %v4088
        %4291 = vmatprep.subr.bf16.mxu0 0
        %4292 = vmatpush1.bf16.msra.mxu0 %v4089
        %4293 = vmatprep.subr.bf16.mxu0 0
        %4294 = vmatpush1.bf16.msra.mxu0 %v4090
        %4295 = vmatprep.subr.bf16.mxu0 0
        %4296 = vmatpush1.bf16.msra.mxu0 %v4091
        %4297 = vmatprep.subr.bf16.mxu0 0
        %4298 = vmatpush1.bf16.msra.mxu0 %v4092
        %4299 = vmatprep.subr.bf16.mxu0 0
        %4300 = vmatpush1.bf16.msra.mxu0 %v4093
        %4301 = vmatprep.subr.bf16.mxu0 0
        %4302 = vmatpush1.bf16.msra.mxu0 %v4094
        %4303 = vmatprep.subr.bf16.mxu0 0
        %4304 = vmatpush1.bf16.msra.mxu0 %v4095
        %4305 = vmatprep.mubr.bf16.mxu0 %v4171
        %4306 = vmatmul.mubr.bf16.gmra.mrb[0].mxu0 %v4170
        %v4307 = vpop.f32.mrb[0].mxu0
        %v4308 = vadd.f32 %v4243, %v4307
        %v4309 = vpop.f32.mrb[0].mxu0
        %v4310 = vpop.f32.mrb[0].mxu0
        %v4311 = vadd.f32 %v4246, %v4310
        %v4312 = vpop.f32.mrb[0].mxu0
        %4313 = vmatprep.mubr.bf16.mxu0 %v4176
        %4314 = vmatmul.mubr.bf16.gmra.mrb[0].mxu0 %v4175
        %v4315 = vpop.f32.mrb[0].mxu0
        %v4316 = vadd.f32 %v4251, %v4315
        %v4317 = vpop.f32.mrb[0].mxu0
        %v4318 = vpop.f32.mrb[0].mxu0
        %v4319 = vadd.f32 %v4254, %v4318
        %v4320 = vpop.f32.mrb[0].mxu0
        %4321 = vmatprep.mubr.bf16.mxu0 %v4181
        %4322 = vmatmul.mubr.bf16.gmra.mrb[0].mxu0 %v4180
        %v4323 = vpop.f32.mrb[0].mxu0
        %v4324 = vadd.f32 %v4259, %v4323
        %v4325 = vpop.f32.mrb[0].mxu0
        %v4326 = vpop.f32.mrb[0].mxu0
        %v4327 = vadd.f32 %v4262, %v4326
        %v4328 = vpop.f32.mrb[0].mxu0
        %4329 = vmatprep.mubr.bf16.mxu0 %v4186
        %4330 = vmatmul.mubr.bf16.gmra.mrb[0].mxu0 %v4185
        %v4331 = vpop.f32.mrb[0].mxu0
        %v4332 = vadd.f32 %v4267, %v4331
        %v4333 = vpop.f32.mrb[0].mxu0
        %v4334 = vpop.f32.mrb[0].mxu0
        %v4335 = vadd.f32 %v4270, %v4334
        %v4336 = vpop.f32.mrb[0].mxu0
        %4337 = vdwg.mxu0
        %4338 = vmatprep.subr.bf16.mxu0 0
        %4339 = vmatpush1.bf16.msra.mxu0 %v4096
        %4340 = vmatprep.subr.bf16.mxu0 0
        %4341 = vmatpush1.bf16.msra.mxu0 %v4097
        %4342 = vmatprep.subr.bf16.mxu0 0
        %4343 = vmatpush1.bf16.msra.mxu0 %v4098
        %4344 = vmatprep.subr.bf16.mxu0 0
        %4345 = vmatpush1.bf16.msra.mxu0 %v4099
        %4346 = vmatprep.subr.bf16.mxu0 0
        %4347 = vmatpush1.bf16.msra.mxu0 %v4100
        %4348 = vmatprep.subr.bf16.mxu0 0
        %4349 = vmatpush1.bf16.msra.mxu0 %v4101
        %4350 = vmatprep.subr.bf16.mxu0 0
        %4351 = vmatpush1.bf16.msra.mxu0 %v4102
        %4352 = vmatprep.subr.bf16.mxu0 0
        %4353 = vmatpush1.bf16.msra.mxu0 %v4103
        %4354 = vmatprep.subr.bf16.mxu0 0
        %4355 = vmatpush1.bf16.msra.mxu0 0
        %4356 = vmatprep.subr.bf16.mxu0 0
        %4357 = vmatpush1.bf16.msra.mxu0 0
        %4358 = vmatprep.subr.bf16.mxu0 0
        %4359 = vmatpush1.bf16.msra.mxu0 0
        %4360 = vmatprep.subr.bf16.mxu0 0
        %4361 = vmatpush1.bf16.msra.mxu0 0
        %4362 = vmatprep.subr.bf16.mxu0 0
        %4363 = vmatpush1.bf16.msra.mxu0 0
        %4364 = vmatprep.subr.bf16.mxu0 0
        %4365 = vmatpush1.bf16.msra.mxu0 0
        %4366 = vmatprep.subr.bf16.mxu0 0
        %4367 = vmatpush1.bf16.msra.mxu0 0
        %4368 = vmatprep.subr.bf16.mxu0 0
        %4369 = vmatpush1.bf16.msra.mxu0 0
        %4370 = vmatprep.mubr.bf16.mxu0 0
        %4371 = vmatmul.mubr.bf16.gmra.mrb[0].mxu0 %v4172
        %v4372 = vpop.f32.mrb[0].mxu0
        %v4373 = vadd.f32 %v4308, %v4372
        %v4374 = vpop.f32.mrb[0].mxu0
        %v4375 = vpop.f32.mrb[0].mxu0
        %v4376 = vadd.f32 %v4311, %v4375
        %v4377 = vpop.f32.mrb[0].mxu0
        %4378 = vmatprep.mubr.bf16.mxu0 0
        %4379 = vmatmul.mubr.bf16.gmra.mrb[0].mxu0 %v4177
        %v4380 = vpop.f32.mrb[0].mxu0
        %v4381 = vadd.f32 %v4316, %v4380
        %v4382 = vpop.f32.mrb[0].mxu0
        %v4383 = vpop.f32.mrb[0].mxu0
        %v4384 = vadd.f32 %v4319, %v4383
        %v4385 = vpop.f32.mrb[0].mxu0
        %4386 = vmatprep.mubr.bf16.mxu0 0
        %4387 = vmatmul.mubr.bf16.gmra.mrb[0].mxu0 %v4182
        %v4388 = vpop.f32.mrb[0].mxu0
        %v4389 = vadd.f32 %v4324, %v4388
        %v4390 = vpop.f32.mrb[0].mxu0
        %v4391 = vpop.f32.mrb[0].mxu0
        %v4392 = vadd.f32 %v4327, %v4391
        %v4393 = vpop.f32.mrb[0].mxu0
        %4394 = vmatprep.mubr.bf16.mxu0 0
        %4395 = vmatmul.mubr.bf16.gmra.mrb[0].mxu0 %v4187
        %v4396 = vpop.f32.mrb[0].mxu0
        %v4397 = vadd.f32 %v4332, %v4396
        %v4398 = vpop.f32.mrb[0].mxu0
        %v4399 = vpop.f32.mrb[0].mxu0
        %v4400 = vadd.f32 %v4335, %v4399
        %v4401 = vpop.f32.mrb[0].mxu0
        %4402 = vdwg.mxu0
        %v4403 = vadd.f32 %v2618, %v4373
        %v4404 = vadd.f32 %v2623, %v4376
        %v4405 = vadd.f32 %v2628, %v4381
        %v4406 = vadd.f32 %v2633, %v4384
        %v4407 = vadd.f32 %v2638, %v4389
        %v4408 = vadd.f32 %v2643, %v4392
        %v4409 = vadd.f32 %v2648, %v4397
        %v4410 = vadd.f32 %v2653, %v4400
        %v4411 = vmax.f32 %v4403, 0.0
        %v4412 = vmax.f32 %v4404, 0.0
        %v4413 = vmax.f32 %v4405, 0.0
        %v4414 = vmax.f32 %v4406, 0.0
        %v4415 = vmax.f32 %v4407, 0.0
        %v4416 = vmax.f32 %v4408, 0.0
        %v4417 = vmax.f32 %v4409, 0.0
        %v4418 = vmax.f32 %v4410, 0.0
        %4419 = vst [vmem:[#allocation2] sm:$0xff] %v4411
        %4420 = vst [vmem:[#allocation2 + $0x8] sm:$0xff] %v4412
        %4421 = vst [vmem:[#allocation2 + $0x10] sm:$0xff] %v4413
        %4422 = vst [vmem:[#allocation2 + $0x18] sm:$0xff] %v4414
        %4423 = vst [vmem:[#allocation2 + $0x20] sm:$0xff] %v4415
        %4424 = vst [vmem:[#allocation2 + $0x28] sm:$0xff] %v4416
        %4425 = vst [vmem:[#allocation2 + $0x30] sm:$0xff] %v4417
        %4426 = vst [vmem:[#allocation2 + $0x38] sm:$0xff] %v4418
        %p4427 = scmp.eq.s32.totalorder %s26, 1
        // Predicated region
        $region81: #{tpu_custom_call.1} parent=55 // pred_check
          %p4428 = pneg %p4427
        $region82: #{tpu_custom_call.1} parent=55 // pred_check_branch
          %4430 = sbr.rel (%p4428) target = $region84
        $region83: #{tpu_custom_call.1} parent=55 // pred_region
          %v4431 = vld [vmem:[#allocation12] sm:$0xff]
          %v4432 = vld [vmem:[#allocation12 + $0x8] sm:$0xff]
          %v4433 = vld [vmem:[#allocation12 + $0x10] sm:$0xff]
          %v4434 = vld [vmem:[#allocation12 + $0x18] sm:$0xff]
          %v4435 = vld [vmem:[#allocation12 + $0x20] sm:$0xff]
          %v4436 = vld [vmem:[#allocation12 + $0x28] sm:$0xff]
          %v4437 = vld [vmem:[#allocation12 + $0x30] sm:$0xff]
          %v4438 = vld [vmem:[#allocation12 + $0x38] sm:$0xff]
          %v4439 = vld [vmem:[#allocation12 + $0x40] sm:$0xff]
          %v4440 = vld [vmem:[#allocation12 + $0x48] sm:$0xff]
          %v4441 = vld [vmem:[#allocation12 + $0x50] sm:$0xff]
          %v4442 = vld [vmem:[#allocation12 + $0x58] sm:$0xff]
          %v4443 = vld [vmem:[#allocation12 + $0x60] sm:$0xff]
          %v4444 = vld [vmem:[#allocation12 + $0x68] sm:$0xff]
          %v4445 = vld [vmem:[#allocation12 + $0x70] sm:$0xff]
          %v4446 = vld [vmem:[#allocation12 + $0x78] sm:$0xff]
          %v4447 = vld [vmem:[%s8] sm:$0x1]
          %v4449 = vlaneseq
          %v4450 = vshrl.u32 %v4449, 7
          %v4451 = vsub.s32 0, %v4450
          %v4452 = vrot.slane %v4447, %v4451
          %4454 = vmatprep.subr.mxu0 0.0
          %4455 = vmatpush1.msra.mxu0 %v4431
          %4456 = vmatprep.subr.mxu0 0.0
          %4457 = vmatpush1.msra.mxu0 %v4432
          %4458 = vmatprep.subr.mxu0 0.0
          %4459 = vmatpush1.msra.mxu0 %v4433
          %4460 = vmatprep.subr.mxu0 0.0
          %4461 = vmatpush1.msra.mxu0 %v4434
          %4462 = vmatprep.subr.mxu0 0.0
          %4463 = vmatpush1.msra.mxu0 %v4435
          %4464 = vmatprep.subr.mxu0 0.0
          %4465 = vmatpush1.msra.mxu0 %v4436
          %4466 = vmatprep.subr.mxu0 0.0
          %4467 = vmatpush1.msra.mxu0 %v4437
          %4468 = vmatprep.subr.mxu0 0.0
          %4469 = vmatpush1.msra.mxu0 %v4438
          %4470 = vmatprep.subr.mxu0 0.0
          %4471 = vmatpush1.msra.mxu0 %v4439
          %4472 = vmatprep.subr.mxu0 0.0
          %4473 = vmatpush1.msra.mxu0 %v4440
          %4474 = vmatprep.subr.mxu0 0.0
          %4475 = vmatpush1.msra.mxu0 %v4441
          %4476 = vmatprep.subr.mxu0 0.0
          %4477 = vmatpush1.msra.mxu0 %v4442
          %4478 = vmatprep.subr.mxu0 0.0
          %4479 = vmatpush1.msra.mxu0 %v4443
          %4480 = vmatprep.subr.mxu0 0.0
          %4481 = vmatpush1.msra.mxu0 %v4444
          %4482 = vmatprep.subr.mxu0 0.0
          %4483 = vmatpush1.msra.mxu0 %v4445
          %4484 = vmatprep.subr.mxu0 0.0
          %4485 = vmatpush1.msra.mxu0 %v4446
          %4486 = vmatprep.subr.mxu0 0.0
          %4487 = vmatpush1.msra.mxu0 0.0
          %4488 = vmatprep.subr.mxu0 0.0
          %4489 = vmatpush1.msra.mxu0 0.0
          %4490 = vmatprep.subr.mxu0 0.0
          %4491 = vmatpush1.msra.mxu0 0.0
          %4492 = vmatprep.subr.mxu0 0.0
          %4493 = vmatpush1.msra.mxu0 0.0
          %4494 = vmatprep.subr.mxu0 0.0
          %4495 = vmatpush1.msra.mxu0 0.0
          %4496 = vmatprep.subr.mxu0 0.0
          %4497 = vmatpush1.msra.mxu0 0.0
          %4498 = vmatprep.subr.mxu0 0.0
          %4499 = vmatpush1.msra.mxu0 0.0
          %4500 = vmatprep.subr.mxu0 0.0
          %4501 = vmatpush1.msra.mxu0 0.0
          %4502 = vmatprep.subr.mxu0 0.0
          %4503 = vmatpush1.msra.mxu0 0.0
          %4504 = vmatprep.subr.mxu0 0.0
          %4505 = vmatpush1.msra.mxu0 0.0
          %4506 = vmatprep.subr.mxu0 0.0
          %4507 = vmatpush1.msra.mxu0 0.0
          %4508 = vmatprep.subr.mxu0 0.0
          %4509 = vmatpush1.msra.mxu0 0.0
          %4510 = vmatprep.subr.mxu0 0.0
          %4511 = vmatpush1.msra.mxu0 0.0
          %4512 = vmatprep.subr.mxu0 0.0
          %4513 = vmatpush1.msra.mxu0 0.0
          %4514 = vmatprep.subr.mxu0 0.0
          %4515 = vmatpush1.msra.mxu0 0.0
          %4516 = vmatprep.subr.mxu0 0.0
          %4517 = vmatpush1.msra.mxu0 0.0
          %4518 = vmatprep.mubr.f32.mxu0 0.0
          %4519 = vmatmul.mubr.f32.gmra.mrb[0].mxu0 %v4411
          %v4520 = vpop.f32.mrb[0].mxu0
          %v4521 = vadd.f32 %v4452, %v4520
          %v4522 = vpop.f32.mrb[0].mxu0
          %4523 = vmatprep.mubr.f32.mxu0 0.0
          %4524 = vmatmul.mubr.f32.gmra.mrb[0].mxu0 %v4412
          %v4525 = vpop.f32.mrb[0].mxu0
          %v4526 = vadd.f32 %v4452, %v4525
          %v4527 = vpop.f32.mrb[0].mxu0
          %4528 = vmatprep.mubr.f32.mxu0 0.0
          %4529 = vmatmul.mubr.f32.gmra.mrb[0].mxu0 %v4413
          %v4530 = vpop.f32.mrb[0].mxu0
          %v4531 = vadd.f32 %v4452, %v4530
          %v4532 = vpop.f32.mrb[0].mxu0
          %4533 = vmatprep.mubr.f32.mxu0 0.0
          %4534 = vmatmul.mubr.f32.gmra.mrb[0].mxu0 %v4414
          %v4535 = vpop.f32.mrb[0].mxu0
          %v4536 = vadd.f32 %v4452, %v4535
          %v4537 = vpop.f32.mrb[0].mxu0
          %4538 = vmatprep.mubr.f32.mxu0 0.0
          %4539 = vmatmul.mubr.f32.gmra.mrb[0].mxu0 %v4415
          %v4540 = vpop.f32.mrb[0].mxu0
          %v4541 = vadd.f32 %v4452, %v4540
          %v4542 = vpop.f32.mrb[0].mxu0
          %4543 = vmatprep.mubr.f32.mxu0 0.0
          %4544 = vmatmul.mubr.f32.gmra.mrb[0].mxu0 %v4416
          %v4545 = vpop.f32.mrb[0].mxu0
          %v4546 = vadd.f32 %v4452, %v4545
          %v4547 = vpop.f32.mrb[0].mxu0
          %4548 = vmatprep.mubr.f32.mxu0 0.0
          %4549 = vmatmul.mubr.f32.gmra.mrb[0].mxu0 %v4417
          %v4550 = vpop.f32.mrb[0].mxu0
          %v4551 = vadd.f32 %v4452, %v4550
          %v4552 = vpop.f32.mrb[0].mxu0
          %4553 = vmatprep.mubr.f32.mxu0 0.0
          %4554 = vmatmul.mubr.f32.gmra.mrb[0].mxu0 %v4418
          %v4555 = vpop.f32.mrb[0].mxu0
          %v4556 = vadd.f32 %v4452, %v4555
          %v4557 = vpop.f32.mrb[0].mxu0
          %4558 = vdwg.mxu0
          %4559 = vst [vmem:[#allocation13] sm:$0xff] %v4521
          %4560 = vst [vmem:[#allocation13 + $0x8] sm:$0xff] %v4526
          %4561 = vst [vmem:[#allocation13 + $0x10] sm:$0xff] %v4531
          %4562 = vst [vmem:[#allocation13 + $0x18] sm:$0xff] %v4536
          %4563 = vst [vmem:[#allocation13 + $0x20] sm:$0xff] %v4541
          %4564 = vst [vmem:[#allocation13 + $0x28] sm:$0xff] %v4546
          %4565 = vst [vmem:[#allocation13 + $0x30] sm:$0xff] %v4551
          %4566 = vst [vmem:[#allocation13 + $0x38] sm:$0xff] %v4556
        $region84: #{tpu_custom_call.1} parent=55 // pred_fallthru
          _
        // Predicated region
        $region85: #{tpu_custom_call.1} parent=55 // pred_check
          %p4567 = pneg %p233
        $region86: #{tpu_custom_call.1} parent=55 // pred_check_branch
          %4569 = sbr.rel (%p4567) target = $region88
        $region87: #{tpu_custom_call.1} parent=55 // pred_region
          %s4571 = ssub.s32 1024, 1024
          %4572 = vsyncadd [#allocation6], %s4571
          %s4573 = sshll.u32 [#allocation13], 4
          %s4574 = int_to_ptr.vmem [resolvable:$true] %s4573
          %4579 = dma.vmem_to_hbm [thread:$0]  %s4574, 1024, %s9, [#allocation6], 128, 128, 8
        $region88: #{tpu_custom_call.1} parent=55 // pred_fallthru
          _
        // Predicated region
        $region89: #{tpu_custom_call.1} parent=55 // pred_check
          %p4580 = pneg %p233
        $region90: #{tpu_custom_call.1} parent=55 // pred_check_branch
          %4582 = sbr.rel (%p4580) target = $region92
        $region91: #{tpu_custom_call.1} parent=55 // pred_region
          %4583 = dma.done [#allocation6], 1024
        $region92: #{tpu_custom_call.1} parent=55 // pred_fallthru
          _
      $region56: #{tpu_custom_call.1} parent=5 // pred_fallthru
        _
      %p4584 = scmp.le.s32.totalorder 2, %s21
      // Predicated region
      $region93: #{tpu_custom_call.1} parent=5 // pred_check
        %p4585 = pneg %p4584
      $region94: #{tpu_custom_call.1} parent=5 // pred_check_branch
        %4587 = sbr.rel (%p4585) target = $region96
      $region95: #{tpu_custom_call.1} parent=5 // pred_region
        %s4588 = ssub.s32 %s21, 2
      $region96: #{tpu_custom_call.1} parent=5 // pred_fallthru
        _
    $region6: #{tpu_custom_call.1} parent=1 // loop_footer
      %s25 = sadd.s32 1, %s21
    $region7: #{tpu_custom_call.1} parent=1 // loop_footer_branch
      %20 = sbr.rel target = $region3
    $region8: #{tpu_custom_call.1} parent=1 // loop_exit
      _
    %4589 = vsyncpa [#allocation5], 1
    %s4590 = scalar_lea.sflag [#allocation5], 1
    %4591 = vsyncpa %s4590, 1
    %4592 = vsyncpa [#allocation8], 1
    %4593 = vsyncpa [#allocation11], 1
    %s4594 = scalar_lea.sflag [#allocation11], 1
    %4595 = vsyncpa %s4594, 1
    %4596 = vsyncpa [#allocation6], 1
    %s4597 = scalar_lea.sflag [#allocation6], 1
    %4598 = vsyncpa %s4597, 1

</llo_original>
